<compile_context>
chip_gen: v7x
topology: tpu7x:2x2x1
jax: 0.10.0
libtpu: 0.0.40
codegen_flags: <defaults>
</compile_context>

<pallas_src>
import functools

import jax
import jax.numpy as jnp
from jax.experimental import pallas as pl
from jax.experimental.pallas import tpu as pltpu


# ----------------------------- small helpers --------------------------------

def _pick_tile(n, candidates):
    """Largest candidate tile that evenly divides n, else the full extent."""
    for t in candidates:
        if n % t == 0:
            return t
    return n


def _round_up(x, m):
    return ((x + m - 1) // m) * m


_VMEM_LIMIT_CACHE = [False, None]


def _vmem_limit_bytes():
    """3/4 of physical VMEM if queryable; None (compiler default) otherwise."""
    if _VMEM_LIMIT_CACHE[0]:
        return _VMEM_LIMIT_CACHE[1]
    lim = None
    try:
        cap = getattr(pltpu.get_tpu_info(), "vmem_capacity_bytes", None)
        if cap:
            lim = int(cap) * 3 // 4
    except Exception:
        lim = None
    _VMEM_LIMIT_CACHE[0] = True
    _VMEM_LIMIT_CACHE[1] = lim
    return lim


def _cparams(dims):
    return pltpu.CompilerParams(dimension_semantics=dims,
                                vmem_limit_bytes=_vmem_limit_bytes())


def _rms(x, g):
    """f32 RMSNorm (T5 style, no mean subtraction)."""
    var = jnp.mean(x * x, axis=-1, keepdims=True)
    return x * jax.lax.rsqrt(var + 1e-6) * g


def _causal_mask(L):
    row = jax.lax.broadcasted_iota(jnp.int32, (L, L), 0)
    col = jax.lax.broadcasted_iota(jnp.int32, (L, L), 1)
    return jnp.where(col > row, jnp.float32(-1e9), jnp.float32(0.0))


def _mha(q, k, v, nh, mask):
    """Multi-head attention core on already-projected bf16 Q/K/V (L, H) tiles.

    T5-style attention (no 1/sqrt(dh) scaling).  Softmax normalization is applied
    AFTER the PV matmul (L*dh mults per head instead of L*L).  Per-head outputs
    are concatenated to a lane-dense (L, H) f32 tile for the fused Wo matmul.
    """
    Lq, H = q.shape
    dh = H // nh
    outs = []
    for h in range(nh):
        sl = slice(h * dh, (h + 1) * dh)
        q_h, k_h, v_h = q[:, sl], k[:, sl], v[:, sl]
        # scores = q_h @ k_h^T  (contract last dims, no explicit transpose)
        s = jax.lax.dot_general(q_h, k_h, (((1,), (1,)), ((), ())),
                                preferred_element_type=jnp.float32)
        if mask is not None:
            s = s + mask
        s = s - jnp.max(s, axis=-1, keepdims=True)
        p = jnp.exp(s)                                        # unnormalized, <= 1
        inv = pl.reciprocal(jnp.sum(p, axis=-1, keepdims=True), approx=True)
        o_h = jnp.dot(p.astype(jnp.bfloat16), v_h,
                      preferred_element_type=jnp.float32)
        outs.append(o_h * inv)                                # normalize post-PV
    return jnp.concatenate(outs, axis=-1)                     # (Lq, H) f32


# ----------------------------- Pallas kernels ------------------------------

def _ae_kernel(x_ref, w1_ref, b1_ref, w2_ref, b2_ref, o_ref):
    # tiny AE: (1, P*H) -> bottleneck -> (1, P*H); negligible FLOPs.
    # TODO(synk): for real prompt sizes (P*H ~ 77k) stream the contraction in
    #             bf16 tiles (or leave this GEMV to XLA); full f32 weights would
    #             not fit VMEM.
    h = jnp.dot(x_ref[...], w1_ref[...],
                preferred_element_type=jnp.float32) + b1_ref[...]
    h = jnp.maximum(h, 0.0)
    o_ref[...] = jnp.dot(h, w2_ref[...],
                         preferred_element_type=jnp.float32) + b2_ref[...]


def _self_attn_kernel(x_ref, g_ref, wqkv_ref, wo_ref, o_ref, *, nh, causal):
    # fused: RMSNorm -> single (H,3H) QKV matmul -> per-head attention ->
    #        fused (H,H) O-proj -> residual add
    x = x_ref[0]                                        # (L, H) f32
    L, H = x.shape
    z = _rms(x, g_ref[...]).astype(jnp.bfloat16)
    qkv = jnp.dot(z, wqkv_ref[...], preferred_element_type=jnp.float32)  # (L,3H)
    q = qkv[:, :H].astype(jnp.bfloat16)
    k = qkv[:, H:2 * H].astype(jnp.bfloat16)
    v = qkv[:, 2 * H:].astype(jnp.bfloat16)
    mask = _causal_mask(L) if causal else None
    attn = _mha(q, k, v, nh, mask)                      # (L, H) f32
    o_ref[0] = x + jnp.dot(attn.astype(jnp.bfloat16), wo_ref[...],
                           preferred_element_type=jnp.float32)


def _cross_attn_kernel(x_ref, enc_ref, gd_ref, ge_ref,
                       wq_ref, wkv_ref, wo_ref, o_ref, *, nh):
    # fused: dec RMSNorm (query) + enc-final RMSNorm (K/V source) ->
    #        (H,H) Q matmul + single (H,2H) KV matmul -> attention ->
    #        fused (H,H) O-proj -> residual add
    x = x_ref[0]                                        # (Ld, H) f32
    e = enc_ref[0]                                      # (Le, H) f32
    H = x.shape[1]
    zq = _rms(x, gd_ref[...]).astype(jnp.bfloat16)
    zkv = _rms(e, ge_ref[...]).astype(jnp.bfloat16)
    q = jnp.dot(zq, wq_ref[...],
                preferred_element_type=jnp.float32).astype(jnp.bfloat16)
    kv = jnp.dot(zkv, wkv_ref[...], preferred_element_type=jnp.float32)  # (Le,2H)
    k = kv[:, :H].astype(jnp.bfloat16)
    v = kv[:, H:].astype(jnp.bfloat16)
    attn = _mha(q, k, v, nh, None)
    o_ref[0] = x + jnp.dot(attn.astype(jnp.bfloat16), wo_ref[...],
                           preferred_element_type=jnp.float32)


def _ffn_kernel(x_ref, g_ref, w1_ref, w2_ref, o_ref):
    # fused: RMSNorm -> dense-relu-dense (bf16 MXU, f32 acc) -> residual add
    x = x_ref[...]                                      # (TM, H) f32
    z = _rms(x, g_ref[...]).astype(jnp.bfloat16)
    h = jnp.dot(z, w1_ref[...], preferred_element_type=jnp.float32)
    h = jnp.maximum(h, 0.0).astype(jnp.bfloat16)
    o_ref[...] = x + jnp.dot(h, w2_ref[...], preferred_element_type=jnp.float32)


def _rmsnorm_bf16_kernel(x_ref, g_ref, o_ref):
    # decoder-final RMSNorm, hoisted out of the CE vocab loop; bf16 output halves
    # the activation re-stream traffic of the CE kernel.
    o_ref[...] = _rms(x_ref[...], g_ref[...]).astype(jnp.bfloat16)


def _lmhead_ce_kernel(z_ref, w_ref, lab_ref, o_ref,
                      m_ref, l_ref, t_ref, tot_ref, cnt_ref, *, tv, v_actual):
    # LM-head matmul streamed over vocab blocks + online logsumexp + target-logit
    # gather + masked token-mean CE.  Grid = (vocab blocks OUTER, row tiles INNER)
    # so each (H, tv) weight tile is DMA'd exactly once; per-row-tile stats live in
    # (ni, tm, 1) VMEM scratch indexed by the row-tile id.
    j = pl.program_id(0)          # vocab-block index (outer)
    i = pl.program_id(1)          # row-tile index (inner)
    nj = pl.num_programs(0)
    ni = pl.num_programs(1)

    @pl.when(jnp.logical_and(i == 0, j == 0))
    def _():
        tot_ref[...] = jnp.zeros_like(tot_ref)
        cnt_ref[...] = jnp.zeros_like(cnt_ref)

    @pl.when(j == 0)
    def _():
        m_ref[i] = jnp.full(m_ref.shape[1:], -jnp.inf, jnp.float32)
        l_ref[i] = jnp.zeros(l_ref.shape[1:], jnp.float32)
        t_ref[i] = jnp.zeros(t_ref.shape[1:], jnp.float32)

    logits = jnp.dot(z_ref[...], w_ref[...],
                     preferred_element_type=jnp.float32)   # (TM, TV) f32
    ids = jax.lax.broadcasted_iota(jnp.int32, logits.shape, 1) + j * tv
    if v_actual is not None:                               # padded vocab columns
        logits = jnp.where(ids < v_actual, logits, jnp.float32(-1e30))

    labels = lab_ref[...]                                  # (TM, 1) int32, -100=ignore
    t_ref[i] = t_ref[i] + jnp.sum(jnp.where(ids == labels, logits, 0.0),
                                  axis=-1, keepdims=True)

    m_prev = m_ref[i]
    m_new = jnp.maximum(m_prev, jnp.max(logits, axis=-1, keepdims=True))
    l_ref[i] = (l_ref[i] * jnp.exp(m_prev - m_new)
                + jnp.sum(jnp.exp(logits - m_new), axis=-1, keepdims=True))
    m_ref[i] = m_new

    @pl.when(j == nj - 1)
    def _():
        nll = m_ref[i] + jnp.log(l_ref[i]) - t_ref[i]
        valid = (labels != -100).astype(jnp.float32)
        tot_ref[...] += jnp.sum(nll * valid, keepdims=True)
        cnt_ref[...] += jnp.sum(valid, keepdims=True)

    @pl.when(jnp.logical_and(i == ni - 1, j == nj - 1))
    def _():
        o_ref[...] = tot_ref[...] / jnp.maximum(cnt_ref[...], 1.0)


# ----------------------------- wrappers (glue) ------------------------------

def ae_project(task_prompt, w1, b1, w2, b2):
    P, H = task_prompt.shape
    PH = P * H
    x = task_prompt.reshape(1, PH)
    out = pl.pallas_call(
        _ae_kernel,
        out_shape=jax.ShapeDtypeStruct((1, PH), jnp.float32),
    )(x, w1, b1, w2, b2)
    # matches: target_prompt.reshape(shape[1]).reshape(P, H)
    return out.reshape(PH).reshape(P, H)


def self_attention_block(x, g, wqkv, wo, nh, causal):
    B, L, H = x.shape
    kern = functools.partial(_self_attn_kernel, nh=nh, causal=causal)
    return pl.pallas_call(
        kern,
        grid=(B,),
        in_specs=[pl.BlockSpec((1, L, H), lambda b: (b, 0, 0)),
                  pl.BlockSpec((1, H), lambda b: (0, 0)),
                  pl.BlockSpec(wqkv.shape, lambda b: (0, 0)),   # resident weights
                  pl.BlockSpec(wo.shape, lambda b: (0, 0))],
        out_specs=pl.BlockSpec((1, L, H), lambda b: (b, 0, 0)),
        out_shape=jax.ShapeDtypeStruct((B, L, H), jnp.float32),
        compiler_params=_cparams(("parallel",)),
    )(x, g, wqkv, wo)


def cross_attention_block(x, enc, gd, ge, wq, wkv, wo, nh):
    B, Ld, H = x.shape
    Le = enc.shape[1]
    kern = functools.partial(_cross_attn_kernel, nh=nh)
    return pl.pallas_call(
        kern,
        grid=(B,),
        in_specs=[pl.BlockSpec((1, Ld, H), lambda b: (b, 0, 0)),
                  pl.BlockSpec((1, Le, H), lambda b: (b, 0, 0)),
                  pl.BlockSpec((1, H), lambda b: (0, 0)),
                  pl.BlockSpec((1, H), lambda b: (0, 0)),
                  pl.BlockSpec(wq.shape, lambda b: (0, 0)),
                  pl.BlockSpec(wkv.shape, lambda b: (0, 0)),
                  pl.BlockSpec(wo.shape, lambda b: (0, 0))],
        out_specs=pl.BlockSpec((1, Ld, H), lambda b: (b, 0, 0)),
        out_shape=jax.ShapeDtypeStruct((B, Ld, H), jnp.float32),
        compiler_params=_cparams(("parallel",)),
    )(x, enc, gd, ge, wq, wkv, wo)


def ffn_block(x2d, g, w1, w2):
    M, H = x2d.shape
    D = w1.shape[1]
    # tm <= 256 keeps the (tm, D) intermediate + resident FFN weights inside the
    # v7x 32 MiB scoped default at real T5 sizes.
    tm = _pick_tile(M, (256, 128, 64, 32, 16, 8))
    return pl.pallas_call(
        _ffn_kernel,
        grid=(M // tm,),
        in_specs=[pl.BlockSpec((tm, H), lambda i: (i, 0)),
                  pl.BlockSpec((1, H), lambda i: (0, 0)),
                  pl.BlockSpec((H, D), lambda i: (0, 0)),
                  pl.BlockSpec((D, H), lambda i: (0, 0))],
        out_specs=pl.BlockSpec((tm, H), lambda i: (i, 0)),
        out_shape=jax.ShapeDtypeStruct((M, H), jnp.float32),
        compiler_params=_cparams(("parallel",)),
    )(x2d, g, w1, w2)


def rmsnorm_bf16(x2d, g):
    M, H = x2d.shape
    tm = _pick_tile(M, (256, 128, 64, 32, 16, 8))
    return pl.pallas_call(
        _rmsnorm_bf16_kernel,
        grid=(M // tm,),
        in_specs=[pl.BlockSpec((tm, H), lambda i: (i, 0)),
                  pl.BlockSpec((1, H), lambda i: (0, 0))],
        out_specs=pl.BlockSpec((tm, H), lambda i: (i, 0)),
        out_shape=jax.ShapeDtypeStruct((M, H), jnp.bfloat16),
        compiler_params=_cparams(("parallel",)),
    )(x2d, g)


def lm_head_ce_loss(z_bf16, w_bf16, labels1d):
    """Vocab-streamed LM head + masked token-mean CE; logits never hit HBM.

    Grid order (vocab outer, rows inner) reads each LM-head weight tile exactly
    once from HBM and re-streams only the small bf16 activations.  Vocab is padded
    to a multiple of the (large) vocab tile; padded columns are masked in-kernel.
    """
    N, H = z_bf16.shape
    V = w_bf16.shape[1]
    tv = 2048 if V >= 2048 else _round_up(V, 128)
    Vp = _round_up(V, tv)
    if Vp != V:
        w_bf16 = jnp.pad(w_bf16, ((0, 0), (0, Vp - V)))
    tm = _pick_tile(N, (256, 128, 64, 32, 16, 8))
    ni = N // tm
    nj = Vp // tv
    labels2d = labels1d.reshape(N, 1).astype(jnp.int32)
    kern = functools.partial(_lmhead_ce_kernel, tv=tv,
                             v_actual=(V if Vp != V else None))
    out = pl.pallas_call(
        kern,
        grid=(nj, ni),                      # vocab blocks outer, row tiles inner
        in_specs=[pl.BlockSpec((tm, H), lambda j, i: (i, 0)),
                  pl.BlockSpec((H, tv), lambda j, i: (0, j)),
                  pl.BlockSpec((tm, 1), lambda j, i: (i, 0))],
        out_specs=pl.BlockSpec((1, 1), lambda j, i: (0, 0)),
        out_shape=jax.ShapeDtypeStruct((1, 1), jnp.float32),
        scratch_shapes=[pltpu.VMEM((ni, tm, 1), jnp.float32),   # running max
                        pltpu.VMEM((ni, tm, 1), jnp.float32),   # running sum-exp
                        pltpu.VMEM((ni, tm, 1), jnp.float32),   # target logit
                        pltpu.VMEM((1, 1), jnp.float32),        # loss numerator
                        pltpu.VMEM((1, 1), jnp.float32)],       # valid-token count
        # NOTE: must stay ("arbitrary","arbitrary") — shared scratch accumulators.
        compiler_params=_cparams(("arbitrary", "arbitrary")),
    )(z_bf16, w_bf16, labels2d)
    return out[0, 0]


# ----------------------------- params ----------------------------------------

def init_params(key, vocab, hidden, prompt_len, nh, d_ff, bottleneck):
    H = hidden
    ks = iter(jax.random.split(key, 64))
    bf = jnp.bfloat16

    def n(shape, s=0.02, dtype=jnp.float32):
        return (jax.random.normal(next(ks), shape, jnp.float32) * s).astype(dtype)

    p = {
        "embed": n((vocab, H)),                            # f32 (feeds residual)
        "lm_head": n((H, vocab), dtype=bf),                # bf16, streamed over vocab
        "task_prompt": n((prompt_len, H), 0.5),
        "ae_w1": n((prompt_len * H, bottleneck)),
        "ae_b1": jnp.zeros((1, bottleneck), jnp.float32),
        "ae_w2": n((bottleneck, prompt_len * H)),
        "ae_b2": jnp.zeros((1, prompt_len * H), jnp.float32),
        "dec_ln_cross": jnp.ones((1, H), jnp.float32),
        "dec_cwq": n((H, H), dtype=bf),                    # cross-attn Q
        "dec_ckv": n((H, 2 * H), dtype=bf),                # cross-attn fused K|V
        "dec_cwo": n((H, H), dtype=bf),
    }
    for pre in ("enc", "dec"):
        p[f"{pre}_ln1"] = jnp.ones((1, H), jnp.float32)
        p[f"{pre}_wqkv"] = n((H, 3 * H), dtype=bf)         # fused Q|K|V
        p[f"{pre}_wo"] = n((H, H), dtype=bf)
        p[f"{pre}_ln_ffn"] = jnp.ones((1, H), jnp.float32)
        p[f"{pre}_ffn_w1"] = n((H, d_ff), dtype=bf)
        p[f"{pre}_ffn_w2"] = n((d_ff, H), dtype=bf)
        p[f"{pre}_ln_final"] = jnp.ones((1, H), jnp.float32)
    return p


# ----------------------------- model forward --------------------------------

@functools.partial(jax.jit, static_argnames=("nh",))
def cross_prompt_t5_forward(params, input_ids, labels, nh=4):
    """Train-mode forward of crossPromptT5: returns {'loss', 'performance'}."""
    embed = params["embed"]
    B, S = input_ids.shape
    P, H = params["task_prompt"].shape

    # 1) project the source task prompt through the cross-model AE (Pallas)
    target_prompt = ae_project(params["task_prompt"],
                               params["ae_w1"], params["ae_b1"],
                               params["ae_w2"], params["ae_b2"])
    prompt_b = jnp.broadcast_to(target_prompt[None], (B, P, H))

    # 2) encoder over [prompt ; embed(input_ids)]
    enc_x = jnp.concatenate([prompt_b, jnp.take(embed, input_ids, axis=0)], axis=1)
    Le = P + S
    enc_x = self_attention_block(enc_x, params["enc_ln1"],
                                 params["enc_wqkv"], params["enc_wo"],
                                 nh, causal=False)
    enc_x = ffn_block(enc_x.reshape(B * Le, H), params["enc_ln_ffn"],
                      params["enc_ffn_w1"], params["enc_ffn_w2"]).reshape(B, Le, H)
    # encoder-final RMSNorm is fused into the cross-attention kernel (K/V source).

    # 3) decoder over [prompt ; embed(shift_right(labels))]
    dec_ids = jnp.concatenate(
        [jnp.zeros((B, 1), labels.dtype), labels[:, :-1]], axis=1)
    dec_ids = jnp.where(dec_ids == -100, 0, dec_ids)
    dec_x = jnp.concatenate([prompt_b, jnp.take(embed, dec_ids, axis=0)], axis=1)
    Ld = P + S
    dec_x = self_attention_block(dec_x, params["dec_ln1"],
                                 params["dec_wqkv"], params["dec_wo"],
                                 nh, causal=True)
    dec_x = cross_attention_block(dec_x, enc_x,
                                  params["dec_ln_cross"], params["enc_ln_final"],
                                  params["dec_cwq"], params["dec_ckv"],
                                  params["dec_cwo"], nh)
    dec_x = ffn_block(dec_x.reshape(B * Ld, H), params["dec_ln_ffn"],
                      params["dec_ffn_w1"], params["dec_ffn_w2"]).reshape(B, Ld, H)

    # 4) decoder-final RMSNorm (own kernel, bf16 out) + vocab-streamed LM head + CE
    z = rmsnorm_bf16(dec_x[:, P:, :].reshape(B * S, H), params["dec_ln_final"])
    loss = lm_head_ce_loss(z, params["lm_head"], labels.reshape(B * S))

    # TODO(synk): 'performance' (train_acc / train_bleu via generate()+tokenizer) is a
    # host-side text metric with no Pallas equivalent; pass through a placeholder.
    return {"loss": loss, "performance": jnp.float32(0.0)}


# ----------------------------- driver ---------------------------------------

if __name__ == "__main__":
    VOCAB, HIDDEN, PROMPT_LEN, HEADS, D_FF, BOTT = 128, 32, 4, 4, 64, 16
    B, S = 2, 8

    key = jax.random.PRNGKey(0)
    k_param, k_in, k_lab = jax.random.split(key, 3)

    params = init_params(k_param, VOCAB, HIDDEN, PROMPT_LEN, HEADS, D_FF, BOTT)
    input_ids = jax.random.randint(k_in, (B, S), 0, VOCAB, dtype=jnp.int32)
    labels = jax.random.randint(k_lab, (B, S), 0, VOCAB, dtype=jnp.int32)
    labels = labels.at[:, -1].set(-100)  # exercise the ignore-index path

    out = cross_prompt_t5_forward(params, input_ids, labels, nh=HEADS)
    loss = jax.block_until_ready(out["loss"])
    assert jnp.isfinite(loss)
    print("KERNEL_OK")
</pallas_src>

<mosaic_0001>
module attributes {stable_mosaic.version = 11 : i64} {
  func.func @_ae_kernel(%arg0: memref<1x128xf32, #tpu.memory_space<vmem>>, %arg1: memref<128x16xf32, #tpu.memory_space<vmem>>, %arg2: memref<1x16xf32, #tpu.memory_space<vmem>>, %arg3: memref<16x128xf32, #tpu.memory_space<vmem>>, %arg4: memref<1x128xf32, #tpu.memory_space<vmem>>, %arg5: memref<1x128xf32, #tpu.memory_space<vmem>>) attributes {dimension_semantics = [], scalar_prefetch = 0 : i64, scratch_operands = 0 : i64, tpu.core_type = #tpu.core_type<tc>} {
    %c0 = arith.constant 0 : index
    %c0_0 = arith.constant 0 : index
    %0 = vector.load %arg0[%c0, %c0_0] : memref<1x128xf32, #tpu.memory_space<vmem>>, vector<1x128xf32>
    %c0_1 = arith.constant 0 : index
    %c0_2 = arith.constant 0 : index
    %1 = vector.load %arg1[%c0_1, %c0_2] : memref<128x16xf32, #tpu.memory_space<vmem>>, vector<128x16xf32>
    %cst = arith.constant dense<0.000000e+00> : vector<1x16xf32>
    %2 = tpu.matmul %0, %1, %cst {dimension_numbers = #tpu.dot_dimension_numbers<[1], [0], [0], [1], [0, 0, 1, 1], [], []>} : vector<1x128xf32>, vector<128x16xf32>, vector<1x16xf32> -> vector<1x16xf32>
    %c0_3 = arith.constant 0 : index
    %c0_4 = arith.constant 0 : index
    %3 = vector.load %arg2[%c0_3, %c0_4] : memref<1x16xf32, #tpu.memory_space<vmem>>, vector<1x16xf32>
    %4 = arith.addf %2, %3 : vector<1x16xf32>
    %cst_5 = arith.constant 0.000000e+00 : f32
    %5 = vector.broadcast %cst_5 : f32 to vector<1x16xf32>
    %6 = arith.maximumf %4, %5 : vector<1x16xf32>
    %c0_6 = arith.constant 0 : index
    %c0_7 = arith.constant 0 : index
    %7 = vector.load %arg3[%c0_6, %c0_7] : memref<16x128xf32, #tpu.memory_space<vmem>>, vector<16x128xf32>
    %cst_8 = arith.constant dense<0.000000e+00> : vector<1x128xf32>
    %8 = tpu.matmul %6, %7, %cst_8 {dimension_numbers = #tpu.dot_dimension_numbers<[1], [0], [0], [1], [0, 0, 1, 1], [], []>} : vector<1x16xf32>, vector<16x128xf32>, vector<1x128xf32> -> vector<1x128xf32>
    %c0_9 = arith.constant 0 : index
    %c0_10 = arith.constant 0 : index
    %9 = vector.load %arg4[%c0_9, %c0_10] : memref<1x128xf32, #tpu.memory_space<vmem>>, vector<1x128xf32>
    %10 = arith.addf %8, %9 : vector<1x128xf32>
    %c0_11 = arith.constant 0 : index
    %c0_12 = arith.constant 0 : index
    %11 = vector.load %arg5[%c0_11, %c0_12] : memref<1x128xf32, #tpu.memory_space<vmem>>, vector<1x128xf32>
    tpu.vector_store %arg5[%c0_11, %c0_12], %10 {strides = array<i32>} : memref<1x128xf32, #tpu.memory_space<vmem>>, vector<1x128xf32>,
    return
  }
}

module attributes {stable_mosaic.version = 11 : i64} {
  func.func @_self_attn_kernel(%arg0: i32, %arg1: memref<1x12x32xf32, #tpu.memory_space<vmem>>, %arg2: memref<1x32xf32, #tpu.memory_space<vmem>>, %arg3: memref<32x96xbf16, #tpu.memory_space<vmem>>, %arg4: memref<32x32xbf16, #tpu.memory_space<vmem>>, %arg5: memref<1x12x32xf32, #tpu.memory_space<vmem>>) attributes {dimension_semantics = [#tpu.dimension_semantics<parallel>], iteration_bounds = array<i64: 2>, scalar_prefetch = 0 : i64, scratch_operands = 0 : i64, tpu.core_type = #tpu.core_type<tc>, window_params = [{transform_indices = @transform_0, window_bounds = array<i64: 1, 12, 32>}, {pipeline_mode = #tpu.pipeline_mode<synchronous>, transform_indices = @transform_1, window_bounds = array<i64: 1, 32>}, {pipeline_mode = #tpu.pipeline_mode<synchronous>, transform_indices = @transform_2, window_bounds = array<i64: 32, 96>}, {pipeline_mode = #tpu.pipeline_mode<synchronous>, transform_indices = @transform_3, window_bounds = array<i64: 32, 32>}, {transform_indices = @transform_4, window_bounds = array<i64: 1, 12, 32>}]} {
    %c0 = arith.constant 0 : index
    %c0_0 = arith.constant 0 : index
    %c0_1 = arith.constant 0 : index
    %0 = vector.load %arg1[%c0, %c0_0, %c0_1] : memref<1x12x32xf32, #tpu.memory_space<vmem>>, vector<1x12x32xf32>
    %1 = vector.shape_cast %0 : vector<1x12x32xf32> to vector<12x32xf32>
    %c0_2 = arith.constant 0 : index
    %c0_3 = arith.constant 0 : index
    %2 = vector.load %arg2[%c0_2, %c0_3] : memref<1x32xf32, #tpu.memory_space<vmem>>, vector<1x32xf32>
    %3 = arith.mulf %1, %1 : vector<12x32xf32>
    %cst = arith.constant dense<0.000000e+00> : vector<12xf32>
    %4 = vector.multi_reduction <add>, %3, %cst [1] : vector<12x32xf32> to vector<12xf32>
    %5 = vector.shape_cast %4 : vector<12xf32> to vector<12x1xf32>
    %cst_4 = arith.constant 3.200000e+01 : f32
    %6 = vector.broadcast %cst_4 : f32 to vector<12x1xf32>
    %7 = arith.divf %5, %6 : vector<12x1xf32>
    %cst_5 = arith.constant 9.99999997E-7 : f32
    %8 = vector.broadcast %cst_5 : f32 to vector<12x1xf32>
    %9 = arith.addf %7, %8 : vector<12x1xf32>
    %10 = math.rsqrt %9 : vector<12x1xf32>
    %11 = vector.broadcast %10 : vector<12x1xf32> to vector<12x32xf32>
    %12 = arith.mulf %1, %11 : vector<12x32xf32>
    %13 = vector.broadcast %2 : vector<1x32xf32> to vector<12x32xf32>
    %14 = arith.mulf %12, %13 : vector<12x32xf32>
    %15 = arith.truncf %14 : vector<12x32xf32> to vector<12x32xbf16>
    %c0_6 = arith.constant 0 : index
    %c0_7 = arith.constant 0 : index
    %16 = vector.load %arg3[%c0_6, %c0_7] : memref<32x96xbf16, #tpu.memory_space<vmem>>, vector<32x96xbf16>
    %cst_8 = arith.constant dense<0.000000e+00> : vector<12x96xf32>
    %17 = tpu.matmul %15, %16, %cst_8 {dimension_numbers = #tpu.dot_dimension_numbers<[1], [0], [0], [1], [0, 0, 1, 1], [], []>} : vector<12x32xbf16>, vector<32x96xbf16>, vector<12x96xf32> -> vector<12x96xf32>
    %18 = vector.extract_strided_slice %17 {offsets = [0, 0], sizes = [12, 32], strides = [1, 1]} : vector<12x96xf32> to vector<12x32xf32>
    %19 = arith.truncf %18 : vector<12x32xf32> to vector<12x32xbf16>
    %20 = vector.extract_strided_slice %17 {offsets = [0, 32], sizes = [12, 32], strides = [1, 1]} : vector<12x96xf32> to vector<12x32xf32>
    %21 = arith.truncf %20 : vector<12x32xf32> to vector<12x32xbf16>
    %22 = vector.extract_strided_slice %17 {offsets = [0, 64], sizes = [12, 32], strides = [1, 1]} : vector<12x96xf32> to vector<12x32xf32>
    %23 = arith.truncf %22 : vector<12x32xf32> to vector<12x32xbf16>
    %24 = vector.extract_strided_slice %19 {offsets = [0, 0], sizes = [12, 8], strides = [1, 1]} : vector<12x32xbf16> to vector<12x8xbf16>
    %25 = vector.extract_strided_slice %21 {offsets = [0, 0], sizes = [12, 8], strides = [1, 1]} : vector<12x32xbf16> to vector<12x8xbf16>
    %26 = vector.extract_strided_slice %23 {offsets = [0, 0], sizes = [12, 8], strides = [1, 1]} : vector<12x32xbf16> to vector<12x8xbf16>
    %cst_9 = arith.constant dense<0.000000e+00> : vector<12x12xf32>
    %27 = tpu.matmul %24, %25, %cst_9 {dimension_numbers = #tpu.dot_dimension_numbers<[1], [1], [0], [0], [0, 0, 1, 0], [], []>} : vector<12x8xbf16>, vector<12x8xbf16>, vector<12x12xf32> -> vector<12x12xf32>
    %cst_10 = arith.constant dense<0xFF800000> : vector<12xf32>
    %28 = vector.multi_reduction <maximumf>, %27, %cst_10 [1] : vector<12x12xf32> to vector<12xf32>
    %29 = vector.shape_cast %28 : vector<12xf32> to vector<12x1xf32>
    %30 = vector.broadcast %29 : vector<12x1xf32> to vector<12x12xf32>
    %31 = arith.subf %27, %30 : vector<12x12xf32>
    %32 = math.exp %31 : vector<12x12xf32>
    %cst_11 = arith.constant dense<0.000000e+00> : vector<12xf32>
    %33 = vector.multi_reduction <add>, %32, %cst_11 [1] : vector<12x12xf32> to vector<12xf32>
    %34 = vector.shape_cast %33 : vector<12xf32> to vector<12x1xf32>
    %35 = tpu.reciprocal %34 {approx = true} : vector<12x1xf32> -> vector<12x1xf32>
    %36 = arith.truncf %32 : vector<12x12xf32> to vector<12x12xbf16>
    %cst_12 = arith.constant dense<0.000000e+00> : vector<12x8xf32>
    %37 = tpu.matmul %36, %26, %cst_12 {dimension_numbers = #tpu.dot_dimension_numbers<[1], [0], [0], [1], [0, 0, 1, 1], [], []>} : vector<12x12xbf16>, vector<12x8xbf16>, vector<12x8xf32> -> vector<12x8xf32>
    %38 = vector.broadcast %35 : vector<12x1xf32> to vector<12x8xf32>
    %39 = arith.mulf %37, %38 : vector<12x8xf32>
    %40 = vector.extract_strided_slice %19 {offsets = [0, 8], sizes = [12, 8], strides = [1, 1]} : vector<12x32xbf16> to vector<12x8xbf16>
    %41 = vector.extract_strided_slice %21 {offsets = [0, 8], sizes = [12, 8], strides = [1, 1]} : vector<12x32xbf16> to vector<12x8xbf16>
    %42 = vector.extract_strided_slice %23 {offsets = [0, 8], sizes = [12, 8], strides = [1, 1]} : vector<12x32xbf16> to vector<12x8xbf16>
    %cst_13 = arith.constant dense<0.000000e+00> : vector<12x12xf32>
    %43 = tpu.matmul %40, %41, %cst_13 {dimension_numbers = #tpu.dot_dimension_numbers<[1], [1], [0], [0], [0, 0, 1, 0], [], []>} : vector<12x8xbf16>, vector<12x8xbf16>, vector<12x12xf32> -> vector<12x12xf32>
    %cst_14 = arith.constant dense<0xFF800000> : vector<12xf32>
    %44 = vector.multi_reduction <maximumf>, %43, %cst_14 [1] : vector<12x12xf32> to vector<12xf32>
    %45 = vector.shape_cast %44 : vector<12xf32> to vector<12x1xf32>
    %46 = vector.broadcast %45 : vector<12x1xf32> to vector<12x12xf32>
    %47 = arith.subf %43, %46 : vector<12x12xf32>
    %48 = math.exp %47 : vector<12x12xf32>
    %cst_15 = arith.constant dense<0.000000e+00> : vector<12xf32>
    %49 = vector.multi_reduction <add>, %48, %cst_15 [1] : vector<12x12xf32> to vector<12xf32>
    %50 = vector.shape_cast %49 : vector<12xf32> to vector<12x1xf32>
    %51 = tpu.reciprocal %50 {approx = true} : vector<12x1xf32> -> vector<12x1xf32>
    %52 = arith.truncf %48 : vector<12x12xf32> to vector<12x12xbf16>
    %cst_16 = arith.constant dense<0.000000e+00> : vector<12x8xf32>
    %53 = tpu.matmul %52, %42, %cst_16 {dimension_numbers = #tpu.dot_dimension_numbers<[1], [0], [0], [1], [0, 0, 1, 1], [], []>} : vector<12x12xbf16>, vector<12x8xbf16>, vector<12x8xf32> -> vector<12x8xf32>
    %54 = vector.broadcast %51 : vector<12x1xf32> to vector<12x8xf32>
    %55 = arith.mulf %53, %54 : vector<12x8xf32>
    %56 = vector.extract_strided_slice %19 {offsets = [0, 16], sizes = [12, 8], strides = [1, 1]} : vector<12x32xbf16> to vector<12x8xbf16>
    %57 = vector.extract_strided_slice %21 {offsets = [0, 16], sizes = [12, 8], strides = [1, 1]} : vector<12x32xbf16> to vector<12x8xbf16>
    %58 = vector.extract_strided_slice %23 {offsets = [0, 16], sizes = [12, 8], strides = [1, 1]} : vector<12x32xbf16> to vector<12x8xbf16>
    %cst_17 = arith.constant dense<0.000000e+00> : vector<12x12xf32>
    %59 = tpu.matmul %56, %57, %cst_17 {dimension_numbers = #tpu.dot_dimension_numbers<[1], [1], [0], [0], [0, 0, 1, 0], [], []>} : vector<12x8xbf16>, vector<12x8xbf16>, vector<12x12xf32> -> vector<12x12xf32>
    %cst_18 = arith.constant dense<0xFF800000> : vector<12xf32>
    %60 = vector.multi_reduction <maximumf>, %59, %cst_18 [1] : vector<12x12xf32> to vector<12xf32>
    %61 = vector.shape_cast %60 : vector<12xf32> to vector<12x1xf32>
    %62 = vector.broadcast %61 : vector<12x1xf32> to vector<12x12xf32>
    %63 = arith.subf %59, %62 : vector<12x12xf32>
    %64 = math.exp %63 : vector<12x12xf32>
    %cst_19 = arith.constant dense<0.000000e+00> : vector<12xf32>
    %65 = vector.multi_reduction <add>, %64, %cst_19 [1] : vector<12x12xf32> to vector<12xf32>
    %66 = vector.shape_cast %65 : vector<12xf32> to vector<12x1xf32>
    %67 = tpu.reciprocal %66 {approx = true} : vector<12x1xf32> -> vector<12x1xf32>
    %68 = arith.truncf %64 : vector<12x12xf32> to vector<12x12xbf16>
    %cst_20 = arith.constant dense<0.000000e+00> : vector<12x8xf32>
    %69 = tpu.matmul %68, %58, %cst_20 {dimension_numbers = #tpu.dot_dimension_numbers<[1], [0], [0], [1], [0, 0, 1, 1], [], []>} : vector<12x12xbf16>, vector<12x8xbf16>, vector<12x8xf32> -> vector<12x8xf32>
    %70 = vector.broadcast %67 : vector<12x1xf32> to vector<12x8xf32>
    %71 = arith.mulf %69, %70 : vector<12x8xf32>
    %72 = vector.extract_strided_slice %19 {offsets = [0, 24], sizes = [12, 8], strides = [1, 1]} : vector<12x32xbf16> to vector<12x8xbf16>
    %73 = vector.extract_strided_slice %21 {offsets = [0, 24], sizes = [12, 8], strides = [1, 1]} : vector<12x32xbf16> to vector<12x8xbf16>
    %74 = vector.extract_strided_slice %23 {offsets = [0, 24], sizes = [12, 8], strides = [1, 1]} : vector<12x32xbf16> to vector<12x8xbf16>
    %cst_21 = arith.constant dense<0.000000e+00> : vector<12x12xf32>
    %75 = tpu.matmul %72, %73, %cst_21 {dimension_numbers = #tpu.dot_dimension_numbers<[1], [1], [0], [0], [0, 0, 1, 0], [], []>} : vector<12x8xbf16>, vector<12x8xbf16>, vector<12x12xf32> -> vector<12x12xf32>
    %cst_22 = arith.constant dense<0xFF800000> : vector<12xf32>
    %76 = vector.multi_reduction <maximumf>, %75, %cst_22 [1] : vector<12x12xf32> to vector<12xf32>
    %77 = vector.shape_cast %76 : vector<12xf32> to vector<12x1xf32>
    %78 = vector.broadcast %77 : vector<12x1xf32> to vector<12x12xf32>
    %79 = arith.subf %75, %78 : vector<12x12xf32>
    %80 = math.exp %79 : vector<12x12xf32>
    %cst_23 = arith.constant dense<0.000000e+00> : vector<12xf32>
    %81 = vector.multi_reduction <add>, %80, %cst_23 [1] : vector<12x12xf32> to vector<12xf32>
    %82 = vector.shape_cast %81 : vector<12xf32> to vector<12x1xf32>
    %83 = tpu.reciprocal %82 {approx = true} : vector<12x1xf32> -> vector<12x1xf32>
    %84 = arith.truncf %80 : vector<12x12xf32> to vector<12x12xbf16>
    %cst_24 = arith.constant dense<0.000000e+00> : vector<12x8xf32>
    %85 = tpu.matmul %84, %74, %cst_24 {dimension_numbers = #tpu.dot_dimension_numbers<[1], [0], [0], [1], [0, 0, 1, 1], [], []>} : vector<12x12xbf16>, vector<12x8xbf16>, vector<12x8xf32> -> vector<12x8xf32>
    %86 = vector.broadcast %83 : vector<12x1xf32> to vector<12x8xf32>
    %87 = arith.mulf %85, %86 : vector<12x8xf32>
    %88 = tpu.concatenate %39, %55, %71, %87 in 1 : vector<12x8xf32>, vector<12x8xf32>, vector<12x8xf32>, vector<12x8xf32> -> vector<12x32xf32>
    %89 = arith.truncf %88 : vector<12x32xf32> to vector<12x32xbf16>
    %c0_25 = arith.constant 0 : index
    %c0_26 = arith.constant 0 : index
    %90 = vector.load %arg4[%c0_25, %c0_26] : memref<32x32xbf16, #tpu.memory_space<vmem>>, vector<32x32xbf16>
    %cst_27 = arith.constant dense<0.000000e+00> : vector<12x32xf32>
    %91 = tpu.matmul %89, %90, %cst_27 {dimension_numbers = #tpu.dot_dimension_numbers<[1], [0], [0], [1], [0, 0, 1, 1], [], []>} : vector<12x32xbf16>, vector<32x32xbf16>, vector<12x32xf32> -> vector<12x32xf32>
    %92 = arith.addf %1, %91 : vector<12x32xf32>
    %c0_28 = arith.constant 0 : index
    %c0_29 = arith.constant 0 : index
    %c0_30 = arith.constant 0 : index
    %93 = vector.load %arg5[%c0_28, %c0_29, %c0_30] : memref<1x12x32xf32, #tpu.memory_space<vmem>>, vector<1x12x32xf32>
    %94 = vector.shape_cast %93 : vector<1x12x32xf32> to vector<12x32xf32>
    %95 = vector.shape_cast %92 : vector<12x32xf32> to vector<1x12x32xf32>
    tpu.vector_store %arg5[%c0_28, %c0_29, %c0_30], %95 {strides = array<i32>} : memref<1x12x32xf32, #tpu.memory_space<vmem>>, vector<1x12x32xf32>,
    return
  }
  func.func @transform_0(%arg0: i32) -> (i32, i32, i32) {
    %c0_i32 = arith.constant 0 : i32
    %c0_i32_0 = arith.constant 0 : i32
    %c0_i32_1 = arith.constant 0 : i32
    return %arg0, %c0_i32, %c0_i32_0 : i32, i32, i32
  }
  func.func @transform_1(%arg0: i32) -> (i32, i32) {
    %c0_i32 = arith.constant 0 : i32
    %c0_i32_0 = arith.constant 0 : i32
    %c0_i32_1 = arith.constant 0 : i32
    return %c0_i32, %c0_i32_0 : i32, i32
  }
  func.func @transform_2(%arg0: i32) -> (i32, i32) {
    %c0_i32 = arith.constant 0 : i32
    %c0_i32_0 = arith.constant 0 : i32
    %c0_i32_1 = arith.constant 0 : i32
    return %c0_i32, %c0_i32_0 : i32, i32
  }
  func.func @transform_3(%arg0: i32) -> (i32, i32) {
    %c0_i32 = arith.constant 0 : i32
    %c0_i32_0 = arith.constant 0 : i32
    %c0_i32_1 = arith.constant 0 : i32
    return %c0_i32, %c0_i32_0 : i32, i32
  }
  func.func @transform_4(%arg0: i32) -> (i32, i32, i32) {
    %c0_i32 = arith.constant 0 : i32
    %c0_i32_0 = arith.constant 0 : i32
    %c0_i32_1 = arith.constant 0 : i32
    return %arg0, %c0_i32, %c0_i32_0 : i32, i32, i32
  }
}

module attributes {stable_mosaic.version = 11 : i64} {
  func.func @_ffn_kernel(%arg0: i32, %arg1: memref<8x32xf32, #tpu.memory_space<vmem>>, %arg2: memref<1x32xf32, #tpu.memory_space<vmem>>, %arg3: memref<32x64xbf16, #tpu.memory_space<vmem>>, %arg4: memref<64x32xbf16, #tpu.memory_space<vmem>>, %arg5: memref<8x32xf32, #tpu.memory_space<vmem>>) attributes {dimension_semantics = [#tpu.dimension_semantics<parallel>], iteration_bounds = array<i64: 3>, scalar_prefetch = 0 : i64, scratch_operands = 0 : i64, tpu.core_type = #tpu.core_type<tc>, window_params = [{transform_indices = @transform_0, window_bounds = array<i64: 8, 32>}, {pipeline_mode = #tpu.pipeline_mode<synchronous>, transform_indices = @transform_1, window_bounds = array<i64: 1, 32>}, {pipeline_mode = #tpu.pipeline_mode<synchronous>, transform_indices = @transform_2, window_bounds = array<i64: 32, 64>}, {pipeline_mode = #tpu.pipeline_mode<synchronous>, transform_indices = @transform_3, window_bounds = array<i64: 64, 32>}, {transform_indices = @transform_4, window_bounds = array<i64: 8, 32>}]} {
    %c0 = arith.constant 0 : index
    %c0_0 = arith.constant 0 : index
    %0 = vector.load %arg1[%c0, %c0_0] : memref<8x32xf32, #tpu.memory_space<vmem>>, vector<8x32xf32>
    %c0_1 = arith.constant 0 : index
    %c0_2 = arith.constant 0 : index
    %1 = vector.load %arg2[%c0_1, %c0_2] : memref<1x32xf32, #tpu.memory_space<vmem>>, vector<1x32xf32>
    %2 = arith.mulf %0, %0 : vector<8x32xf32>
    %cst = arith.constant dense<0.000000e+00> : vector<8xf32>
    %3 = vector.multi_reduction <add>, %2, %cst [1] : vector<8x32xf32> to vector<8xf32>
    %4 = vector.shape_cast %3 : vector<8xf32> to vector<8x1xf32>
    %cst_3 = arith.constant 3.200000e+01 : f32
    %5 = vector.broadcast %cst_3 : f32 to vector<8x1xf32>
    %6 = arith.divf %4, %5 : vector<8x1xf32>
    %cst_4 = arith.constant 9.99999997E-7 : f32
    %7 = vector.broadcast %cst_4 : f32 to vector<8x1xf32>
    %8 = arith.addf %6, %7 : vector<8x1xf32>
    %9 = math.rsqrt %8 : vector<8x1xf32>
    %10 = vector.broadcast %9 : vector<8x1xf32> to vector<8x32xf32>
    %11 = arith.mulf %0, %10 : vector<8x32xf32>
    %12 = vector.broadcast %1 : vector<1x32xf32> to vector<8x32xf32>
    %13 = arith.mulf %11, %12 : vector<8x32xf32>
    %14 = arith.truncf %13 : vector<8x32xf32> to vector<8x32xbf16>
    %c0_5 = arith.constant 0 : index
    %c0_6 = arith.constant 0 : index
    %15 = vector.load %arg3[%c0_5, %c0_6] : memref<32x64xbf16, #tpu.memory_space<vmem>>, vector<32x64xbf16>
    %cst_7 = arith.constant dense<0.000000e+00> : vector<8x64xf32>
    %16 = tpu.matmul %14, %15, %cst_7 {dimension_numbers = #tpu.dot_dimension_numbers<[1], [0], [0], [1], [0, 0, 1, 1], [], []>} : vector<8x32xbf16>, vector<32x64xbf16>, vector<8x64xf32> -> vector<8x64xf32>
    %cst_8 = arith.constant 0.000000e+00 : f32
    %17 = vector.broadcast %cst_8 : f32 to vector<8x64xf32>
    %18 = arith.maximumf %16, %17 : vector<8x64xf32>
    %19 = arith.truncf %18 : vector<8x64xf32> to vector<8x64xbf16>
    %c0_9 = arith.constant 0 : index
    %c0_10 = arith.constant 0 : index
    %20 = vector.load %arg4[%c0_9, %c0_10] : memref<64x32xbf16, #tpu.memory_space<vmem>>, vector<64x32xbf16>
    %cst_11 = arith.constant dense<0.000000e+00> : vector<8x32xf32>
    %21 = tpu.matmul %19, %20, %cst_11 {dimension_numbers = #tpu.dot_dimension_numbers<[1], [0], [0], [1], [0, 0, 1, 1], [], []>} : vector<8x64xbf16>, vector<64x32xbf16>, vector<8x32xf32> -> vector<8x32xf32>
    %22 = arith.addf %0, %21 : vector<8x32xf32>
    %c0_12 = arith.constant 0 : index
    %c0_13 = arith.constant 0 : index
    %23 = vector.load %arg5[%c0_12, %c0_13] : memref<8x32xf32, #tpu.memory_space<vmem>>, vector<8x32xf32>
    tpu.vector_store %arg5[%c0_12, %c0_13], %22 {strides = array<i32>} : memref<8x32xf32, #tpu.memory_space<vmem>>, vector<8x32xf32>,
    return
  }
  func.func @transform_0(%arg0: i32) -> (i32, i32) {
    %c0_i32 = arith.constant 0 : i32
    %c0_i32_0 = arith.constant 0 : i32
    return %arg0, %c0_i32 : i32, i32
  }
  func.func @transform_1(%arg0: i32) -> (i32, i32) {
    %c0_i32 = arith.constant 0 : i32
    %c0_i32_0 = arith.constant 0 : i32
    %c0_i32_1 = arith.constant 0 : i32
    return %c0_i32, %c0_i32_0 : i32, i32
  }
  func.func @transform_2(%arg0: i32) -> (i32, i32) {
    %c0_i32 = arith.constant 0 : i32
    %c0_i32_0 = arith.constant 0 : i32
    %c0_i32_1 = arith.constant 0 : i32
    return %c0_i32, %c0_i32_0 : i32, i32
  }
  func.func @transform_3(%arg0: i32) -> (i32, i32) {
    %c0_i32 = arith.constant 0 : i32
    %c0_i32_0 = arith.constant 0 : i32
    %c0_i32_1 = arith.constant 0 : i32
    return %c0_i32, %c0_i32_0 : i32, i32
  }
  func.func @transform_4(%arg0: i32) -> (i32, i32) {
    %c0_i32 = arith.constant 0 : i32
    %c0_i32_0 = arith.constant 0 : i32
    return %arg0, %c0_i32 : i32, i32
  }
}

module attributes {stable_mosaic.version = 11 : i64} {
  func.func @_self_attn_kernel(%arg0: i32, %arg1: memref<1x12x32xf32, #tpu.memory_space<vmem>>, %arg2: memref<1x32xf32, #tpu.memory_space<vmem>>, %arg3: memref<32x96xbf16, #tpu.memory_space<vmem>>, %arg4: memref<32x32xbf16, #tpu.memory_space<vmem>>, %arg5: memref<1x12x32xf32, #tpu.memory_space<vmem>>) attributes {dimension_semantics = [#tpu.dimension_semantics<parallel>], iteration_bounds = array<i64: 2>, scalar_prefetch = 0 : i64, scratch_operands = 0 : i64, tpu.core_type = #tpu.core_type<tc>, window_params = [{transform_indices = @transform_0, window_bounds = array<i64: 1, 12, 32>}, {pipeline_mode = #tpu.pipeline_mode<synchronous>, transform_indices = @transform_1, window_bounds = array<i64: 1, 32>}, {pipeline_mode = #tpu.pipeline_mode<synchronous>, transform_indices = @transform_2, window_bounds = array<i64: 32, 96>}, {pipeline_mode = #tpu.pipeline_mode<synchronous>, transform_indices = @transform_3, window_bounds = array<i64: 32, 32>}, {transform_indices = @transform_4, window_bounds = array<i64: 1, 12, 32>}]} {
    %c0 = arith.constant 0 : index
    %c0_0 = arith.constant 0 : index
    %c0_1 = arith.constant 0 : index
    %0 = vector.load %arg1[%c0, %c0_0, %c0_1] : memref<1x12x32xf32, #tpu.memory_space<vmem>>, vector<1x12x32xf32>
    %1 = vector.shape_cast %0 : vector<1x12x32xf32> to vector<12x32xf32>
    %c0_2 = arith.constant 0 : index
    %c0_3 = arith.constant 0 : index
    %2 = vector.load %arg2[%c0_2, %c0_3] : memref<1x32xf32, #tpu.memory_space<vmem>>, vector<1x32xf32>
    %3 = arith.mulf %1, %1 : vector<12x32xf32>
    %cst = arith.constant dense<0.000000e+00> : vector<12xf32>
    %4 = vector.multi_reduction <add>, %3, %cst [1] : vector<12x32xf32> to vector<12xf32>
    %5 = vector.shape_cast %4 : vector<12xf32> to vector<12x1xf32>
    %cst_4 = arith.constant 3.200000e+01 : f32
    %6 = vector.broadcast %cst_4 : f32 to vector<12x1xf32>
    %7 = arith.divf %5, %6 : vector<12x1xf32>
    %cst_5 = arith.constant 9.99999997E-7 : f32
    %8 = vector.broadcast %cst_5 : f32 to vector<12x1xf32>
    %9 = arith.addf %7, %8 : vector<12x1xf32>
    %10 = math.rsqrt %9 : vector<12x1xf32>
    %11 = vector.broadcast %10 : vector<12x1xf32> to vector<12x32xf32>
    %12 = arith.mulf %1, %11 : vector<12x32xf32>
    %13 = vector.broadcast %2 : vector<1x32xf32> to vector<12x32xf32>
    %14 = arith.mulf %12, %13 : vector<12x32xf32>
    %15 = arith.truncf %14 : vector<12x32xf32> to vector<12x32xbf16>
    %c0_6 = arith.constant 0 : index
    %c0_7 = arith.constant 0 : index
    %16 = vector.load %arg3[%c0_6, %c0_7] : memref<32x96xbf16, #tpu.memory_space<vmem>>, vector<32x96xbf16>
    %cst_8 = arith.constant dense<0.000000e+00> : vector<12x96xf32>
    %17 = tpu.matmul %15, %16, %cst_8 {dimension_numbers = #tpu.dot_dimension_numbers<[1], [0], [0], [1], [0, 0, 1, 1], [], []>} : vector<12x32xbf16>, vector<32x96xbf16>, vector<12x96xf32> -> vector<12x96xf32>
    %18 = vector.extract_strided_slice %17 {offsets = [0, 0], sizes = [12, 32], strides = [1, 1]} : vector<12x96xf32> to vector<12x32xf32>
    %19 = arith.truncf %18 : vector<12x32xf32> to vector<12x32xbf16>
    %20 = vector.extract_strided_slice %17 {offsets = [0, 32], sizes = [12, 32], strides = [1, 1]} : vector<12x96xf32> to vector<12x32xf32>
    %21 = arith.truncf %20 : vector<12x32xf32> to vector<12x32xbf16>
    %22 = vector.extract_strided_slice %17 {offsets = [0, 64], sizes = [12, 32], strides = [1, 1]} : vector<12x96xf32> to vector<12x32xf32>
    %23 = arith.truncf %22 : vector<12x32xf32> to vector<12x32xbf16>
    %24 = tpu.iota {dimensions = array<i32: 0>} : vector<12x12xi32>
    %25 = tpu.iota {dimensions = array<i32: 1>} : vector<12x12xi32>
    %26 = arith.cmpi sgt, %25, %24 : vector<12x12xi32>
    %cst_9 = arith.constant -1.000000e+09 : f32
    %cst_10 = arith.constant 0.000000e+00 : f32
    %27 = vector.broadcast %cst_9 : f32 to vector<12x12xf32>
    %28 = vector.broadcast %cst_10 : f32 to vector<12x12xf32>
    %29 = arith.select %26, %27, %28 : vector<12x12xi1>, vector<12x12xf32>
    %30 = vector.extract_strided_slice %19 {offsets = [0, 0], sizes = [12, 8], strides = [1, 1]} : vector<12x32xbf16> to vector<12x8xbf16>
    %31 = vector.extract_strided_slice %21 {offsets = [0, 0], sizes = [12, 8], strides = [1, 1]} : vector<12x32xbf16> to vector<12x8xbf16>
    %32 = vector.extract_strided_slice %23 {offsets = [0, 0], sizes = [12, 8], strides = [1, 1]} : vector<12x32xbf16> to vector<12x8xbf16>
    %cst_11 = arith.constant dense<0.000000e+00> : vector<12x12xf32>
    %33 = tpu.matmul %30, %31, %cst_11 {dimension_numbers = #tpu.dot_dimension_numbers<[1], [1], [0], [0], [0, 0, 1, 0], [], []>} : vector<12x8xbf16>, vector<12x8xbf16>, vector<12x12xf32> -> vector<12x12xf32>
    %34 = arith.addf %33, %29 : vector<12x12xf32>
    %cst_12 = arith.constant dense<0xFF800000> : vector<12xf32>
    %35 = vector.multi_reduction <maximumf>, %34, %cst_12 [1] : vector<12x12xf32> to vector<12xf32>
    %36 = vector.shape_cast %35 : vector<12xf32> to vector<12x1xf32>
    %37 = vector.broadcast %36 : vector<12x1xf32> to vector<12x12xf32>
    %38 = arith.subf %34, %37 : vector<12x12xf32>
    %39 = math.exp %38 : vector<12x12xf32>
    %cst_13 = arith.constant dense<0.000000e+00> : vector<12xf32>
    %40 = vector.multi_reduction <add>, %39, %cst_13 [1] : vector<12x12xf32> to vector<12xf32>
    %41 = vector.shape_cast %40 : vector<12xf32> to vector<12x1xf32>
    %42 = tpu.reciprocal %41 {approx = true} : vector<12x1xf32> -> vector<12x1xf32>
    %43 = arith.truncf %39 : vector<12x12xf32> to vector<12x12xbf16>
    %cst_14 = arith.constant dense<0.000000e+00> : vector<12x8xf32>
    %44 = tpu.matmul %43, %32, %cst_14 {dimension_numbers = #tpu.dot_dimension_numbers<[1], [0], [0], [1], [0, 0, 1, 1], [], []>} : vector<12x12xbf16>, vector<12x8xbf16>, vector<12x8xf32> -> vector<12x8xf32>
    %45 = vector.broadcast %42 : vector<12x1xf32> to vector<12x8xf32>
    %46 = arith.mulf %44, %45 : vector<12x8xf32>
    %47 = vector.extract_strided_slice %19 {offsets = [0, 8], sizes = [12, 8], strides = [1, 1]} : vector<12x32xbf16> to vector<12x8xbf16>
    %48 = vector.extract_strided_slice %21 {offsets = [0, 8], sizes = [12, 8], strides = [1, 1]} : vector<12x32xbf16> to vector<12x8xbf16>
    %49 = vector.extract_strided_slice %23 {offsets = [0, 8], sizes = [12, 8], strides = [1, 1]} : vector<12x32xbf16> to vector<12x8xbf16>
    %cst_15 = arith.constant dense<0.000000e+00> : vector<12x12xf32>
    %50 = tpu.matmul %47, %48, %cst_15 {dimension_numbers = #tpu.dot_dimension_numbers<[1], [1], [0], [0], [0, 0, 1, 0], [], []>} : vector<12x8xbf16>, vector<12x8xbf16>, vector<12x12xf32> -> vector<12x12xf32>
    %51 = arith.addf %50, %29 : vector<12x12xf32>
    %cst_16 = arith.constant dense<0xFF800000> : vector<12xf32>
    %52 = vector.multi_reduction <maximumf>, %51, %cst_16 [1] : vector<12x12xf32> to vector<12xf32>
    %53 = vector.shape_cast %52 : vector<12xf32> to vector<12x1xf32>
    %54 = vector.broadcast %53 : vector<12x1xf32> to vector<12x12xf32>
    %55 = arith.subf %51, %54 : vector<12x12xf32>
    %56 = math.exp %55 : vector<12x12xf32>
    %cst_17 = arith.constant dense<0.000000e+00> : vector<12xf32>
    %57 = vector.multi_reduction <add>, %56, %cst_17 [1] : vector<12x12xf32> to vector<12xf32>
    %58 = vector.shape_cast %57 : vector<12xf32> to vector<12x1xf32>
    %59 = tpu.reciprocal %58 {approx = true} : vector<12x1xf32> -> vector<12x1xf32>
    %60 = arith.truncf %56 : vector<12x12xf32> to vector<12x12xbf16>
    %cst_18 = arith.constant dense<0.000000e+00> : vector<12x8xf32>
    %61 = tpu.matmul %60, %49, %cst_18 {dimension_numbers = #tpu.dot_dimension_numbers<[1], [0], [0], [1], [0, 0, 1, 1], [], []>} : vector<12x12xbf16>, vector<12x8xbf16>, vector<12x8xf32> -> vector<12x8xf32>
    %62 = vector.broadcast %59 : vector<12x1xf32> to vector<12x8xf32>
    %63 = arith.mulf %61, %62 : vector<12x8xf32>
    %64 = vector.extract_strided_slice %19 {offsets = [0, 16], sizes = [12, 8], strides = [1, 1]} : vector<12x32xbf16> to vector<12x8xbf16>
    %65 = vector.extract_strided_slice %21 {offsets = [0, 16], sizes = [12, 8], strides = [1, 1]} : vector<12x32xbf16> to vector<12x8xbf16>
    %66 = vector.extract_strided_slice %23 {offsets = [0, 16], sizes = [12, 8], strides = [1, 1]} : vector<12x32xbf16> to vector<12x8xbf16>
    %cst_19 = arith.constant dense<0.000000e+00> : vector<12x12xf32>
    %67 = tpu.matmul %64, %65, %cst_19 {dimension_numbers = #tpu.dot_dimension_numbers<[1], [1], [0], [0], [0, 0, 1, 0], [], []>} : vector<12x8xbf16>, vector<12x8xbf16>, vector<12x12xf32> -> vector<12x12xf32>
    %68 = arith.addf %67, %29 : vector<12x12xf32>
    %cst_20 = arith.constant dense<0xFF800000> : vector<12xf32>
    %69 = vector.multi_reduction <maximumf>, %68, %cst_20 [1] : vector<12x12xf32> to vector<12xf32>
    %70 = vector.shape_cast %69 : vector<12xf32> to vector<12x1xf32>
    %71 = vector.broadcast %70 : vector<12x1xf32> to vector<12x12xf32>
    %72 = arith.subf %68, %71 : vector<12x12xf32>
    %73 = math.exp %72 : vector<12x12xf32>
    %cst_21 = arith.constant dense<0.000000e+00> : vector<12xf32>
    %74 = vector.multi_reduction <add>, %73, %cst_21 [1] : vector<12x12xf32> to vector<12xf32>
    %75 = vector.shape_cast %74 : vector<12xf32> to vector<12x1xf32>
    %76 = tpu.reciprocal %75 {approx = true} : vector<12x1xf32> -> vector<12x1xf32>
    %77 = arith.truncf %73 : vector<12x12xf32> to vector<12x12xbf16>
    %cst_22 = arith.constant dense<0.000000e+00> : vector<12x8xf32>
    %78 = tpu.matmul %77, %66, %cst_22 {dimension_numbers = #tpu.dot_dimension_numbers<[1], [0], [0], [1], [0, 0, 1, 1], [], []>} : vector<12x12xbf16>, vector<12x8xbf16>, vector<12x8xf32> -> vector<12x8xf32>
    %79 = vector.broadcast %76 : vector<12x1xf32> to vector<12x8xf32>
    %80 = arith.mulf %78, %79 : vector<12x8xf32>
    %81 = vector.extract_strided_slice %19 {offsets = [0, 24], sizes = [12, 8], strides = [1, 1]} : vector<12x32xbf16> to vector<12x8xbf16>
    %82 = vector.extract_strided_slice %21 {offsets = [0, 24], sizes = [12, 8], strides = [1, 1]} : vector<12x32xbf16> to vector<12x8xbf16>
    %83 = vector.extract_strided_slice %23 {offsets = [0, 24], sizes = [12, 8], strides = [1, 1]} : vector<12x32xbf16> to vector<12x8xbf16>
    %cst_23 = arith.constant dense<0.000000e+00> : vector<12x12xf32>
    %84 = tpu.matmul %81, %82, %cst_23 {dimension_numbers = #tpu.dot_dimension_numbers<[1], [1], [0], [0], [0, 0, 1, 0], [], []>} : vector<12x8xbf16>, vector<12x8xbf16>, vector<12x12xf32> -> vector<12x12xf32>
    %85 = arith.addf %84, %29 : vector<12x12xf32>
    %cst_24 = arith.constant dense<0xFF800000> : vector<12xf32>
    %86 = vector.multi_reduction <maximumf>, %85, %cst_24 [1] : vector<12x12xf32> to vector<12xf32>
    %87 = vector.shape_cast %86 : vector<12xf32> to vector<12x1xf32>
    %88 = vector.broadcast %87 : vector<12x1xf32> to vector<12x12xf32>
    %89 = arith.subf %85, %88 : vector<12x12xf32>
    %90 = math.exp %89 : vector<12x12xf32>
    %cst_25 = arith.constant dense<0.000000e+00> : vector<12xf32>
    %91 = vector.multi_reduction <add>, %90, %cst_25 [1] : vector<12x12xf32> to vector<12xf32>
    %92 = vector.shape_cast %91 : vector<12xf32> to vector<12x1xf32>
    %93 = tpu.reciprocal %92 {approx = true} : vector<12x1xf32> -> vector<12x1xf32>
    %94 = arith.truncf %90 : vector<12x12xf32> to vector<12x12xbf16>
    %cst_26 = arith.constant dense<0.000000e+00> : vector<12x8xf32>
    %95 = tpu.matmul %94, %83, %cst_26 {dimension_numbers = #tpu.dot_dimension_numbers<[1], [0], [0], [1], [0, 0, 1, 1], [], []>} : vector<12x12xbf16>, vector<12x8xbf16>, vector<12x8xf32> -> vector<12x8xf32>
    %96 = vector.broadcast %93 : vector<12x1xf32> to vector<12x8xf32>
    %97 = arith.mulf %95, %96 : vector<12x8xf32>
    %98 = tpu.concatenate %46, %63, %80, %97 in 1 : vector<12x8xf32>, vector<12x8xf32>, vector<12x8xf32>, vector<12x8xf32> -> vector<12x32xf32>
    %99 = arith.truncf %98 : vector<12x32xf32> to vector<12x32xbf16>
    %c0_27 = arith.constant 0 : index
    %c0_28 = arith.constant 0 : index
    %100 = vector.load %arg4[%c0_27, %c0_28] : memref<32x32xbf16, #tpu.memory_space<vmem>>, vector<32x32xbf16>
    %cst_29 = arith.constant dense<0.000000e+00> : vector<12x32xf32>
    %101 = tpu.matmul %99, %100, %cst_29 {dimension_numbers = #tpu.dot_dimension_numbers<[1], [0], [0], [1], [0, 0, 1, 1], [], []>} : vector<12x32xbf16>, vector<32x32xbf16>, vector<12x32xf32> -> vector<12x32xf32>
    %102 = arith.addf %1, %101 : vector<12x32xf32>
    %c0_30 = arith.constant 0 : index
    %c0_31 = arith.constant 0 : index
    %c0_32 = arith.constant 0 : index
    %103 = vector.load %arg5[%c0_30, %c0_31, %c0_32] : memref<1x12x32xf32, #tpu.memory_space<vmem>>, vector<1x12x32xf32>
    %104 = vector.shape_cast %103 : vector<1x12x32xf32> to vector<12x32xf32>
    %105 = vector.shape_cast %102 : vector<12x32xf32> to vector<1x12x32xf32>
    tpu.vector_store %arg5[%c0_30, %c0_31, %c0_32], %105 {strides = array<i32>} : memref<1x12x32xf32, #tpu.memory_space<vmem>>, vector<1x12x32xf32>,
    return
  }
  func.func @transform_0(%arg0: i32) -> (i32, i32, i32) {
    %c0_i32 = arith.constant 0 : i32
    %c0_i32_0 = arith.constant 0 : i32
    %c0_i32_1 = arith.constant 0 : i32
    return %arg0, %c0_i32, %c0_i32_0 : i32, i32, i32
  }
  func.func @transform_1(%arg0: i32) -> (i32, i32) {
    %c0_i32 = arith.constant 0 : i32
    %c0_i32_0 = arith.constant 0 : i32
    %c0_i32_1 = arith.constant 0 : i32
    return %c0_i32, %c0_i32_0 : i32, i32
  }
  func.func @transform_2(%arg0: i32) -> (i32, i32) {
    %c0_i32 = arith.constant 0 : i32
    %c0_i32_0 = arith.constant 0 : i32
    %c0_i32_1 = arith.constant 0 : i32
    return %c0_i32, %c0_i32_0 : i32, i32
  }
  func.func @transform_3(%arg0: i32) -> (i32, i32) {
    %c0_i32 = arith.constant 0 : i32
    %c0_i32_0 = arith.constant 0 : i32
    %c0_i32_1 = arith.constant 0 : i32
    return %c0_i32, %c0_i32_0 : i32, i32
  }
  func.func @transform_4(%arg0: i32) -> (i32, i32, i32) {
    %c0_i32 = arith.constant 0 : i32
    %c0_i32_0 = arith.constant 0 : i32
    %c0_i32_1 = arith.constant 0 : i32
    return %arg0, %c0_i32, %c0_i32_0 : i32, i32, i32
  }
}

module attributes {stable_mosaic.version = 11 : i64} {
  func.func @_rmsnorm_bf16_kernel(%arg0: i32, %arg1: memref<16x32xf32, #tpu.memory_space<vmem>>, %arg2: memref<1x32xf32, #tpu.memory_space<vmem>>, %arg3: memref<16x32xbf16, #tpu.memory_space<vmem>>) attributes {dimension_semantics = [#tpu.dimension_semantics<parallel>], iteration_bounds = array<i64: 1>, scalar_prefetch = 0 : i64, scratch_operands = 0 : i64, tpu.core_type = #tpu.core_type<tc>, window_params = [{transform_indices = @transform_0, window_bounds = array<i64: 16, 32>}, {pipeline_mode = #tpu.pipeline_mode<synchronous>, transform_indices = @transform_1, window_bounds = array<i64: 1, 32>}, {transform_indices = @transform_2, window_bounds = array<i64: 16, 32>}]} {
    %c0 = arith.constant 0 : index
    %c0_0 = arith.constant 0 : index
    %0 = vector.load %arg1[%c0, %c0_0] : memref<16x32xf32, #tpu.memory_space<vmem>>, vector<16x32xf32>
    %c0_1 = arith.constant 0 : index
    %c0_2 = arith.constant 0 : index
    %1 = vector.load %arg2[%c0_1, %c0_2] : memref<1x32xf32, #tpu.memory_space<vmem>>, vector<1x32xf32>
    %2 = arith.mulf %0, %0 : vector<16x32xf32>
    %cst = arith.constant dense<0.000000e+00> : vector<16xf32>
    %3 = vector.multi_reduction <add>, %2, %cst [1] : vector<16x32xf32> to vector<16xf32>
    %4 = vector.shape_cast %3 : vector<16xf32> to vector<16x1xf32>
    %cst_3 = arith.constant 3.200000e+01 : f32
    %5 = vector.broadcast %cst_3 : f32 to vector<16x1xf32>
    %6 = arith.divf %4, %5 : vector<16x1xf32>
    %cst_4 = arith.constant 9.99999997E-7 : f32
    %7 = vector.broadcast %cst_4 : f32 to vector<16x1xf32>
    %8 = arith.addf %6, %7 : vector<16x1xf32>
    %9 = math.rsqrt %8 : vector<16x1xf32>
    %10 = vector.broadcast %9 : vector<16x1xf32> to vector<16x32xf32>
    %11 = arith.mulf %0, %10 : vector<16x32xf32>
    %12 = vector.broadcast %1 : vector<1x32xf32> to vector<16x32xf32>
    %13 = arith.mulf %11, %12 : vector<16x32xf32>
    %14 = arith.truncf %13 : vector<16x32xf32> to vector<16x32xbf16>
    %c0_5 = arith.constant 0 : index
    %c0_6 = arith.constant 0 : index
    %15 = vector.load %arg3[%c0_5, %c0_6] : memref<16x32xbf16, #tpu.memory_space<vmem>>, vector<16x32xbf16>
    tpu.vector_store %arg3[%c0_5, %c0_6], %14 {strides = array<i32>} : memref<16x32xbf16, #tpu.memory_space<vmem>>, vector<16x32xbf16>,
    return
  }
  func.func @transform_0(%arg0: i32) -> (i32, i32) {
    %c0_i32 = arith.constant 0 : i32
    %c0_i32_0 = arith.constant 0 : i32
    return %arg0, %c0_i32 : i32, i32
  }
  func.func @transform_1(%arg0: i32) -> (i32, i32) {
    %c0_i32 = arith.constant 0 : i32
    %c0_i32_0 = arith.constant 0 : i32
    %c0_i32_1 = arith.constant 0 : i32
    return %c0_i32, %c0_i32_0 : i32, i32
  }
  func.func @transform_2(%arg0: i32) -> (i32, i32) {
    %c0_i32 = arith.constant 0 : i32
    %c0_i32_0 = arith.constant 0 : i32
    return %arg0, %c0_i32 : i32, i32
  }
}

module attributes {stable_mosaic.version = 11 : i64} {
  func.func @_cross_attn_kernel(%arg0: i32, %arg1: memref<1x12x32xf32, #tpu.memory_space<vmem>>, %arg2: memref<1x12x32xf32, #tpu.memory_space<vmem>>, %arg3: memref<1x32xf32, #tpu.memory_space<vmem>>, %arg4: memref<1x32xf32, #tpu.memory_space<vmem>>, %arg5: memref<32x32xbf16, #tpu.memory_space<vmem>>, %arg6: memref<32x64xbf16, #tpu.memory_space<vmem>>, %arg7: memref<32x32xbf16, #tpu.memory_space<vmem>>, %arg8: memref<1x12x32xf32, #tpu.memory_space<vmem>>) attributes {dimension_semantics = [#tpu.dimension_semantics<parallel>], iteration_bounds = array<i64: 2>, scalar_prefetch = 0 : i64, scratch_operands = 0 : i64, tpu.core_type = #tpu.core_type<tc>, window_params = [{transform_indices = @transform_0, window_bounds = array<i64: 1, 12, 32>}, {transform_indices = @transform_1, window_bounds = array<i64: 1, 12, 32>}, {pipeline_mode = #tpu.pipeline_mode<synchronous>, transform_indices = @transform_2, window_bounds = array<i64: 1, 32>}, {pipeline_mode = #tpu.pipeline_mode<synchronous>, transform_indices = @transform_3, window_bounds = array<i64: 1, 32>}, {pipeline_mode = #tpu.pipeline_mode<synchronous>, transform_indices = @transform_4, window_bounds = array<i64: 32, 32>}, {pipeline_mode = #tpu.pipeline_mode<synchronous>, transform_indices = @transform_5, window_bounds = array<i64: 32, 64>}, {pipeline_mode = #tpu.pipeline_mode<synchronous>, transform_indices = @transform_6, window_bounds = array<i64: 32, 32>}, {transform_indices = @transform_7, window_bounds = array<i64: 1, 12, 32>}]} {
    %c0 = arith.constant 0 : index
    %c0_0 = arith.constant 0 : index
    %c0_1 = arith.constant 0 : index
    %0 = vector.load %arg1[%c0, %c0_0, %c0_1] : memref<1x12x32xf32, #tpu.memory_space<vmem>>, vector<1x12x32xf32>
    %1 = vector.shape_cast %0 : vector<1x12x32xf32> to vector<12x32xf32>
    %c0_2 = arith.constant 0 : index
    %c0_3 = arith.constant 0 : index
    %c0_4 = arith.constant 0 : index
    %2 = vector.load %arg2[%c0_2, %c0_3, %c0_4] : memref<1x12x32xf32, #tpu.memory_space<vmem>>, vector<1x12x32xf32>
    %3 = vector.shape_cast %2 : vector<1x12x32xf32> to vector<12x32xf32>
    %c0_5 = arith.constant 0 : index
    %c0_6 = arith.constant 0 : index
    %4 = vector.load %arg3[%c0_5, %c0_6] : memref<1x32xf32, #tpu.memory_space<vmem>>, vector<1x32xf32>
    %5 = arith.mulf %1, %1 : vector<12x32xf32>
    %cst = arith.constant dense<0.000000e+00> : vector<12xf32>
    %6 = vector.multi_reduction <add>, %5, %cst [1] : vector<12x32xf32> to vector<12xf32>
    %7 = vector.shape_cast %6 : vector<12xf32> to vector<12x1xf32>
    %cst_7 = arith.constant 3.200000e+01 : f32
    %8 = vector.broadcast %cst_7 : f32 to vector<12x1xf32>
    %9 = arith.divf %7, %8 : vector<12x1xf32>
    %cst_8 = arith.constant 9.99999997E-7 : f32
    %10 = vector.broadcast %cst_8 : f32 to vector<12x1xf32>
    %11 = arith.addf %9, %10 : vector<12x1xf32>
    %12 = math.rsqrt %11 : vector<12x1xf32>
    %13 = vector.broadcast %12 : vector<12x1xf32> to vector<12x32xf32>
    %14 = arith.mulf %1, %13 : vector<12x32xf32>
    %15 = vector.broadcast %4 : vector<1x32xf32> to vector<12x32xf32>
    %16 = arith.mulf %14, %15 : vector<12x32xf32>
    %17 = arith.truncf %16 : vector<12x32xf32> to vector<12x32xbf16>
    %c0_9 = arith.constant 0 : index
    %c0_10 = arith.constant 0 : index
    %18 = vector.load %arg4[%c0_9, %c0_10] : memref<1x32xf32, #tpu.memory_space<vmem>>, vector<1x32xf32>
    %19 = arith.mulf %3, %3 : vector<12x32xf32>
    %cst_11 = arith.constant dense<0.000000e+00> : vector<12xf32>
    %20 = vector.multi_reduction <add>, %19, %cst_11 [1] : vector<12x32xf32> to vector<12xf32>
    %21 = vector.shape_cast %20 : vector<12xf32> to vector<12x1xf32>
    %cst_12 = arith.constant 3.200000e+01 : f32
    %22 = vector.broadcast %cst_12 : f32 to vector<12x1xf32>
    %23 = arith.divf %21, %22 : vector<12x1xf32>
    %cst_13 = arith.constant 9.99999997E-7 : f32
    %24 = vector.broadcast %cst_13 : f32 to vector<12x1xf32>
    %25 = arith.addf %23, %24 : vector<12x1xf32>
    %26 = math.rsqrt %25 : vector<12x1xf32>
    %27 = vector.broadcast %26 : vector<12x1xf32> to vector<12x32xf32>
    %28 = arith.mulf %3, %27 : vector<12x32xf32>
    %29 = vector.broadcast %18 : vector<1x32xf32> to vector<12x32xf32>
    %30 = arith.mulf %28, %29 : vector<12x32xf32>
    %31 = arith.truncf %30 : vector<12x32xf32> to vector<12x32xbf16>
    %c0_14 = arith.constant 0 : index
    %c0_15 = arith.constant 0 : index
    %32 = vector.load %arg5[%c0_14, %c0_15] : memref<32x32xbf16, #tpu.memory_space<vmem>>, vector<32x32xbf16>
    %cst_16 = arith.constant dense<0.000000e+00> : vector<12x32xf32>
    %33 = tpu.matmul %17, %32, %cst_16 {dimension_numbers = #tpu.dot_dimension_numbers<[1], [0], [0], [1], [0, 0, 1, 1], [], []>} : vector<12x32xbf16>, vector<32x32xbf16>, vector<12x32xf32> -> vector<12x32xf32>
    %34 = arith.truncf %33 : vector<12x32xf32> to vector<12x32xbf16>
    %c0_17 = arith.constant 0 : index
    %c0_18 = arith.constant 0 : index
    %35 = vector.load %arg6[%c0_17, %c0_18] : memref<32x64xbf16, #tpu.memory_space<vmem>>, vector<32x64xbf16>
    %cst_19 = arith.constant dense<0.000000e+00> : vector<12x64xf32>
    %36 = tpu.matmul %31, %35, %cst_19 {dimension_numbers = #tpu.dot_dimension_numbers<[1], [0], [0], [1], [0, 0, 1, 1], [], []>} : vector<12x32xbf16>, vector<32x64xbf16>, vector<12x64xf32> -> vector<12x64xf32>
    %37 = vector.extract_strided_slice %36 {offsets = [0, 0], sizes = [12, 32], strides = [1, 1]} : vector<12x64xf32> to vector<12x32xf32>
    %38 = arith.truncf %37 : vector<12x32xf32> to vector<12x32xbf16>
    %39 = vector.extract_strided_slice %36 {offsets = [0, 32], sizes = [12, 32], strides = [1, 1]} : vector<12x64xf32> to vector<12x32xf32>
    %40 = arith.truncf %39 : vector<12x32xf32> to vector<12x32xbf16>
    %41 = vector.extract_strided_slice %34 {offsets = [0, 0], sizes = [12, 8], strides = [1, 1]} : vector<12x32xbf16> to vector<12x8xbf16>
    %42 = vector.extract_strided_slice %38 {offsets = [0, 0], sizes = [12, 8], strides = [1, 1]} : vector<12x32xbf16> to vector<12x8xbf16>
    %43 = vector.extract_strided_slice %40 {offsets = [0, 0], sizes = [12, 8], strides = [1, 1]} : vector<12x32xbf16> to vector<12x8xbf16>
    %cst_20 = arith.constant dense<0.000000e+00> : vector<12x12xf32>
    %44 = tpu.matmul %41, %42, %cst_20 {dimension_numbers = #tpu.dot_dimension_numbers<[1], [1], [0], [0], [0, 0, 1, 0], [], []>} : vector<12x8xbf16>, vector<12x8xbf16>, vector<12x12xf32> -> vector<12x12xf32>
    %cst_21 = arith.constant dense<0xFF800000> : vector<12xf32>
    %45 = vector.multi_reduction <maximumf>, %44, %cst_21 [1] : vector<12x12xf32> to vector<12xf32>
    %46 = vector.shape_cast %45 : vector<12xf32> to vector<12x1xf32>
    %47 = vector.broadcast %46 : vector<12x1xf32> to vector<12x12xf32>
    %48 = arith.subf %44, %47 : vector<12x12xf32>
    %49 = math.exp %48 : vector<12x12xf32>
    %cst_22 = arith.constant dense<0.000000e+00> : vector<12xf32>
    %50 = vector.multi_reduction <add>, %49, %cst_22 [1] : vector<12x12xf32> to vector<12xf32>
    %51 = vector.shape_cast %50 : vector<12xf32> to vector<12x1xf32>
    %52 = tpu.reciprocal %51 {approx = true} : vector<12x1xf32> -> vector<12x1xf32>
    %53 = arith.truncf %49 : vector<12x12xf32> to vector<12x12xbf16>
    %cst_23 = arith.constant dense<0.000000e+00> : vector<12x8xf32>
    %54 = tpu.matmul %53, %43, %cst_23 {dimension_numbers = #tpu.dot_dimension_numbers<[1], [0], [0], [1], [0, 0, 1, 1], [], []>} : vector<12x12xbf16>, vector<12x8xbf16>, vector<12x8xf32> -> vector<12x8xf32>
    %55 = vector.broadcast %52 : vector<12x1xf32> to vector<12x8xf32>
    %56 = arith.mulf %54, %55 : vector<12x8xf32>
    %57 = vector.extract_strided_slice %34 {offsets = [0, 8], sizes = [12, 8], strides = [1, 1]} : vector<12x32xbf16> to vector<12x8xbf16>
    %58 = vector.extract_strided_slice %38 {offsets = [0, 8], sizes = [12, 8], strides = [1, 1]} : vector<12x32xbf16> to vector<12x8xbf16>
    %59 = vector.extract_strided_slice %40 {offsets = [0, 8], sizes = [12, 8], strides = [1, 1]} : vector<12x32xbf16> to vector<12x8xbf16>
    %cst_24 = arith.constant dense<0.000000e+00> : vector<12x12xf32>
    %60 = tpu.matmul %57, %58, %cst_24 {dimension_numbers = #tpu.dot_dimension_numbers<[1], [1], [0], [0], [0, 0, 1, 0], [], []>} : vector<12x8xbf16>, vector<12x8xbf16>, vector<12x12xf32> -> vector<12x12xf32>
    %cst_25 = arith.constant dense<0xFF800000> : vector<12xf32>
    %61 = vector.multi_reduction <maximumf>, %60, %cst_25 [1] : vector<12x12xf32> to vector<12xf32>
    %62 = vector.shape_cast %61 : vector<12xf32> to vector<12x1xf32>
    %63 = vector.broadcast %62 : vector<12x1xf32> to vector<12x12xf32>
    %64 = arith.subf %60, %63 : vector<12x12xf32>
    %65 = math.exp %64 : vector<12x12xf32>
    %cst_26 = arith.constant dense<0.000000e+00> : vector<12xf32>
    %66 = vector.multi_reduction <add>, %65, %cst_26 [1] : vector<12x12xf32> to vector<12xf32>
    %67 = vector.shape_cast %66 : vector<12xf32> to vector<12x1xf32>
    %68 = tpu.reciprocal %67 {approx = true} : vector<12x1xf32> -> vector<12x1xf32>
    %69 = arith.truncf %65 : vector<12x12xf32> to vector<12x12xbf16>
    %cst_27 = arith.constant dense<0.000000e+00> : vector<12x8xf32>
    %70 = tpu.matmul %69, %59, %cst_27 {dimension_numbers = #tpu.dot_dimension_numbers<[1], [0], [0], [1], [0, 0, 1, 1], [], []>} : vector<12x12xbf16>, vector<12x8xbf16>, vector<12x8xf32> -> vector<12x8xf32>
    %71 = vector.broadcast %68 : vector<12x1xf32> to vector<12x8xf32>
    %72 = arith.mulf %70, %71 : vector<12x8xf32>
    %73 = vector.extract_strided_slice %34 {offsets = [0, 16], sizes = [12, 8], strides = [1, 1]} : vector<12x32xbf16> to vector<12x8xbf16>
    %74 = vector.extract_strided_slice %38 {offsets = [0, 16], sizes = [12, 8], strides = [1, 1]} : vector<12x32xbf16> to vector<12x8xbf16>
    %75 = vector.extract_strided_slice %40 {offsets = [0, 16], sizes = [12, 8], strides = [1, 1]} : vector<12x32xbf16> to vector<12x8xbf16>
    %cst_28 = arith.constant dense<0.000000e+00> : vector<12x12xf32>
    %76 = tpu.matmul %73, %74, %cst_28 {dimension_numbers = #tpu.dot_dimension_numbers<[1], [1], [0], [0], [0, 0, 1, 0], [], []>} : vector<12x8xbf16>, vector<12x8xbf16>, vector<12x12xf32> -> vector<12x12xf32>
    %cst_29 = arith.constant dense<0xFF800000> : vector<12xf32>
    %77 = vector.multi_reduction <maximumf>, %76, %cst_29 [1] : vector<12x12xf32> to vector<12xf32>
    %78 = vector.shape_cast %77 : vector<12xf32> to vector<12x1xf32>
    %79 = vector.broadcast %78 : vector<12x1xf32> to vector<12x12xf32>
    %80 = arith.subf %76, %79 : vector<12x12xf32>
    %81 = math.exp %80 : vector<12x12xf32>
    %cst_30 = arith.constant dense<0.000000e+00> : vector<12xf32>
    %82 = vector.multi_reduction <add>, %81, %cst_30 [1] : vector<12x12xf32> to vector<12xf32>
    %83 = vector.shape_cast %82 : vector<12xf32> to vector<12x1xf32>
    %84 = tpu.reciprocal %83 {approx = true} : vector<12x1xf32> -> vector<12x1xf32>
    %85 = arith.truncf %81 : vector<12x12xf32> to vector<12x12xbf16>
    %cst_31 = arith.constant dense<0.000000e+00> : vector<12x8xf32>
    %86 = tpu.matmul %85, %75, %cst_31 {dimension_numbers = #tpu.dot_dimension_numbers<[1], [0], [0], [1], [0, 0, 1, 1], [], []>} : vector<12x12xbf16>, vector<12x8xbf16>, vector<12x8xf32> -> vector<12x8xf32>
    %87 = vector.broadcast %84 : vector<12x1xf32> to vector<12x8xf32>
    %88 = arith.mulf %86, %87 : vector<12x8xf32>
    %89 = vector.extract_strided_slice %34 {offsets = [0, 24], sizes = [12, 8], strides = [1, 1]} : vector<12x32xbf16> to vector<12x8xbf16>
    %90 = vector.extract_strided_slice %38 {offsets = [0, 24], sizes = [12, 8], strides = [1, 1]} : vector<12x32xbf16> to vector<12x8xbf16>
    %91 = vector.extract_strided_slice %40 {offsets = [0, 24], sizes = [12, 8], strides = [1, 1]} : vector<12x32xbf16> to vector<12x8xbf16>
    %cst_32 = arith.constant dense<0.000000e+00> : vector<12x12xf32>
    %92 = tpu.matmul %89, %90, %cst_32 {dimension_numbers = #tpu.dot_dimension_numbers<[1], [1], [0], [0], [0, 0, 1, 0], [], []>} : vector<12x8xbf16>, vector<12x8xbf16>, vector<12x12xf32> -> vector<12x12xf32>
    %cst_33 = arith.constant dense<0xFF800000> : vector<12xf32>
    %93 = vector.multi_reduction <maximumf>, %92, %cst_33 [1] : vector<12x12xf32> to vector<12xf32>
    %94 = vector.shape_cast %93 : vector<12xf32> to vector<12x1xf32>
    %95 = vector.broadcast %94 : vector<12x1xf32> to vector<12x12xf32>
    %96 = arith.subf %92, %95 : vector<12x12xf32>
    %97 = math.exp %96 : vector<12x12xf32>
    %cst_34 = arith.constant dense<0.000000e+00> : vector<12xf32>
    %98 = vector.multi_reduction <add>, %97, %cst_34 [1] : vector<12x12xf32> to vector<12xf32>
    %99 = vector.shape_cast %98 : vector<12xf32> to vector<12x1xf32>
    %100 = tpu.reciprocal %99 {approx = true} : vector<12x1xf32> -> vector<12x1xf32>
    %101 = arith.truncf %97 : vector<12x12xf32> to vector<12x12xbf16>
    %cst_35 = arith.constant dense<0.000000e+00> : vector<12x8xf32>
    %102 = tpu.matmul %101, %91, %cst_35 {dimension_numbers = #tpu.dot_dimension_numbers<[1], [0], [0], [1], [0, 0, 1, 1], [], []>} : vector<12x12xbf16>, vector<12x8xbf16>, vector<12x8xf32> -> vector<12x8xf32>
    %103 = vector.broadcast %100 : vector<12x1xf32> to vector<12x8xf32>
    %104 = arith.mulf %102, %103 : vector<12x8xf32>
    %105 = tpu.concatenate %56, %72, %88, %104 in 1 : vector<12x8xf32>, vector<12x8xf32>, vector<12x8xf32>, vector<12x8xf32> -> vector<12x32xf32>
    %106 = arith.truncf %105 : vector<12x32xf32> to vector<12x32xbf16>
    %c0_36 = arith.constant 0 : index
    %c0_37 = arith.constant 0 : index
    %107 = vector.load %arg7[%c0_36, %c0_37] : memref<32x32xbf16, #tpu.memory_space<vmem>>, vector<32x32xbf16>
    %cst_38 = arith.constant dense<0.000000e+00> : vector<12x32xf32>
    %108 = tpu.matmul %106, %107, %cst_38 {dimension_numbers = #tpu.dot_dimension_numbers<[1], [0], [0], [1], [0, 0, 1, 1], [], []>} : vector<12x32xbf16>, vector<32x32xbf16>, vector<12x32xf32> -> vector<12x32xf32>
    %109 = arith.addf %1, %108 : vector<12x32xf32>
    %c0_39 = arith.constant 0 : index
    %c0_40 = arith.constant 0 : index
    %c0_41 = arith.constant 0 : index
    %110 = vector.load %arg8[%c0_39, %c0_40, %c0_41] : memref<1x12x32xf32, #tpu.memory_space<vmem>>, vector<1x12x32xf32>
    %111 = vector.shape_cast %110 : vector<1x12x32xf32> to vector<12x32xf32>
    %112 = vector.shape_cast %109 : vector<12x32xf32> to vector<1x12x32xf32>
    tpu.vector_store %arg8[%c0_39, %c0_40, %c0_41], %112 {strides = array<i32>} : memref<1x12x32xf32, #tpu.memory_space<vmem>>, vector<1x12x32xf32>,
    return
  }
  func.func @transform_0(%arg0: i32) -> (i32, i32, i32) {
    %c0_i32 = arith.constant 0 : i32
    %c0_i32_0 = arith.constant 0 : i32
    %c0_i32_1 = arith.constant 0 : i32
    return %arg0, %c0_i32, %c0_i32_0 : i32, i32, i32
  }
  func.func @transform_1(%arg0: i32) -> (i32, i32, i32) {
    %c0_i32 = arith.constant 0 : i32
    %c0_i32_0 = arith.constant 0 : i32
    %c0_i32_1 = arith.constant 0 : i32
    return %arg0, %c0_i32, %c0_i32_0 : i32, i32, i32
  }
  func.func @transform_2(%arg0: i32) -> (i32, i32) {
    %c0_i32 = arith.constant 0 : i32
    %c0_i32_0 = arith.constant 0 : i32
    %c0_i32_1 = arith.constant 0 : i32
    return %c0_i32, %c0_i32_0 : i32, i32
  }
  func.func @transform_3(%arg0: i32) -> (i32, i32) {
    %c0_i32 = arith.constant 0 : i32
    %c0_i32_0 = arith.constant 0 : i32
    %c0_i32_1 = arith.constant 0 : i32
    return %c0_i32, %c0_i32_0 : i32, i32
  }
  func.func @transform_4(%arg0: i32) -> (i32, i32) {
    %c0_i32 = arith.constant 0 : i32
    %c0_i32_0 = arith.constant 0 : i32
    %c0_i32_1 = arith.constant 0 : i32
    return %c0_i32, %c0_i32_0 : i32, i32
  }
  func.func @transform_5(%arg0: i32) -> (i32, i32) {
    %c0_i32 = arith.constant 0 : i32
    %c0_i32_0 = arith.constant 0 : i32
    %c0_i32_1 = arith.constant 0 : i32
    return %c0_i32, %c0_i32_0 : i32, i32
  }
  func.func @transform_6(%arg0: i32) -> (i32, i32) {
    %c0_i32 = arith.constant 0 : i32
    %c0_i32_0 = arith.constant 0 : i32
    %c0_i32_1 = arith.constant 0 : i32
    return %c0_i32, %c0_i32_0 : i32, i32
  }
  func.func @transform_7(%arg0: i32) -> (i32, i32, i32) {
    %c0_i32 = arith.constant 0 : i32
    %c0_i32_0 = arith.constant 0 : i32
    %c0_i32_1 = arith.constant 0 : i32
    return %arg0, %c0_i32, %c0_i32_0 : i32, i32, i32
  }
}

module attributes {stable_mosaic.version = 11 : i64} {
  func.func @_lmhead_ce_kernel(%arg0: i32, %arg1: i32, %arg2: memref<16x32xbf16, #tpu.memory_space<vmem>>, %arg3: memref<32x128xbf16, #tpu.memory_space<vmem>>, %arg4: memref<16x1xi32, #tpu.memory_space<vmem>>, %arg5: memref<1x1xf32, #tpu.memory_space<vmem>>, %arg6: memref<1x16x1xf32, #tpu.memory_space<vmem>>, %arg7: memref<1x16x1xf32, #tpu.memory_space<vmem>>, %arg8: memref<1x16x1xf32, #tpu.memory_space<vmem>>, %arg9: memref<1x1xf32, #tpu.memory_space<vmem>>, %arg10: memref<1x1xf32, #tpu.memory_space<vmem>>) attributes {dimension_semantics = [#tpu.dimension_semantics<arbitrary>, #tpu.dimension_semantics<arbitrary>], iteration_bounds = array<i64: 1, 1>, scalar_prefetch = 0 : i64, scratch_operands = 5 : i64, tpu.core_type = #tpu.core_type<tc>, window_params = [{transform_indices = @transform_0, window_bounds = array<i64: 16, 32>}, {transform_indices = @transform_1, window_bounds = array<i64: 32, 128>}, {transform_indices = @transform_2, window_bounds = array<i64: 16, 1>}, {pipeline_mode = #tpu.pipeline_mode<synchronous>, transform_indices = @transform_3, window_bounds = array<i64: 1, 1>}]} {
    %c0_i32 = arith.constant 0 : i32
    %0 = arith.cmpi eq, %arg1, %c0_i32 : i32
    %c0_i32_0 = arith.constant 0 : i32
    %1 = arith.cmpi eq, %arg0, %c0_i32_0 : i32
    %2 = arith.andi %0, %1 : i1
    %3 = arith.extui %2 : i1 to i32
    %c0_i32_1 = arith.constant 0 : i32
    %4 = arith.cmpi ne, %3, %c0_i32_1 : i32
    scf.if %4 {
      %cst_30 = arith.constant 0.000000e+00 : f32
      %64 = vector.broadcast %cst_30 : f32 to vector<1x1xf32>
      %c0_31 = arith.constant 0 : index
      %c0_32 = arith.constant 0 : index
      %65 = vector.load %arg9[%c0_31, %c0_32] : memref<1x1xf32, #tpu.memory_space<vmem>>, vector<1x1xf32>
      tpu.vector_store %arg9[%c0_31, %c0_32], %64 {strides = array<i32>} : memref<1x1xf32, #tpu.memory_space<vmem>>, vector<1x1xf32>,
      %cst_33 = arith.constant 0.000000e+00 : f32
      %66 = vector.broadcast %cst_33 : f32 to vector<1x1xf32>
      %c0_34 = arith.constant 0 : index
      %c0_35 = arith.constant 0 : index
      %67 = vector.load %arg10[%c0_34, %c0_35] : memref<1x1xf32, #tpu.memory_space<vmem>>, vector<1x1xf32>
      tpu.vector_store %arg10[%c0_34, %c0_35], %66 {strides = array<i32>} : memref<1x1xf32, #tpu.memory_space<vmem>>, vector<1x1xf32>,
    } else {
    }
    %c0_i32_2 = arith.constant 0 : i32
    %5 = arith.cmpi eq, %arg0, %c0_i32_2 : i32
    %6 = arith.extui %5 : i1 to i32
    %c0_i32_3 = arith.constant 0 : i32
    %7 = arith.cmpi ne, %6, %c0_i32_3 : i32
    scf.if %7 {
      %cst_30 = arith.constant 0xFF800000 : f32
      %64 = vector.broadcast %cst_30 : f32 to vector<16x1xf32>
      %65 = arith.index_cast %arg1 : i32 to index
      %c0_31 = arith.constant 0 : index
      %c0_32 = arith.constant 0 : index
      %66 = vector.load %arg6[%65, %c0_31, %c0_32] : memref<1x16x1xf32, #tpu.memory_space<vmem>>, vector<1x16x1xf32>
      %67 = vector.shape_cast %66 : vector<1x16x1xf32> to vector<16x1xf32>
      %68 = vector.shape_cast %64 : vector<16x1xf32> to vector<1x16x1xf32>
      tpu.vector_store %arg6[%65, %c0_31, %c0_32], %68 {strides = array<i32>} : memref<1x16x1xf32, #tpu.memory_space<vmem>>, vector<1x16x1xf32>,
      %cst_33 = arith.constant 0.000000e+00 : f32
      %69 = vector.broadcast %cst_33 : f32 to vector<16x1xf32>
      %70 = arith.index_cast %arg1 : i32 to index
      %c0_34 = arith.constant 0 : index
      %c0_35 = arith.constant 0 : index
      %71 = vector.load %arg7[%70, %c0_34, %c0_35] : memref<1x16x1xf32, #tpu.memory_space<vmem>>, vector<1x16x1xf32>
      %72 = vector.shape_cast %71 : vector<1x16x1xf32> to vector<16x1xf32>
      %73 = vector.shape_cast %69 : vector<16x1xf32> to vector<1x16x1xf32>
      tpu.vector_store %arg7[%70, %c0_34, %c0_35], %73 {strides = array<i32>} : memref<1x16x1xf32, #tpu.memory_space<vmem>>, vector<1x16x1xf32>,
      %cst_36 = arith.constant 0.000000e+00 : f32
      %74 = vector.broadcast %cst_36 : f32 to vector<16x1xf32>
      %75 = arith.index_cast %arg1 : i32 to index
      %c0_37 = arith.constant 0 : index
      %c0_38 = arith.constant 0 : index
      %76 = vector.load %arg8[%75, %c0_37, %c0_38] : memref<1x16x1xf32, #tpu.memory_space<vmem>>, vector<1x16x1xf32>
      %77 = vector.shape_cast %76 : vector<1x16x1xf32> to vector<16x1xf32>
      %78 = vector.shape_cast %74 : vector<16x1xf32> to vector<1x16x1xf32>
      tpu.vector_store %arg8[%75, %c0_37, %c0_38], %78 {strides = array<i32>} : memref<1x16x1xf32, #tpu.memory_space<vmem>>, vector<1x16x1xf32>,
    } else {
    }
    %c0 = arith.constant 0 : index
    %c0_4 = arith.constant 0 : index
    %8 = vector.load %arg2[%c0, %c0_4] : memref<16x32xbf16, #tpu.memory_space<vmem>>, vector<16x32xbf16>
    %c0_5 = arith.constant 0 : index
    %c0_6 = arith.constant 0 : index
    %9 = vector.load %arg3[%c0_5, %c0_6] : memref<32x128xbf16, #tpu.memory_space<vmem>>, vector<32x128xbf16>
    %cst = arith.constant dense<0.000000e+00> : vector<16x128xf32>
    %10 = tpu.matmul %8, %9, %cst {dimension_numbers = #tpu.dot_dimension_numbers<[1], [0], [0], [1], [0, 0, 1, 1], [], []>} : vector<16x32xbf16>, vector<32x128xbf16>, vector<16x128xf32> -> vector<16x128xf32>
    %11 = tpu.iota {dimensions = array<i32: 1>} : vector<16x128xi32>
    %c128_i32 = arith.constant 128 : i32
    %12 = arith.muli %arg0, %c128_i32 : i32
    %13 = vector.broadcast %12 : i32 to vector<16x128xi32>
    %14 = arith.addi %11, %13 : vector<16x128xi32>
    %c0_7 = arith.constant 0 : index
    %c0_8 = arith.constant 0 : index
    %15 = vector.load %arg4[%c0_7, %c0_8] : memref<16x1xi32, #tpu.memory_space<vmem>>, vector<16x1xi32>
    %16 = arith.index_cast %arg1 : i32 to index
    %c0_9 = arith.constant 0 : index
    %c0_10 = arith.constant 0 : index
    %17 = vector.load %arg8[%16, %c0_9, %c0_10] : memref<1x16x1xf32, #tpu.memory_space<vmem>>, vector<1x16x1xf32>
    %18 = vector.shape_cast %17 : vector<1x16x1xf32> to vector<16x1xf32>
    %19 = vector.broadcast %15 : vector<16x1xi32> to vector<16x128xi32>
    %20 = arith.cmpi eq, %14, %19 : vector<16x128xi32>
    %cst_11 = arith.constant 0.000000e+00 : f32
    %21 = vector.broadcast %cst_11 : f32 to vector<16x128xf32>
    %22 = arith.select %20, %10, %21 : vector<16x128xi1>, vector<16x128xf32>
    %cst_12 = arith.constant dense<0.000000e+00> : vector<16xf32>
    %23 = vector.multi_reduction <add>, %22, %cst_12 [1] : vector<16x128xf32> to vector<16xf32>
    %24 = vector.shape_cast %23 : vector<16xf32> to vector<16x1xf32>
    %25 = arith.addf %18, %24 : vector<16x1xf32>
    %26 = arith.index_cast %arg1 : i32 to index
    %c0_13 = arith.constant 0 : index
    %c0_14 = arith.constant 0 : index
    %27 = vector.load %arg8[%26, %c0_13, %c0_14] : memref<1x16x1xf32, #tpu.memory_space<vmem>>, vector<1x16x1xf32>
    %28 = vector.shape_cast %27 : vector<1x16x1xf32> to vector<16x1xf32>
    %29 = vector.shape_cast %25 : vector<16x1xf32> to vector<1x16x1xf32>
    tpu.vector_store %arg8[%26, %c0_13, %c0_14], %29 {strides = array<i32>} : memref<1x16x1xf32, #tpu.memory_space<vmem>>, vector<1x16x1xf32>,
    %30 = arith.index_cast %arg1 : i32 to index
    %c0_15 = arith.constant 0 : index
    %c0_16 = arith.constant 0 : index
    %31 = vector.load %arg6[%30, %c0_15, %c0_16] : memref<1x16x1xf32, #tpu.memory_space<vmem>>, vector<1x16x1xf32>
    %32 = vector.shape_cast %31 : vector<1x16x1xf32> to vector<16x1xf32>
    %cst_17 = arith.constant dense<0xFF800000> : vector<16xf32>
    %33 = vector.multi_reduction <maximumf>, %10, %cst_17 [1] : vector<16x128xf32> to vector<16xf32>
    %34 = vector.shape_cast %33 : vector<16xf32> to vector<16x1xf32>
    %35 = arith.maximumf %32, %34 : vector<16x1xf32>
    %36 = arith.index_cast %arg1 : i32 to index
    %c0_18 = arith.constant 0 : index
    %c0_19 = arith.constant 0 : index
    %37 = vector.load %arg7[%36, %c0_18, %c0_19] : memref<1x16x1xf32, #tpu.memory_space<vmem>>, vector<1x16x1xf32>
    %38 = vector.shape_cast %37 : vector<1x16x1xf32> to vector<16x1xf32>
    %39 = arith.subf %32, %35 : vector<16x1xf32>
    %40 = math.exp %39 : vector<16x1xf32>
    %41 = arith.mulf %38, %40 : vector<16x1xf32>
    %42 = vector.broadcast %35 : vector<16x1xf32> to vector<16x128xf32>
    %43 = arith.subf %10, %42 : vector<16x128xf32>
    %44 = math.exp %43 : vector<16x128xf32>
    %cst_20 = arith.constant dense<0.000000e+00> : vector<16xf32>
    %45 = vector.multi_reduction <add>, %44, %cst_20 [1] : vector<16x128xf32> to vector<16xf32>
    %46 = vector.shape_cast %45 : vector<16xf32> to vector<16x1xf32>
    %47 = arith.addf %41, %46 : vector<16x1xf32>
    %48 = arith.index_cast %arg1 : i32 to index
    %c0_21 = arith.constant 0 : index
    %c0_22 = arith.constant 0 : index
    %49 = vector.load %arg7[%48, %c0_21, %c0_22] : memref<1x16x1xf32, #tpu.memory_space<vmem>>, vector<1x16x1xf32>
    %50 = vector.shape_cast %49 : vector<1x16x1xf32> to vector<16x1xf32>
    %51 = vector.shape_cast %47 : vector<16x1xf32> to vector<1x16x1xf32>
    tpu.vector_store %arg7[%48, %c0_21, %c0_22], %51 {strides = array<i32>} : memref<1x16x1xf32, #tpu.memory_space<vmem>>, vector<1x16x1xf32>,
    %52 = arith.index_cast %arg1 : i32 to index
    %c0_23 = arith.constant 0 : index
    %c0_24 = arith.constant 0 : index
    %53 = vector.load %arg6[%52, %c0_23, %c0_24] : memref<1x16x1xf32, #tpu.memory_space<vmem>>, vector<1x16x1xf32>
    %54 = vector.shape_cast %53 : vector<1x16x1xf32> to vector<16x1xf32>
    %55 = vector.shape_cast %35 : vector<16x1xf32> to vector<1x16x1xf32>
    tpu.vector_store %arg6[%52, %c0_23, %c0_24], %55 {strides = array<i32>} : memref<1x16x1xf32, #tpu.memory_space<vmem>>, vector<1x16x1xf32>,
    %c0_i32_25 = arith.constant 0 : i32
    %56 = arith.cmpi eq, %arg0, %c0_i32_25 : i32
    %57 = arith.extui %56 : i1 to i32
    %c0_i32_26 = arith.constant 0 : i32
    %58 = arith.cmpi ne, %57, %c0_i32_26 : i32
    scf.if %58 {
      %64 = arith.index_cast %arg1 : i32 to index
      %c0_30 = arith.constant 0 : index
      %c0_31 = arith.constant 0 : index
      %65 = vector.load %arg6[%64, %c0_30, %c0_31] : memref<1x16x1xf32, #tpu.memory_space<vmem>>, vector<1x16x1xf32>
      %66 = vector.shape_cast %65 : vector<1x16x1xf32> to vector<16x1xf32>
      %67 = arith.index_cast %arg1 : i32 to index
      %c0_32 = arith.constant 0 : index
      %c0_33 = arith.constant 0 : index
      %68 = vector.load %arg7[%67, %c0_32, %c0_33] : memref<1x16x1xf32, #tpu.memory_space<vmem>>, vector<1x16x1xf32>
      %69 = vector.shape_cast %68 : vector<1x16x1xf32> to vector<16x1xf32>
      %70 = math.log %69 : vector<16x1xf32>
      %71 = arith.addf %66, %70 : vector<16x1xf32>
      %72 = arith.index_cast %arg1 : i32 to index
      %c0_34 = arith.constant 0 : index
      %c0_35 = arith.constant 0 : index
      %73 = vector.load %arg8[%72, %c0_34, %c0_35] : memref<1x16x1xf32, #tpu.memory_space<vmem>>, vector<1x16x1xf32>
      %74 = vector.shape_cast %73 : vector<1x16x1xf32> to vector<16x1xf32>
      %75 = arith.subf %71, %74 : vector<16x1xf32>
      %c-100_i32 = arith.constant -100 : i32
      %76 = vector.broadcast %c-100_i32 : i32 to vector<16x1xi32>
      %77 = arith.cmpi ne, %15, %76 : vector<16x1xi32>
      %78 = arith.extui %77 : vector<16x1xi1> to vector<16x1xi32>
      %79 = arith.sitofp %78 : vector<16x1xi32> to vector<16x1xf32>
      %c0_36 = arith.constant 0 : index
      %c0_37 = arith.constant 0 : index
      %80 = vector.load %arg9[%c0_36, %c0_37] : memref<1x1xf32, #tpu.memory_space<vmem>>, vector<1x1xf32>
      %81 = arith.mulf %75, %79 : vector<16x1xf32>
      %82 = vector.shape_cast %81 : vector<16x1xf32> to vector<1x16x1xf32>
      %cst_38 = arith.constant dense<0.000000e+00> : vector<1xf32>
      %83 = vector.multi_reduction <add>, %82, %cst_38 [1, 2] : vector<1x16x1xf32> to vector<1xf32>
      %84 = vector.shape_cast %83 : vector<1xf32> to vector<1x1x1xf32>
      %85 = vector.extract %84[0, 0, 0] : f32 from vector<1x1x1xf32>
      %86 = vector.broadcast %85 : f32 to vector<1x1xf32>
      %87 = arith.addf %80, %86 : vector<1x1xf32>
      %c0_39 = arith.constant 0 : index
      %c0_40 = arith.constant 0 : index
      %88 = vector.load %arg9[%c0_39, %c0_40] : memref<1x1xf32, #tpu.memory_space<vmem>>, vector<1x1xf32>
      tpu.vector_store %arg9[%c0_39, %c0_40], %87 {strides = array<i32>} : memref<1x1xf32, #tpu.memory_space<vmem>>, vector<1x1xf32>,
      %c0_41 = arith.constant 0 : index
      %c0_42 = arith.constant 0 : index
      %89 = vector.load %arg10[%c0_41, %c0_42] : memref<1x1xf32, #tpu.memory_space<vmem>>, vector<1x1xf32>
      %90 = vector.shape_cast %79 : vector<16x1xf32> to vector<1x16x1xf32>
      %cst_43 = arith.constant dense<0.000000e+00> : vector<1xf32>
      %91 = vector.multi_reduction <add>, %90, %cst_43 [1, 2] : vector<1x16x1xf32> to vector<1xf32>
      %92 = vector.shape_cast %91 : vector<1xf32> to vector<1x1x1xf32>
      %93 = vector.extract %92[0, 0, 0] : f32 from vector<1x1x1xf32>
      %94 = vector.broadcast %93 : f32 to vector<1x1xf32>
      %95 = arith.addf %89, %94 : vector<1x1xf32>
      %c0_44 = arith.constant 0 : index
      %c0_45 = arith.constant 0 : index
      %96 = vector.load %arg10[%c0_44, %c0_45] : memref<1x1xf32, #tpu.memory_space<vmem>>, vector<1x1xf32>
      tpu.vector_store %arg10[%c0_44, %c0_45], %95 {strides = array<i32>} : memref<1x1xf32, #tpu.memory_space<vmem>>, vector<1x1xf32>,
    } else {
    }
    %c0_i32_27 = arith.constant 0 : i32
    %59 = arith.cmpi eq, %arg1, %c0_i32_27 : i32
    %c0_i32_28 = arith.constant 0 : i32
    %60 = arith.cmpi eq, %arg0, %c0_i32_28 : i32
    %61 = arith.andi %59, %60 : i1
    %62 = arith.extui %61 : i1 to i32
    %c0_i32_29 = arith.constant 0 : i32
    %63 = arith.cmpi ne, %62, %c0_i32_29 : i32
    scf.if %63 {
      %c0_30 = arith.constant 0 : index
      %c0_31 = arith.constant 0 : index
      %64 = vector.load %arg9[%c0_30, %c0_31] : memref<1x1xf32, #tpu.memory_space<vmem>>, vector<1x1xf32>
      %c0_32 = arith.constant 0 : index
      %c0_33 = arith.constant 0 : index
      %65 = vector.load %arg10[%c0_32, %c0_33] : memref<1x1xf32, #tpu.memory_space<vmem>>, vector<1x1xf32>
      %cst_34 = arith.constant 1.000000e+00 : f32
      %66 = vector.broadcast %cst_34 : f32 to vector<1x1xf32>
      %67 = arith.maximumf %65, %66 : vector<1x1xf32>
      %68 = arith.divf %64, %67 : vector<1x1xf32>
      %c0_35 = arith.constant 0 : index
      %c0_36 = arith.constant 0 : index
      %69 = vector.load %arg5[%c0_35, %c0_36] : memref<1x1xf32, #tpu.memory_space<vmem>>, vector<1x1xf32>
      tpu.vector_store %arg5[%c0_35, %c0_36], %68 {strides = array<i32>} : memref<1x1xf32, #tpu.memory_space<vmem>>, vector<1x1xf32>,
    } else {
    }
    return
  }
  func.func @transform_0(%arg0: i32, %arg1: i32) -> (i32, i32) {
    %c0_i32 = arith.constant 0 : i32
    %c0_i32_0 = arith.constant 0 : i32
    return %arg1, %c0_i32 : i32, i32
  }
  func.func @transform_1(%arg0: i32, %arg1: i32) -> (i32, i32) {
    %c0_i32 = arith.constant 0 : i32
    %c0_i32_0 = arith.constant 0 : i32
    return %c0_i32, %arg0 : i32, i32
  }
  func.func @transform_2(%arg0: i32, %arg1: i32) -> (i32, i32) {
    %c0_i32 = arith.constant 0 : i32
    %c0_i32_0 = arith.constant 0 : i32
    return %arg1, %c0_i32 : i32, i32
  }
  func.func @transform_3(%arg0: i32, %arg1: i32) -> (i32, i32) {
    %c0_i32 = arith.constant 0 : i32
    %c0_i32_0 = arith.constant 0 : i32
    %c0_i32_1 = arith.constant 0 : i32
    return %c0_i32, %c0_i32_0 : i32, i32
  }
}

</mosaic_0001>

<llo_original>
// kernel: cross_prompt_t5_forward.10
$region0: #{cross_prompt_t5_forward.10}
  #allocation0 [shape = 'u32[]', space=smem, size = 0x4, offset = 0x4, fixed_abs, tag = 'smem constant byte address 0x4 - core index']
  #allocation1 [shape = 'u32[144,128]{1,0:T(1,128)}', space=vmem, size = 0x12000, scoped, tag = 'internal scratch']
  %s0 = inlined_call_operand.vmem [shape: f32[24,32], index: 0, kind: input, shape index: {}]
  %s1 = inlined_call_operand.vmem [shape: f32[1,32], index: 1, kind: input, shape index: {}]
  %s2 = inlined_call_operand.vmem [shape: bf16[32,64], index: 2, kind: input, shape index: {}]
  %s3 = inlined_call_operand.vmem [shape: bf16[64,32], index: 3, kind: input, shape index: {}]
  %s4 = inlined_call_operand.vmem [shape: f32[24,32], index: 4, kind: output, shape index: {}]
  %s5 = sld [smem:[#allocation0]]
  $region49: #{cross_prompt_t5_forward.10} parent=0
    _
  %s7 = ssub.s32 1, %s5
  %s8 = scalar_select 0, %s7, %s5
  loop: start=0, step=1, limit=5
  $region2: #{cross_prompt_t5_forward.10} parent=0 // loop_pre_header
    _
  $region3: #{cross_prompt_t5_forward.10} parent=0 // loop_header
    %s10 = sphi 0, %s14
    %p11 = scmp.ge.s32.totalorder %s10, 5
    %s20 = sphi 0, %s22
    %s23 = sphi 0, %s20
    %s24 = sphi 0, %s23
    %s40 = sphi 0, %s24
    %s44 = sphi 0, %s44
    %s46 = sphi 0, %s44
    %s47 = sphi 0, %s46
    %s61 = sphi 0, %s47
    %s65 = sphi 0, %s65
    %s67 = sphi 0, %s65
    %s68 = sphi 0, %s67
    %s82 = sphi 0, %s68
    %s86 = sphi 0, %s86
    %s88 = sphi 0, %s86
    %s89 = sphi 0, %s88
    %s103 = sphi 0, %s89
    %s109 = sphi 0, %s111
    %s112 = sphi 0, %s109
    %s113 = sphi 0, %s112
    %s129 = sphi 0, %s113
  $region4: #{cross_prompt_t5_forward.10} parent=0 // loop_header_branch
    %13 = sbr.rel (%p11) target = $region8
  $region5: #{cross_prompt_t5_forward.10} parent=0 // loop_body
    %s15 = ssub.s32 %s10, 1
    %s16 = ssub.s32 %s10, 2
    %s17 = sadd.s32 %s10, 1
    %s18 = ssub.s32 %s10, %s17
    %p19 = scmp.eq.s32.totalorder %s18, 0
    %s21 = sadd.s32 %s20, 1
    %s22 = scalar_select %p19, %s20, %s21
    %p25 = pneg %p19
    %p26 = scmp.eq.s32.totalorder %s10, 2
    %p27 = por %p25, %p26
    %p28 = scmp.ne.s32.totalorder %s20, %s23
    %p29 = scmp.eq.s32.totalorder %s10, 0
    %p30 = por %p28, %p29
    %p31 = scmp.ne.s32.totalorder %s20, %s23
    %p32 = scmp.eq.s32.totalorder %s15, 2
    %p33 = por %p31, %p32
    %p34 = scmp.ne.s32.totalorder %s23, %s24
    %p35 = scmp.eq.s32.totalorder %s15, 0
    %p36 = por %p34, %p35
    %p37 = scmp.ne.s32.totalorder %s23, %s24
    %p38 = scmp.eq.s32.totalorder %s16, 2
    %p39 = por %p37, %p38
    %p41 = scmp.ne.s32.totalorder %s24, %s40
    %p42 = scmp.eq.s32.totalorder %s16, 0
    %p43 = por %p41, %p42
    %s45 = sadd.s32 %s44, 1
    %p48 = scmp.eq.s32.totalorder %s10, 2
    %p49 = scmp.ne.s32.totalorder %s44, %s46
    %p50 = scmp.eq.s32.totalorder %s10, 0
    %p51 = por %p49, %p50
    %p52 = scmp.ne.s32.totalorder %s44, %s46
    %p53 = scmp.eq.s32.totalorder %s15, 2
    %p54 = por %p52, %p53
    %p55 = scmp.ne.s32.totalorder %s46, %s47
    %p56 = scmp.eq.s32.totalorder %s15, 0
    %p57 = por %p55, %p56
    %p58 = scmp.ne.s32.totalorder %s46, %s47
    %p59 = scmp.eq.s32.totalorder %s16, 2
    %p60 = por %p58, %p59
    %p62 = scmp.ne.s32.totalorder %s47, %s61
    %p63 = scmp.eq.s32.totalorder %s16, 0
    %p64 = por %p62, %p63
    %s66 = sadd.s32 %s65, 1
    %p69 = scmp.eq.s32.totalorder %s10, 2
    %p70 = scmp.ne.s32.totalorder %s65, %s67
    %p71 = scmp.eq.s32.totalorder %s10, 0
    %p72 = por %p70, %p71
    %p73 = scmp.ne.s32.totalorder %s65, %s67
    %p74 = scmp.eq.s32.totalorder %s15, 2
    %p75 = por %p73, %p74
    %p76 = scmp.ne.s32.totalorder %s67, %s68
    %p77 = scmp.eq.s32.totalorder %s15, 0
    %p78 = por %p76, %p77
    %p79 = scmp.ne.s32.totalorder %s67, %s68
    %p80 = scmp.eq.s32.totalorder %s16, 2
    %p81 = por %p79, %p80
    %p83 = scmp.ne.s32.totalorder %s68, %s82
    %p84 = scmp.eq.s32.totalorder %s16, 0
    %p85 = por %p83, %p84
    %s87 = sadd.s32 %s86, 1
    %p90 = scmp.eq.s32.totalorder %s10, 2
    %p91 = scmp.ne.s32.totalorder %s86, %s88
    %p92 = scmp.eq.s32.totalorder %s10, 0
    %p93 = por %p91, %p92
    %p94 = scmp.ne.s32.totalorder %s86, %s88
    %p95 = scmp.eq.s32.totalorder %s15, 2
    %p96 = por %p94, %p95
    %p97 = scmp.ne.s32.totalorder %s88, %s89
    %p98 = scmp.eq.s32.totalorder %s15, 0
    %p99 = por %p97, %p98
    %p100 = scmp.ne.s32.totalorder %s88, %s89
    %p101 = scmp.eq.s32.totalorder %s16, 2
    %p102 = por %p100, %p101
    %p104 = scmp.ne.s32.totalorder %s89, %s103
    %p105 = scmp.eq.s32.totalorder %s16, 0
    %p106 = por %p104, %p105
    %s107 = ssub.s32 %s10, %s17
    %p108 = scmp.eq.s32.totalorder %s107, 0
    %s110 = sadd.s32 %s109, 1
    %s111 = scalar_select %p108, %s109, %s110
    %p114 = pneg %p108
    %p115 = scmp.eq.s32.totalorder %s10, 2
    %p116 = por %p114, %p115
    %p117 = scmp.ne.s32.totalorder %s109, %s112
    %p118 = scmp.eq.s32.totalorder %s10, 0
    %p119 = por %p117, %p118
    %p120 = scmp.ne.s32.totalorder %s109, %s112
    %p121 = scmp.eq.s32.totalorder %s15, 2
    %p122 = por %p120, %p121
    %p123 = scmp.ne.s32.totalorder %s112, %s113
    %p124 = scmp.eq.s32.totalorder %s15, 0
    %p125 = por %p123, %p124
    %p126 = scmp.ne.s32.totalorder %s112, %s113
    %p127 = scmp.eq.s32.totalorder %s16, 2
    %p128 = por %p126, %p127
    %p130 = scmp.ne.s32.totalorder %s113, %s129
    %p131 = scmp.eq.s32.totalorder %s16, 0
    %p132 = por %p130, %p131
    %p133 = scmp.le.s32.totalorder 1, %s10
    %p134 = scmp.lt.s32.totalorder %s10, 4
    %p135 = pnand %p133, %p134
    %p136 = pneg %p135
    // Predicated region
    $region9: #{cross_prompt_t5_forward.10} parent=5 // pred_check
      _
    $region10: #{cross_prompt_t5_forward.10} parent=5 // pred_check_branch
      %138 = sbr.rel (%p135) target = $region12
    $region11: #{cross_prompt_t5_forward.10} parent=5 // pred_region
      %s139 = ssub.s32 %s10, 1
      // Predicated region
      $region13: #{cross_prompt_t5_forward.10} parent=11 // pred_check
        %p140 = pneg %p57
      $region14: #{cross_prompt_t5_forward.10} parent=11 // pred_check_branch
        %142 = sbr.rel (%p140) target = $region16
      $region15: #{cross_prompt_t5_forward.10} parent=11 // pred_region
        _
      $region16: #{cross_prompt_t5_forward.10} parent=11 // pred_fallthru
        _
      // Predicated region
      $region17: #{cross_prompt_t5_forward.10} parent=11 // pred_check
        %p143 = pneg %p78
      $region18: #{cross_prompt_t5_forward.10} parent=11 // pred_check_branch
        %145 = sbr.rel (%p143) target = $region20
      $region19: #{cross_prompt_t5_forward.10} parent=11 // pred_region
        _
      $region20: #{cross_prompt_t5_forward.10} parent=11 // pred_fallthru
        _
      // Predicated region
      $region21: #{cross_prompt_t5_forward.10} parent=11 // pred_check
        %p146 = pneg %p99
      $region22: #{cross_prompt_t5_forward.10} parent=11 // pred_check_branch
        %148 = sbr.rel (%p146) target = $region24
      $region23: #{cross_prompt_t5_forward.10} parent=11 // pred_region
        _
      $region24: #{cross_prompt_t5_forward.10} parent=11 // pred_fallthru
        _
    $region12: #{cross_prompt_t5_forward.10} parent=5 // pred_fallthru
      _
    %p149 = scmp.lt.s32.totalorder %s10, 3
    // Predicated region
    $region25: #{cross_prompt_t5_forward.10} parent=5 // pred_check
      %p150 = pneg %p149
    $region26: #{cross_prompt_t5_forward.10} parent=5 // pred_check_branch
      %152 = sbr.rel (%p150) target = $region28
    $region27: #{cross_prompt_t5_forward.10} parent=5 // pred_region
      // Predicated region
      $region29: #{cross_prompt_t5_forward.10} parent=27 // pred_check
        %p153 = pneg %p30
      $region30: #{cross_prompt_t5_forward.10} parent=27 // pred_check_branch
        %155 = sbr.rel (%p153) target = $region32
      $region31: #{cross_prompt_t5_forward.10} parent=27 // pred_region
        %p156 = scmp.lt.s32.totalorder %s10, 2
        %s157 = scalar_select %p156, %s10, 2
        %s158 = smul.addr %s157, 8
        %s159 = scalar_lea.vmem %s0, %s158
      $region32: #{cross_prompt_t5_forward.10} parent=27 // pred_fallthru
        _
    $region28: #{cross_prompt_t5_forward.10} parent=5 // pred_fallthru
      _
    %p160 = scmp.le.s32.totalorder 1, %s10
    %p161 = scmp.lt.s32.totalorder %s10, 4
    %p162 = pnand %p160, %p161
    %p163 = pneg %p162
    // Predicated region
    $region33: #{cross_prompt_t5_forward.10} parent=5 // pred_check
      _
    $region34: #{cross_prompt_t5_forward.10} parent=5 // pred_check_branch
      %165 = sbr.rel (%p162) target = $region36
    $region35: #{cross_prompt_t5_forward.10} parent=5 // pred_region
      %s166 = ssub.s32 %s10, 1
      %p167 = scmp.lt.s32.totalorder %s15, 2
      %s168 = scalar_select %p167, %s15, 2
      %s169 = smul.addr %s168, 8
      %s170 = scalar_lea.vmem %s0, %s169
      %p171 = pneg %p36
      %p172 = pneg %p33
      %p173 = pneg %p57
      %p174 = pneg %p54
      %p175 = pneg %p78
      %p176 = pneg %p75
      %p177 = pneg %p99
      %p178 = pneg %p96
      %p179 = pneg %p125
      %p180 = pneg %p122
      %p181 = scmp.lt.s32.totalorder %s15, 2
      %s182 = scalar_select %p181, %s15, 2
      %s183 = smul.addr %s182, 8
      %s184 = scalar_lea.vmem %s4, %s183
      %p185 = scmp.lt.s32.totalorder %s15, 2
      %s186 = scalar_select %p185, %s15, 2
      %s187 = smul.addr %s186, 8
      %s188 = scalar_lea.vmem %s0, %s187
      %p189 = scmp.lt.s32.totalorder %s15, 2
      %s190 = scalar_select %p189, %s15, 2
      %s191 = smul.addr %s190, 8
      %s192 = scalar_lea.vmem %s4, %s191
      %v194 = vld [vmem:[%s188] sm:$0xff]
      %v195 = vld [vmem:[%s1] sm:$0x1]
      %v196 = vmul.f32 %v194, %v194
      %vm197 = vcmask 261120
      %v198 = vsel %vm197, %v196, 0.0
      %199 = vadd.xlane.f32.xlu0 %v198
      %v200 = vpop.xlane.xlu0 %199
      %v201 = vrcp.pop 32.0
      %v202 = vmul.f32 %v200, %v201
      %v203 = vadd.f32 %v202, 1e-06
      %v204 = vrsqrt.pop %v203
      %v205 = vmul.f32 %v194, %v204
      %v207 = vlaneseq
      %v208 = vshrl.u32 %v207, 7
      %v209 = vsub.s32 0, %v208
      %v210 = vrot.slane %v195, %v209
      %v212 = vmul.f32 %v205, %v210
      %v213 = vpack.c.bf16 %v212, %v212
      %v214 = vld [vmem:[%s2] sm:$0xf]
      %v215 = vld [vmem:[%s2 + $0x4] sm:$0xf]
      %v216 = vld [vmem:[%s2 + $0x8] sm:$0xf]
      %v217 = vld [vmem:[%s2 + $0xc] sm:$0xf]
      %v222 = vunpack.c.l.b16 %v214
      %v223 = vunpack.c.l.b16 %v215
      %v224 = vunpack.c.l.b16 %v216
      %v225 = vunpack.c.l.b16 %v217
      %v226 = vpack.c.b16 %v223, %v222
      %v227 = vpack.c.b16 %v225, %v224
      %v231 = vsel %vm197, %v213, 0
      %233 = vmatprep.subr.bf16.mxu0 0
      %234 = vmatpush1.bf16.msra.mxu0 %v226
      %235 = vmatprep.subr.bf16.mxu0 0
      %236 = vmatpush1.bf16.msra.mxu0 %v227
      %237 = vmatprep.subr.bf16.mxu0 0
      %238 = vmatpush1.bf16.msra.mxu0 0
      %239 = vmatprep.subr.bf16.mxu0 0
      %240 = vmatpush1.bf16.msra.mxu0 0
      %241 = vmatprep.subr.bf16.mxu0 0
      %242 = vmatpush1.bf16.msra.mxu0 0
      %243 = vmatprep.subr.bf16.mxu0 0
      %244 = vmatpush1.bf16.msra.mxu0 0
      %245 = vmatprep.subr.bf16.mxu0 0
      %246 = vmatpush1.bf16.msra.mxu0 0
      %247 = vmatprep.subr.bf16.mxu0 0
      %248 = vmatpush1.bf16.msra.mxu0 0
      %249 = vmatprep.subr.bf16.mxu0 0
      %250 = vmatpush1.bf16.msra.mxu0 0
      %251 = vmatprep.subr.bf16.mxu0 0
      %252 = vmatpush1.bf16.msra.mxu0 0
      %253 = vmatprep.subr.bf16.mxu0 0
      %254 = vmatpush1.bf16.msra.mxu0 0
      %255 = vmatprep.subr.bf16.mxu0 0
      %256 = vmatpush1.bf16.msra.mxu0 0
      %257 = vmatprep.subr.bf16.mxu0 0
      %258 = vmatpush1.bf16.msra.mxu0 0
      %259 = vmatprep.subr.bf16.mxu0 0
      %260 = vmatpush1.bf16.msra.mxu0 0
      %261 = vmatprep.subr.bf16.mxu0 0
      %262 = vmatpush1.bf16.msra.mxu0 0
      %263 = vmatprep.subr.bf16.mxu0 0
      %264 = vmatpush1.bf16.msra.mxu0 0
      %265 = vmatprep.mubr.bf16.mxu0 0
      %266 = vmatmul.mubr.bf16.gmra.mrb[0].mxu0 %v231
      %v267 = vpop.f32.mrb[0].mxu0
      %v268 = vadd.f32 0.0, %v267
      %v269 = vpop.f32.mrb[0].mxu0
      %v270 = vpop.f32.mrb[0].mxu0
      %v271 = vpop.f32.mrb[0].mxu0
      %272 = vdwg.mxu0
      %v273 = vmax.f32 %v268, 0.0
      %v274 = vpack.c.bf16 %v273, %v273
      %v275 = vld [vmem:[%s3] sm:$0xf]
      %v276 = vld [vmem:[%s3 + $0x4] sm:$0xf]
      %v277 = vld [vmem:[%s3 + $0x8] sm:$0xf]
      %v278 = vld [vmem:[%s3 + $0xc] sm:$0xf]
      %v279 = vld [vmem:[%s3 + $0x10] sm:$0xf]
      %v280 = vld [vmem:[%s3 + $0x14] sm:$0xf]
      %v281 = vld [vmem:[%s3 + $0x18] sm:$0xf]
      %v282 = vld [vmem:[%s3 + $0x1c] sm:$0xf]
      %v291 = vunpack.c.l.b16 %v275
      %v292 = vunpack.c.l.b16 %v276
      %v293 = vunpack.c.l.b16 %v277
      %v294 = vunpack.c.l.b16 %v278
      %v295 = vunpack.c.l.b16 %v279
      %v296 = vunpack.c.l.b16 %v280
      %v297 = vunpack.c.l.b16 %v281
      %v298 = vunpack.c.l.b16 %v282
      %v299 = vpack.c.b16 %v292, %v291
      %v300 = vpack.c.b16 %v294, %v293
      %v301 = vpack.c.b16 %v296, %v295
      %v302 = vpack.c.b16 %v298, %v297
      %vm307 = vcmask 523264
      %v309 = vsel %vm307, %v274, 0
      %311 = vmatprep.subr.bf16.mxu0 0
      %312 = vmatpush1.bf16.msra.mxu0 %v299
      %313 = vmatprep.subr.bf16.mxu0 0
      %314 = vmatpush1.bf16.msra.mxu0 %v300
      %315 = vmatprep.subr.bf16.mxu0 0
      %316 = vmatpush1.bf16.msra.mxu0 %v301
      %317 = vmatprep.subr.bf16.mxu0 0
      %318 = vmatpush1.bf16.msra.mxu0 %v302
      %319 = vmatprep.subr.bf16.mxu0 0
      %320 = vmatpush1.bf16.msra.mxu0 0
      %321 = vmatprep.subr.bf16.mxu0 0
      %322 = vmatpush1.bf16.msra.mxu0 0
      %323 = vmatprep.subr.bf16.mxu0 0
      %324 = vmatpush1.bf16.msra.mxu0 0
      %325 = vmatprep.subr.bf16.mxu0 0
      %326 = vmatpush1.bf16.msra.mxu0 0
      %327 = vmatprep.subr.bf16.mxu0 0
      %328 = vmatpush1.bf16.msra.mxu0 0
      %329 = vmatprep.subr.bf16.mxu0 0
      %330 = vmatpush1.bf16.msra.mxu0 0
      %331 = vmatprep.subr.bf16.mxu0 0
      %332 = vmatpush1.bf16.msra.mxu0 0
      %333 = vmatprep.subr.bf16.mxu0 0
      %334 = vmatpush1.bf16.msra.mxu0 0
      %335 = vmatprep.subr.bf16.mxu0 0
      %336 = vmatpush1.bf16.msra.mxu0 0
      %337 = vmatprep.subr.bf16.mxu0 0
      %338 = vmatpush1.bf16.msra.mxu0 0
      %339 = vmatprep.subr.bf16.mxu0 0
      %340 = vmatpush1.bf16.msra.mxu0 0
      %341 = vmatprep.subr.bf16.mxu0 0
      %342 = vmatpush1.bf16.msra.mxu0 0
      %343 = vmatprep.mubr.bf16.mxu0 0
      %344 = vmatmul.mubr.bf16.gmra.mrb[0].mxu0 %v309
      %v345 = vpop.f32.mrb[0].mxu0
      %v346 = vadd.f32 0.0, %v345
      %v347 = vpop.f32.mrb[0].mxu0
      %v348 = vpop.f32.mrb[0].mxu0
      %v349 = vpop.f32.mrb[0].mxu0
      %350 = vdwg.mxu0
      %v351 = vadd.f32 %v194, %v346
      %352 = vst.msk [vmem:[%s192] sm:$0xff] %vm197, %v351
      %p353 = scmp.lt.s32.totalorder %s15, 2
      %s354 = scalar_select %p353, %s15, 2
      %s355 = smul.addr %s354, 8
      %s356 = scalar_lea.vmem %s4, %s355
      // Predicated region
      $region37: #{cross_prompt_t5_forward.10} parent=35 // pred_check
        %p357 = pneg %p122
      $region38: #{cross_prompt_t5_forward.10} parent=35 // pred_check_branch
        %359 = sbr.rel (%p357) target = $region40
      $region39: #{cross_prompt_t5_forward.10} parent=35 // pred_region
        _
      $region40: #{cross_prompt_t5_forward.10} parent=35 // pred_fallthru
        _
    $region36: #{cross_prompt_t5_forward.10} parent=5 // pred_fallthru
      _
    %p360 = scmp.le.s32.totalorder 2, %s10
    // Predicated region
    $region41: #{cross_prompt_t5_forward.10} parent=5 // pred_check
      %p361 = pneg %p360
    $region42: #{cross_prompt_t5_forward.10} parent=5 // pred_check_branch
      %363 = sbr.rel (%p361) target = $region44
    $region43: #{cross_prompt_t5_forward.10} parent=5 // pred_region
      %s364 = ssub.s32 %s10, 2
      // Predicated region
      $region45: #{cross_prompt_t5_forward.10} parent=43 // pred_check
        %p365 = pneg %p128
      $region46: #{cross_prompt_t5_forward.10} parent=43 // pred_check_branch
        %367 = sbr.rel (%p365) target = $region48
      $region47: #{cross_prompt_t5_forward.10} parent=43 // pred_region
        %p368 = scmp.lt.s32.totalorder %s16, 2
        %s369 = scalar_select %p368, %s16, 2
        %s370 = smul.addr %s369, 8
        %s371 = scalar_lea.vmem %s4, %s370
      $region48: #{cross_prompt_t5_forward.10} parent=43 // pred_fallthru
        _
    $region44: #{cross_prompt_t5_forward.10} parent=5 // pred_fallthru
      _
  $region6: #{cross_prompt_t5_forward.10} parent=0 // loop_footer
    %s14 = sadd.s32 1, %s10
  $region7: #{cross_prompt_t5_forward.10} parent=0 // loop_footer_branch
    %9 = sbr.rel target = $region3
  $region8: #{cross_prompt_t5_forward.10} parent=0 // loop_exit
    _

// kernel: cross_prompt_t5_forward.8
$region0: #{cross_prompt_t5_forward.8}
  #allocation0 [shape = 'u32[]', space=smem, size = 0x4, offset = 0x4, fixed_abs, tag = 'smem constant byte address 0x4 - core index']
  #allocation1 [shape = 'u32[144,128]{1,0:T(1,128)}', space=vmem, size = 0x12000, scoped, tag = 'internal scratch']
  %s0 = inlined_call_operand.vmem [shape: f32[1,128], index: 0, kind: input, shape index: {}]
  %s1 = inlined_call_operand.vmem [shape: f32[128,16], index: 1, kind: input, shape index: {}]
  %s2 = inlined_call_operand.vmem [shape: f32[1,16], index: 2, kind: input, shape index: {}]
  %s3 = inlined_call_operand.vmem [shape: f32[16,128], index: 3, kind: input, shape index: {}]
  %s4 = inlined_call_operand.vmem [shape: f32[1,128], index: 4, kind: input, shape index: {}]
  %s5 = inlined_call_operand.vmem [shape: f32[1,128], index: 5, kind: output, shape index: {}]
  %s6 = sld [smem:[#allocation0]]
  $region30: #{cross_prompt_t5_forward.8} parent=0
    _
  %s8 = ssub.s32 1, %s6
  %s9 = scalar_select 0, %s8, %s6
  // Predicated region
  $region2: #{cross_prompt_t5_forward.8} parent=0 // pred_check
    _
  $region3: #{cross_prompt_t5_forward.8} parent=0 // pred_check_branch
    %11 = sbr.rel (0) target = $region5
  $region4: #{cross_prompt_t5_forward.8} parent=0 // pred_region
    _
  $region5: #{cross_prompt_t5_forward.8} parent=0 // pred_fallthru
    _
  // Predicated region
  $region6: #{cross_prompt_t5_forward.8} parent=0 // pred_check
    _
  $region7: #{cross_prompt_t5_forward.8} parent=0 // pred_check_branch
    %13 = sbr.rel (0) target = $region9
  $region8: #{cross_prompt_t5_forward.8} parent=0 // pred_region
    _
  $region9: #{cross_prompt_t5_forward.8} parent=0 // pred_fallthru
    _
  // Predicated region
  $region10: #{cross_prompt_t5_forward.8} parent=0 // pred_check
    _
  $region11: #{cross_prompt_t5_forward.8} parent=0 // pred_check_branch
    %15 = sbr.rel (0) target = $region13
  $region12: #{cross_prompt_t5_forward.8} parent=0 // pred_region
    _
  $region13: #{cross_prompt_t5_forward.8} parent=0 // pred_fallthru
    _
  // Predicated region
  $region14: #{cross_prompt_t5_forward.8} parent=0 // pred_check
    _
  $region15: #{cross_prompt_t5_forward.8} parent=0 // pred_check_branch
    %17 = sbr.rel (0) target = $region17
  $region16: #{cross_prompt_t5_forward.8} parent=0 // pred_region
    _
  $region17: #{cross_prompt_t5_forward.8} parent=0 // pred_fallthru
    _
  // Predicated region
  $region18: #{cross_prompt_t5_forward.8} parent=0 // pred_check
    _
  $region19: #{cross_prompt_t5_forward.8} parent=0 // pred_check_branch
    %19 = sbr.rel (0) target = $region21
  $region20: #{cross_prompt_t5_forward.8} parent=0 // pred_region
    _
  $region21: #{cross_prompt_t5_forward.8} parent=0 // pred_fallthru
    _
  %v20 = vld [vmem:[%s0] sm:$0x1]
  %v21 = vld [vmem:[%s1] sm:$0xff]
  %v22 = vld [vmem:[%s1 + $0x8] sm:$0xff]
  %v23 = vld [vmem:[%s1 + $0x10] sm:$0xff]
  %v24 = vld [vmem:[%s1 + $0x18] sm:$0xff]
  %v25 = vld [vmem:[%s1 + $0x20] sm:$0xff]
  %v26 = vld [vmem:[%s1 + $0x28] sm:$0xff]
  %v27 = vld [vmem:[%s1 + $0x30] sm:$0xff]
  %v28 = vld [vmem:[%s1 + $0x38] sm:$0xff]
  %v29 = vld [vmem:[%s1 + $0x40] sm:$0xff]
  %v30 = vld [vmem:[%s1 + $0x48] sm:$0xff]
  %v31 = vld [vmem:[%s1 + $0x50] sm:$0xff]
  %v32 = vld [vmem:[%s1 + $0x58] sm:$0xff]
  %v33 = vld [vmem:[%s1 + $0x60] sm:$0xff]
  %v34 = vld [vmem:[%s1 + $0x68] sm:$0xff]
  %v35 = vld [vmem:[%s1 + $0x70] sm:$0xff]
  %v36 = vld [vmem:[%s1 + $0x78] sm:$0xff]
  %v37 = vld [vmem:[%s2] sm:$0x1]
  %38 = vmatprep.subr.mxu0 0.0
  %39 = vmatpush1.msra.mxu0 %v21
  %40 = vmatprep.subr.mxu0 0.0
  %41 = vmatpush1.msra.mxu0 %v22
  %42 = vmatprep.subr.mxu0 0.0
  %43 = vmatpush1.msra.mxu0 %v23
  %44 = vmatprep.subr.mxu0 0.0
  %45 = vmatpush1.msra.mxu0 %v24
  %46 = vmatprep.subr.mxu0 0.0
  %47 = vmatpush1.msra.mxu0 %v25
  %48 = vmatprep.subr.mxu0 0.0
  %49 = vmatpush1.msra.mxu0 %v26
  %50 = vmatprep.subr.mxu0 0.0
  %51 = vmatpush1.msra.mxu0 %v27
  %52 = vmatprep.subr.mxu0 0.0
  %53 = vmatpush1.msra.mxu0 %v28
  %54 = vmatprep.subr.mxu0 0.0
  %55 = vmatpush1.msra.mxu0 %v29
  %56 = vmatprep.subr.mxu0 0.0
  %57 = vmatpush1.msra.mxu0 %v30
  %58 = vmatprep.subr.mxu0 0.0
  %59 = vmatpush1.msra.mxu0 %v31
  %60 = vmatprep.subr.mxu0 0.0
  %61 = vmatpush1.msra.mxu0 %v32
  %62 = vmatprep.subr.mxu0 0.0
  %63 = vmatpush1.msra.mxu0 %v33
  %64 = vmatprep.subr.mxu0 0.0
  %65 = vmatpush1.msra.mxu0 %v34
  %66 = vmatprep.subr.mxu0 0.0
  %67 = vmatpush1.msra.mxu0 %v35
  %68 = vmatprep.subr.mxu0 0.0
  %69 = vmatpush1.msra.mxu0 %v36
  %70 = vmatprep.subr.mxu0 0.0
  %71 = vmatpush1.msra.mxu0 0.0
  %72 = vmatprep.subr.mxu0 0.0
  %73 = vmatpush1.msra.mxu0 0.0
  %74 = vmatprep.subr.mxu0 0.0
  %75 = vmatpush1.msra.mxu0 0.0
  %76 = vmatprep.subr.mxu0 0.0
  %77 = vmatpush1.msra.mxu0 0.0
  %78 = vmatprep.subr.mxu0 0.0
  %79 = vmatpush1.msra.mxu0 0.0
  %80 = vmatprep.subr.mxu0 0.0
  %81 = vmatpush1.msra.mxu0 0.0
  %82 = vmatprep.subr.mxu0 0.0
  %83 = vmatpush1.msra.mxu0 0.0
  %84 = vmatprep.subr.mxu0 0.0
  %85 = vmatpush1.msra.mxu0 0.0
  %86 = vmatprep.subr.mxu0 0.0
  %87 = vmatpush1.msra.mxu0 0.0
  %88 = vmatprep.subr.mxu0 0.0
  %89 = vmatpush1.msra.mxu0 0.0
  %90 = vmatprep.subr.mxu0 0.0
  %91 = vmatpush1.msra.mxu0 0.0
  %92 = vmatprep.subr.mxu0 0.0
  %93 = vmatpush1.msra.mxu0 0.0
  %94 = vmatprep.subr.mxu0 0.0
  %95 = vmatpush1.msra.mxu0 0.0
  %96 = vmatprep.subr.mxu0 0.0
  %97 = vmatpush1.msra.mxu0 0.0
  %98 = vmatprep.subr.mxu0 0.0
  %99 = vmatpush1.msra.mxu0 0.0
  %100 = vmatprep.subr.mxu0 0.0
  %101 = vmatpush1.msra.mxu0 0.0
  %102 = vmatprep.mubr.f32.mxu0 0.0
  %103 = vmatmul.mubr.f32.gmra.mrb[0].mxu0 %v20
  %v104 = vpop.f32.mrb[0].mxu0
  %v105 = vadd.f32 %v37, %v104
  %v106 = vpop.f32.mrb[0].mxu0
  %107 = vdwg.mxu0
  %v108 = vmax.f32 %v105, 0.0
  %v109 = vld [vmem:[%s3] sm:$0xff]
  %v110 = vld [vmem:[%s3 + $0x8] sm:$0xff]
  %v111 = vld [vmem:[%s4] sm:$0x1]
  %vm112 = vcmask 130048
  %v114 = vsel %vm112, %v108, 0
  %116 = vmatprep.subr.mxu0 0.0
  %117 = vmatpush1.msra.mxu0 %v109
  %118 = vmatprep.subr.mxu0 0.0
  %119 = vmatpush1.msra.mxu0 %v110
  %120 = vmatprep.subr.mxu0 0.0
  %121 = vmatpush1.msra.mxu0 0.0
  %122 = vmatprep.subr.mxu0 0.0
  %123 = vmatpush1.msra.mxu0 0.0
  %124 = vmatprep.subr.mxu0 0.0
  %125 = vmatpush1.msra.mxu0 0.0
  %126 = vmatprep.subr.mxu0 0.0
  %127 = vmatpush1.msra.mxu0 0.0
  %128 = vmatprep.subr.mxu0 0.0
  %129 = vmatpush1.msra.mxu0 0.0
  %130 = vmatprep.subr.mxu0 0.0
  %131 = vmatpush1.msra.mxu0 0.0
  %132 = vmatprep.subr.mxu0 0.0
  %133 = vmatpush1.msra.mxu0 0.0
  %134 = vmatprep.subr.mxu0 0.0
  %135 = vmatpush1.msra.mxu0 0.0
  %136 = vmatprep.subr.mxu0 0.0
  %137 = vmatpush1.msra.mxu0 0.0
  %138 = vmatprep.subr.mxu0 0.0
  %139 = vmatpush1.msra.mxu0 0.0
  %140 = vmatprep.subr.mxu0 0.0
  %141 = vmatpush1.msra.mxu0 0.0
  %142 = vmatprep.subr.mxu0 0.0
  %143 = vmatpush1.msra.mxu0 0.0
  %144 = vmatprep.subr.mxu0 0.0
  %145 = vmatpush1.msra.mxu0 0.0
  %146 = vmatprep.subr.mxu0 0.0
  %147 = vmatpush1.msra.mxu0 0.0
  %148 = vmatprep.subr.mxu0 0.0
  %149 = vmatpush1.msra.mxu0 0.0
  %150 = vmatprep.subr.mxu0 0.0
  %151 = vmatpush1.msra.mxu0 0.0
  %152 = vmatprep.subr.mxu0 0.0
  %153 = vmatpush1.msra.mxu0 0.0
  %154 = vmatprep.subr.mxu0 0.0
  %155 = vmatpush1.msra.mxu0 0.0
  %156 = vmatprep.subr.mxu0 0.0
  %157 = vmatpush1.msra.mxu0 0.0
  %158 = vmatprep.subr.mxu0 0.0
  %159 = vmatpush1.msra.mxu0 0.0
  %160 = vmatprep.subr.mxu0 0.0
  %161 = vmatpush1.msra.mxu0 0.0
  %162 = vmatprep.subr.mxu0 0.0
  %163 = vmatpush1.msra.mxu0 0.0
  %164 = vmatprep.subr.mxu0 0.0
  %165 = vmatpush1.msra.mxu0 0.0
  %166 = vmatprep.subr.mxu0 0.0
  %167 = vmatpush1.msra.mxu0 0.0
  %168 = vmatprep.subr.mxu0 0.0
  %169 = vmatpush1.msra.mxu0 0.0
  %170 = vmatprep.subr.mxu0 0.0
  %171 = vmatpush1.msra.mxu0 0.0
  %172 = vmatprep.subr.mxu0 0.0
  %173 = vmatpush1.msra.mxu0 0.0
  %174 = vmatprep.subr.mxu0 0.0
  %175 = vmatpush1.msra.mxu0 0.0
  %176 = vmatprep.subr.mxu0 0.0
  %177 = vmatpush1.msra.mxu0 0.0
  %178 = vmatprep.subr.mxu0 0.0
  %179 = vmatpush1.msra.mxu0 0.0
  %180 = vmatprep.mubr.f32.mxu0 0.0
  %181 = vmatmul.mubr.f32.gmra.mrb[0].mxu0 %v114
  %v182 = vpop.f32.mrb[0].mxu0
  %v183 = vadd.f32 %v111, %v182
  %v184 = vpop.f32.mrb[0].mxu0
  %185 = vdwg.mxu0
  %186 = vst [vmem:[%s5] sm:$0x1] %v183
  // Predicated region
  $region22: #{cross_prompt_t5_forward.8} parent=0 // pred_check
    _
  $region23: #{cross_prompt_t5_forward.8} parent=0 // pred_check_branch
    %188 = sbr.rel (0) target = $region25
  $region24: #{cross_prompt_t5_forward.8} parent=0 // pred_region
    _
  $region25: #{cross_prompt_t5_forward.8} parent=0 // pred_fallthru
    _
  // Predicated region
  $region26: #{cross_prompt_t5_forward.8} parent=0 // pred_check
    _
  $region27: #{cross_prompt_t5_forward.8} parent=0 // pred_check_branch
    %190 = sbr.rel (0) target = $region29
  $region28: #{cross_prompt_t5_forward.8} parent=0 // pred_region
    _
  $region29: #{cross_prompt_t5_forward.8} parent=0 // pred_fallthru
    _

// kernel: cross_prompt_t5_forward.9
$region0: #{cross_prompt_t5_forward.9}
  #allocation0 [shape = 'u32[]', space=smem, size = 0x4, offset = 0x4, fixed_abs, tag = 'smem constant byte address 0x4 - core index']
  #allocation1 [shape = 'u32[144,128]{1,0:T(1,128)}', space=vmem, size = 0x12000, scoped, tag = 'internal scratch']
  %s0 = inlined_call_operand.vmem [shape: f32[2,12,32], index: 0, kind: input, shape index: {}]
  %s1 = inlined_call_operand.vmem [shape: f32[1,32], index: 1, kind: input, shape index: {}]
  %s2 = inlined_call_operand.vmem [shape: bf16[32,96], index: 2, kind: input, shape index: {}]
  %s3 = inlined_call_operand.vmem [shape: bf16[32,32], index: 3, kind: input, shape index: {}]
  %s4 = inlined_call_operand.vmem [shape: f32[2,12,32], index: 4, kind: output, shape index: {}]
  %s5 = sld [smem:[#allocation0]]
  $region49: #{cross_prompt_t5_forward.9} parent=0
    _
  %s7 = ssub.s32 1, %s5
  %s8 = scalar_select 0, %s7, %s5
  loop: start=0, step=1, limit=4
  $region2: #{cross_prompt_t5_forward.9} parent=0 // loop_pre_header
    _
  $region3: #{cross_prompt_t5_forward.9} parent=0 // loop_header
    %s10 = sphi 0, %s14
    %p11 = scmp.ge.s32.totalorder %s10, 4
    %s20 = sphi 0, %s22
    %s23 = sphi 0, %s20
    %s24 = sphi 0, %s23
    %s40 = sphi 0, %s24
    %s44 = sphi 0, %s44
    %s46 = sphi 0, %s44
    %s47 = sphi 0, %s46
    %s61 = sphi 0, %s47
    %s65 = sphi 0, %s65
    %s67 = sphi 0, %s65
    %s68 = sphi 0, %s67
    %s82 = sphi 0, %s68
    %s86 = sphi 0, %s86
    %s88 = sphi 0, %s86
    %s89 = sphi 0, %s88
    %s103 = sphi 0, %s89
    %s109 = sphi 0, %s111
    %s112 = sphi 0, %s109
    %s113 = sphi 0, %s112
    %s129 = sphi 0, %s113
  $region4: #{cross_prompt_t5_forward.9} parent=0 // loop_header_branch
    %13 = sbr.rel (%p11) target = $region8
  $region5: #{cross_prompt_t5_forward.9} parent=0 // loop_body
    %s15 = ssub.s32 %s10, 1
    %s16 = ssub.s32 %s10, 2
    %s17 = sadd.s32 %s10, 1
    %s18 = ssub.s32 %s10, %s17
    %p19 = scmp.eq.s32.totalorder %s18, 0
    %s21 = sadd.s32 %s20, 1
    %s22 = scalar_select %p19, %s20, %s21
    %p25 = pneg %p19
    %p26 = scmp.eq.s32.totalorder %s10, 1
    %p27 = por %p25, %p26
    %p28 = scmp.ne.s32.totalorder %s20, %s23
    %p29 = scmp.eq.s32.totalorder %s10, 0
    %p30 = por %p28, %p29
    %p31 = scmp.ne.s32.totalorder %s20, %s23
    %p32 = scmp.eq.s32.totalorder %s15, 1
    %p33 = por %p31, %p32
    %p34 = scmp.ne.s32.totalorder %s23, %s24
    %p35 = scmp.eq.s32.totalorder %s15, 0
    %p36 = por %p34, %p35
    %p37 = scmp.ne.s32.totalorder %s23, %s24
    %p38 = scmp.eq.s32.totalorder %s16, 1
    %p39 = por %p37, %p38
    %p41 = scmp.ne.s32.totalorder %s24, %s40
    %p42 = scmp.eq.s32.totalorder %s16, 0
    %p43 = por %p41, %p42
    %s45 = sadd.s32 %s44, 1
    %p48 = scmp.eq.s32.totalorder %s10, 1
    %p49 = scmp.ne.s32.totalorder %s44, %s46
    %p50 = scmp.eq.s32.totalorder %s10, 0
    %p51 = por %p49, %p50
    %p52 = scmp.ne.s32.totalorder %s44, %s46
    %p53 = scmp.eq.s32.totalorder %s15, 1
    %p54 = por %p52, %p53
    %p55 = scmp.ne.s32.totalorder %s46, %s47
    %p56 = scmp.eq.s32.totalorder %s15, 0
    %p57 = por %p55, %p56
    %p58 = scmp.ne.s32.totalorder %s46, %s47
    %p59 = scmp.eq.s32.totalorder %s16, 1
    %p60 = por %p58, %p59
    %p62 = scmp.ne.s32.totalorder %s47, %s61
    %p63 = scmp.eq.s32.totalorder %s16, 0
    %p64 = por %p62, %p63
    %s66 = sadd.s32 %s65, 1
    %p69 = scmp.eq.s32.totalorder %s10, 1
    %p70 = scmp.ne.s32.totalorder %s65, %s67
    %p71 = scmp.eq.s32.totalorder %s10, 0
    %p72 = por %p70, %p71
    %p73 = scmp.ne.s32.totalorder %s65, %s67
    %p74 = scmp.eq.s32.totalorder %s15, 1
    %p75 = por %p73, %p74
    %p76 = scmp.ne.s32.totalorder %s67, %s68
    %p77 = scmp.eq.s32.totalorder %s15, 0
    %p78 = por %p76, %p77
    %p79 = scmp.ne.s32.totalorder %s67, %s68
    %p80 = scmp.eq.s32.totalorder %s16, 1
    %p81 = por %p79, %p80
    %p83 = scmp.ne.s32.totalorder %s68, %s82
    %p84 = scmp.eq.s32.totalorder %s16, 0
    %p85 = por %p83, %p84
    %s87 = sadd.s32 %s86, 1
    %p90 = scmp.eq.s32.totalorder %s10, 1
    %p91 = scmp.ne.s32.totalorder %s86, %s88
    %p92 = scmp.eq.s32.totalorder %s10, 0
    %p93 = por %p91, %p92
    %p94 = scmp.ne.s32.totalorder %s86, %s88
    %p95 = scmp.eq.s32.totalorder %s15, 1
    %p96 = por %p94, %p95
    %p97 = scmp.ne.s32.totalorder %s88, %s89
    %p98 = scmp.eq.s32.totalorder %s15, 0
    %p99 = por %p97, %p98
    %p100 = scmp.ne.s32.totalorder %s88, %s89
    %p101 = scmp.eq.s32.totalorder %s16, 1
    %p102 = por %p100, %p101
    %p104 = scmp.ne.s32.totalorder %s89, %s103
    %p105 = scmp.eq.s32.totalorder %s16, 0
    %p106 = por %p104, %p105
    %s107 = ssub.s32 %s10, %s17
    %p108 = scmp.eq.s32.totalorder %s107, 0
    %s110 = sadd.s32 %s109, 1
    %s111 = scalar_select %p108, %s109, %s110
    %p114 = pneg %p108
    %p115 = scmp.eq.s32.totalorder %s10, 1
    %p116 = por %p114, %p115
    %p117 = scmp.ne.s32.totalorder %s109, %s112
    %p118 = scmp.eq.s32.totalorder %s10, 0
    %p119 = por %p117, %p118
    %p120 = scmp.ne.s32.totalorder %s109, %s112
    %p121 = scmp.eq.s32.totalorder %s15, 1
    %p122 = por %p120, %p121
    %p123 = scmp.ne.s32.totalorder %s112, %s113
    %p124 = scmp.eq.s32.totalorder %s15, 0
    %p125 = por %p123, %p124
    %p126 = scmp.ne.s32.totalorder %s112, %s113
    %p127 = scmp.eq.s32.totalorder %s16, 1
    %p128 = por %p126, %p127
    %p130 = scmp.ne.s32.totalorder %s113, %s129
    %p131 = scmp.eq.s32.totalorder %s16, 0
    %p132 = por %p130, %p131
    %p133 = scmp.le.s32.totalorder 1, %s10
    %p134 = scmp.lt.s32.totalorder %s10, 3
    %p135 = pnand %p133, %p134
    %p136 = pneg %p135
    // Predicated region
    $region9: #{cross_prompt_t5_forward.9} parent=5 // pred_check
      _
    $region10: #{cross_prompt_t5_forward.9} parent=5 // pred_check_branch
      %138 = sbr.rel (%p135) target = $region12
    $region11: #{cross_prompt_t5_forward.9} parent=5 // pred_region
      %s139 = ssub.s32 %s10, 1
      // Predicated region
      $region13: #{cross_prompt_t5_forward.9} parent=11 // pred_check
        %p140 = pneg %p57
      $region14: #{cross_prompt_t5_forward.9} parent=11 // pred_check_branch
        %142 = sbr.rel (%p140) target = $region16
      $region15: #{cross_prompt_t5_forward.9} parent=11 // pred_region
        _
      $region16: #{cross_prompt_t5_forward.9} parent=11 // pred_fallthru
        _
      // Predicated region
      $region17: #{cross_prompt_t5_forward.9} parent=11 // pred_check
        %p143 = pneg %p78
      $region18: #{cross_prompt_t5_forward.9} parent=11 // pred_check_branch
        %145 = sbr.rel (%p143) target = $region20
      $region19: #{cross_prompt_t5_forward.9} parent=11 // pred_region
        _
      $region20: #{cross_prompt_t5_forward.9} parent=11 // pred_fallthru
        _
      // Predicated region
      $region21: #{cross_prompt_t5_forward.9} parent=11 // pred_check
        %p146 = pneg %p99
      $region22: #{cross_prompt_t5_forward.9} parent=11 // pred_check_branch
        %148 = sbr.rel (%p146) target = $region24
      $region23: #{cross_prompt_t5_forward.9} parent=11 // pred_region
        _
      $region24: #{cross_prompt_t5_forward.9} parent=11 // pred_fallthru
        _
    $region12: #{cross_prompt_t5_forward.9} parent=5 // pred_fallthru
      _
    %p149 = scmp.lt.s32.totalorder %s10, 2
    // Predicated region
    $region25: #{cross_prompt_t5_forward.9} parent=5 // pred_check
      %p150 = pneg %p149
    $region26: #{cross_prompt_t5_forward.9} parent=5 // pred_check_branch
      %152 = sbr.rel (%p150) target = $region28
    $region27: #{cross_prompt_t5_forward.9} parent=5 // pred_region
      // Predicated region
      $region29: #{cross_prompt_t5_forward.9} parent=27 // pred_check
        %p153 = pneg %p30
      $region30: #{cross_prompt_t5_forward.9} parent=27 // pred_check_branch
        %155 = sbr.rel (%p153) target = $region32
      $region31: #{cross_prompt_t5_forward.9} parent=27 // pred_region
        %p156 = scmp.lt.s32.totalorder %s10, 1
        %s157 = scalar_select %p156, %s10, 1
        %s158 = smul.addr %s157, 2
        %s159 = smul.addr %s158, 8
        %s160 = scalar_lea.vmem %s0, %s159
      $region32: #{cross_prompt_t5_forward.9} parent=27 // pred_fallthru
        _
    $region28: #{cross_prompt_t5_forward.9} parent=5 // pred_fallthru
      _
    %p161 = scmp.le.s32.totalorder 1, %s10
    %p162 = scmp.lt.s32.totalorder %s10, 3
    %p163 = pnand %p161, %p162
    %p164 = pneg %p163
    // Predicated region
    $region33: #{cross_prompt_t5_forward.9} parent=5 // pred_check
      _
    $region34: #{cross_prompt_t5_forward.9} parent=5 // pred_check_branch
      %166 = sbr.rel (%p163) target = $region36
    $region35: #{cross_prompt_t5_forward.9} parent=5 // pred_region
      %s167 = ssub.s32 %s10, 1
      %p168 = scmp.lt.s32.totalorder %s15, 1
      %s169 = scalar_select %p168, %s15, 1
      %s170 = smul.addr %s169, 2
      %s171 = smul.addr %s170, 8
      %s172 = scalar_lea.vmem %s0, %s171
      %p173 = pneg %p36
      %p174 = pneg %p33
      %p175 = pneg %p57
      %p176 = pneg %p54
      %p177 = pneg %p78
      %p178 = pneg %p75
      %p179 = pneg %p99
      %p180 = pneg %p96
      %p181 = pneg %p125
      %p182 = pneg %p122
      %p183 = scmp.lt.s32.totalorder %s15, 1
      %s184 = scalar_select %p183, %s15, 1
      %s185 = smul.addr %s184, 2
      %s186 = smul.addr %s185, 8
      %s187 = scalar_lea.vmem %s4, %s186
      %p188 = scmp.lt.s32.totalorder %s15, 1
      %s189 = scalar_select %p188, %s15, 1
      %s190 = smul.addr %s189, 2
      %s191 = smul.addr %s190, 8
      %s192 = scalar_lea.vmem %s0, %s191
      %p193 = scmp.lt.s32.totalorder %s15, 1
      %s194 = scalar_select %p193, %s15, 1
      %s195 = smul.addr %s194, 2
      %s196 = smul.addr %s195, 8
      %s197 = scalar_lea.vmem %s4, %s196
      %v199 = vld [vmem:[%s192] sm:$0xff]
      %v200 = vld [vmem:[%s192 + $0x8] sm:$0xf]
      %v201 = vld [vmem:[%s1] sm:$0x1]
      %v202 = vmul.f32 %v199, %v199
      %v203 = vmul.f32 %v200, %v200
      %vm204 = vcmask 261120
      %v205 = vsel %vm204, %v202, 0.0
      %206 = vadd.xlane.f32.xlu0 %v205
      %v207 = vpop.xlane.xlu0 %206
      %vm208 = vcmask 257024
      %v209 = vsel %vm208, %v203, 0.0
      %210 = vadd.xlane.f32.xlu0 %v209
      %v211 = vpop.xlane.xlu0 %210
      %v212 = vrcp.pop 32.0
      %v213 = vmul.f32 %v207, %v212
      %v214 = vmul.f32 %v211, %v212
      %v215 = vadd.f32 %v213, 1e-06
      %v216 = vadd.f32 %v214, 1e-06
      %v217 = vrsqrt.pop %v215
      %v218 = vrsqrt.pop %v216
      %v219 = vmul.f32 %v199, %v217
      %v220 = vmul.f32 %v200, %v218
      %v222 = vlaneseq
      %v223 = vshrl.u32 %v222, 7
      %v224 = vsub.s32 0, %v223
      %v225 = vrot.slane %v201, %v224
      %v227 = vmul.f32 %v219, %v225
      %v228 = vmul.f32 %v220, %v225
      %v229 = vpack.c.bf16 %v228, %v227
      %v230 = vld [vmem:[%s2] sm:$0xf]
      %v231 = vld [vmem:[%s2 + $0x4] sm:$0xf]
      %v232 = vld [vmem:[%s2 + $0x8] sm:$0xf]
      %v233 = vld [vmem:[%s2 + $0xc] sm:$0xf]
      %v238 = vunpack.c.l.b16 %v230
      %v239 = vunpack.c.l.b16 %v231
      %v240 = vunpack.c.l.b16 %v232
      %v241 = vunpack.c.l.b16 %v233
      %v242 = vpack.c.b16 %v239, %v238
      %v243 = vpack.c.b16 %v241, %v240
      %v247 = vsel %vm204, %v229, 0
      %249 = vmatprep.subr.bf16.mxu0 0
      %250 = vmatpush1.bf16.msra.mxu0 %v242
      %251 = vmatprep.subr.bf16.mxu0 0
      %252 = vmatpush1.bf16.msra.mxu0 %v243
      %253 = vmatprep.subr.bf16.mxu0 0
      %254 = vmatpush1.bf16.msra.mxu0 0
      %255 = vmatprep.subr.bf16.mxu0 0
      %256 = vmatpush1.bf16.msra.mxu0 0
      %257 = vmatprep.subr.bf16.mxu0 0
      %258 = vmatpush1.bf16.msra.mxu0 0
      %259 = vmatprep.subr.bf16.mxu0 0
      %260 = vmatpush1.bf16.msra.mxu0 0
      %261 = vmatprep.subr.bf16.mxu0 0
      %262 = vmatpush1.bf16.msra.mxu0 0
      %263 = vmatprep.subr.bf16.mxu0 0
      %264 = vmatpush1.bf16.msra.mxu0 0
      %265 = vmatprep.subr.bf16.mxu0 0
      %266 = vmatpush1.bf16.msra.mxu0 0
      %267 = vmatprep.subr.bf16.mxu0 0
      %268 = vmatpush1.bf16.msra.mxu0 0
      %269 = vmatprep.subr.bf16.mxu0 0
      %270 = vmatpush1.bf16.msra.mxu0 0
      %271 = vmatprep.subr.bf16.mxu0 0
      %272 = vmatpush1.bf16.msra.mxu0 0
      %273 = vmatprep.subr.bf16.mxu0 0
      %274 = vmatpush1.bf16.msra.mxu0 0
      %275 = vmatprep.subr.bf16.mxu0 0
      %276 = vmatpush1.bf16.msra.mxu0 0
      %277 = vmatprep.subr.bf16.mxu0 0
      %278 = vmatpush1.bf16.msra.mxu0 0
      %279 = vmatprep.subr.bf16.mxu0 0
      %280 = vmatpush1.bf16.msra.mxu0 0
      %281 = vmatprep.mubr.bf16.mxu0 0
      %282 = vmatmul.mubr.bf16.gmra.mrb[0].mxu0 %v247
      %v283 = vpop.f32.mrb[0].mxu0
      %v284 = vadd.f32 0.0, %v283
      %v285 = vpop.f32.mrb[0].mxu0
      %v286 = vpop.f32.mrb[0].mxu0
      %v287 = vadd.f32 0.0, %v286
      %v288 = vpop.f32.mrb[0].mxu0
      %289 = vdwg.mxu0
      %v290 = vpack.c.bf16 %v287, %v284
      %292 = vrot.lane.b32.xlu0 %v290, 96
      %v293 = vpop.permute.xlu0 %292
      %vm294 = vcmask 64512
      %v296 = vsel %vm294, %v290, 0
      %v299 = vsel %vm294, %v293, 0
      %301 = vmatprep.subr.bf16.mxu0 0
      %302 = vmatpush1.bf16.xpose.msra.mxu0 %v299
      %303 = vmatprep.subr.bf16.mxu0 0
      %304 = vmatpush1.bf16.xpose.msra.mxu0 0
      %305 = vmatprep.subr.bf16.mxu0 0
      %306 = vmatpush1.bf16.xpose.msra.mxu0 0
      %307 = vmatprep.subr.bf16.mxu0 0
      %308 = vmatpush1.bf16.xpose.msra.mxu0 0
      %309 = vmatprep.subr.bf16.mxu0 0
      %310 = vmatpush1.bf16.xpose.msra.mxu0 0
      %311 = vmatprep.subr.bf16.mxu0 0
      %312 = vmatpush1.bf16.xpose.msra.mxu0 0
      %313 = vmatprep.subr.bf16.mxu0 0
      %314 = vmatpush1.bf16.xpose.msra.mxu0 0
      %315 = vmatprep.subr.bf16.mxu0 0
      %316 = vmatpush1.bf16.xpose.msra.mxu0 0
      %317 = vmatprep.subr.bf16.mxu0 0
      %318 = vmatpush1.bf16.xpose.msra.mxu0 0
      %319 = vmatprep.subr.bf16.mxu0 0
      %320 = vmatpush1.bf16.xpose.msra.mxu0 0
      %321 = vmatprep.subr.bf16.mxu0 0
      %322 = vmatpush1.bf16.xpose.msra.mxu0 0
      %323 = vmatprep.subr.bf16.mxu0 0
      %324 = vmatpush1.bf16.xpose.msra.mxu0 0
      %325 = vmatprep.subr.bf16.mxu0 0
      %326 = vmatpush1.bf16.xpose.msra.mxu0 0
      %327 = vmatprep.subr.bf16.mxu0 0
      %328 = vmatpush1.bf16.xpose.msra.mxu0 0
      %329 = vmatprep.subr.bf16.mxu0 0
      %330 = vmatpush1.bf16.xpose.msra.mxu0 0
      %331 = vmatprep.subr.bf16.mxu0 0
      %332 = vmatpush1.bf16.xpose.msra.mxu0 0
      %333 = vmatprep.mubr.bf16.mxu0 0
      %334 = vmatmul.mubr.bf16.gmra.mrb[0].mxu0 %v296
      %v335 = vpop.f32.mrb[0].mxu0
      %v336 = vadd.f32 0.0, %v335
      %v337 = vpop.f32.mrb[0].mxu0
      %v338 = vpop.f32.mrb[0].mxu0
      %v339 = vadd.f32 0.0, %v338
      %v340 = vpop.f32.mrb[0].mxu0
      %341 = vdwg.mxu0
      %vm342 = vcmask 97280
      %v343 = vsel %vm342, %v336, -inf
      %344 = vmax.xlane.f32.xlu0 %v343
      %v345 = vpop.xlane.xlu0 %344
      %vm346 = vcmask 93184
      %v347 = vsel %vm346, %v339, -inf
      %348 = vmax.xlane.f32.xlu0 %v347
      %v349 = vpop.xlane.xlu0 %348
      %v350 = vsub.f32 %v336, %v345
      %v351 = vsub.f32 %v339, %v349
      %v352 = vmul.f32 %v350, 1.442695
      %v353 = vpow.pop %v352
      %v354 = vmul.f32 %v351, 1.442695
      %v355 = vpow.pop %v354
      %v356 = vsel %vm342, %v353, 0.0
      %357 = vadd.xlane.f32.xlu0 %v356
      %v358 = vpop.xlane.xlu0 %357
      %v359 = vsel %vm346, %v355, 0.0
      %360 = vadd.xlane.f32.xlu0 %v359
      %v361 = vpop.xlane.xlu0 %360
      %v362 = vrcp.pop %v358
      %v363 = vrcp.pop %v361
      %v364 = vpack.c.bf16 %v355, %v353
      %365 = vrot.lane.b32.xlu0 %v290, 64
      %v366 = vpop.permute.xlu0 %365
      %v368 = vsel %vm342, %v364, 0
      %vm370 = vcmask 1045504
      %v372 = vsel %vm370, %v366, 0
      %374 = vmatprep.subr.bf16.mxu0 0
      %375 = vmatpush1.bf16.msra.mxu0 %v372
      %376 = vmatprep.subr.bf16.mxu0 0
      %377 = vmatpush1.bf16.msra.mxu0 0
      %378 = vmatprep.subr.bf16.mxu0 0
      %379 = vmatpush1.bf16.msra.mxu0 0
      %380 = vmatprep.subr.bf16.mxu0 0
      %381 = vmatpush1.bf16.msra.mxu0 0
      %382 = vmatprep.subr.bf16.mxu0 0
      %383 = vmatpush1.bf16.msra.mxu0 0
      %384 = vmatprep.subr.bf16.mxu0 0
      %385 = vmatpush1.bf16.msra.mxu0 0
      %386 = vmatprep.subr.bf16.mxu0 0
      %387 = vmatpush1.bf16.msra.mxu0 0
      %388 = vmatprep.subr.bf16.mxu0 0
      %389 = vmatpush1.bf16.msra.mxu0 0
      %390 = vmatprep.subr.bf16.mxu0 0
      %391 = vmatpush1.bf16.msra.mxu0 0
      %392 = vmatprep.subr.bf16.mxu0 0
      %393 = vmatpush1.bf16.msra.mxu0 0
      %394 = vmatprep.subr.bf16.mxu0 0
      %395 = vmatpush1.bf16.msra.mxu0 0
      %396 = vmatprep.subr.bf16.mxu0 0
      %397 = vmatpush1.bf16.msra.mxu0 0
      %398 = vmatprep.subr.bf16.mxu0 0
      %399 = vmatpush1.bf16.msra.mxu0 0
      %400 = vmatprep.subr.bf16.mxu0 0
      %401 = vmatpush1.bf16.msra.mxu0 0
      %402 = vmatprep.subr.bf16.mxu0 0
      %403 = vmatpush1.bf16.msra.mxu0 0
      %404 = vmatprep.subr.bf16.mxu0 0
      %405 = vmatpush1.bf16.msra.mxu0 0
      %406 = vmatprep.mubr.bf16.mxu0 0
      %407 = vmatmul.mubr.bf16.gmra.mrb[0].mxu0 %v368
      %v408 = vpop.f32.mrb[0].mxu0
      %v409 = vadd.f32 0.0, %v408
      %v410 = vpop.f32.mrb[0].mxu0
      %v411 = vpop.f32.mrb[0].mxu0
      %v412 = vadd.f32 0.0, %v411
      %v413 = vpop.f32.mrb[0].mxu0
      %414 = vdwg.mxu0
      %v415 = vmul.f32 %v409, %v362
      %v416 = vmul.f32 %v412, %v363
      %417 = vrot.lane.b32.xlu0 %v290, 120
      %v418 = vpop.permute.xlu0 %417
      %419 = vrot.lane.b32.xlu0 %v290, 88
      %v420 = vpop.permute.xlu0 %419
      %v422 = vsel %vm294, %v418, 0
      %v425 = vsel %vm294, %v420, 0
      %427 = vmatprep.subr.bf16.mxu0 0
      %428 = vmatpush1.bf16.xpose.msra.mxu0 %v425
      %429 = vmatprep.subr.bf16.mxu0 0
      %430 = vmatpush1.bf16.xpose.msra.mxu0 0
      %431 = vmatprep.subr.bf16.mxu0 0
      %432 = vmatpush1.bf16.xpose.msra.mxu0 0
      %433 = vmatprep.subr.bf16.mxu0 0
      %434 = vmatpush1.bf16.xpose.msra.mxu0 0
      %435 = vmatprep.subr.bf16.mxu0 0
      %436 = vmatpush1.bf16.xpose.msra.mxu0 0
      %437 = vmatprep.subr.bf16.mxu0 0
      %438 = vmatpush1.bf16.xpose.msra.mxu0 0
      %439 = vmatprep.subr.bf16.mxu0 0
      %440 = vmatpush1.bf16.xpose.msra.mxu0 0
      %441 = vmatprep.subr.bf16.mxu0 0
      %442 = vmatpush1.bf16.xpose.msra.mxu0 0
      %443 = vmatprep.subr.bf16.mxu0 0
      %444 = vmatpush1.bf16.xpose.msra.mxu0 0
      %445 = vmatprep.subr.bf16.mxu0 0
      %446 = vmatpush1.bf16.xpose.msra.mxu0 0
      %447 = vmatprep.subr.bf16.mxu0 0
      %448 = vmatpush1.bf16.xpose.msra.mxu0 0
      %449 = vmatprep.subr.bf16.mxu0 0
      %450 = vmatpush1.bf16.xpose.msra.mxu0 0
      %451 = vmatprep.subr.bf16.mxu0 0
      %452 = vmatpush1.bf16.xpose.msra.mxu0 0
      %453 = vmatprep.subr.bf16.mxu0 0
      %454 = vmatpush1.bf16.xpose.msra.mxu0 0
      %455 = vmatprep.subr.bf16.mxu0 0
      %456 = vmatpush1.bf16.xpose.msra.mxu0 0
      %457 = vmatprep.subr.bf16.mxu0 0
      %458 = vmatpush1.bf16.xpose.msra.mxu0 0
      %459 = vmatprep.mubr.bf16.mxu0 0
      %460 = vmatmul.mubr.bf16.gmra.mrb[0].mxu0 %v422
      %v461 = vpop.f32.mrb[0].mxu0
      %v462 = vadd.f32 0.0, %v461
      %v463 = vpop.f32.mrb[0].mxu0
      %v464 = vpop.f32.mrb[0].mxu0
      %v465 = vadd.f32 0.0, %v464
      %v466 = vpop.f32.mrb[0].mxu0
      %467 = vdwg.mxu0
      %v468 = vsel %vm342, %v462, -inf
      %469 = vmax.xlane.f32.xlu0 %v468
      %v470 = vpop.xlane.xlu0 %469
      %v471 = vsel %vm346, %v465, -inf
      %472 = vmax.xlane.f32.xlu0 %v471
      %v473 = vpop.xlane.xlu0 %472
      %v474 = vsub.f32 %v462, %v470
      %v475 = vsub.f32 %v465, %v473
      %v476 = vmul.f32 %v474, 1.442695
      %v477 = vpow.pop %v476
      %v478 = vmul.f32 %v475, 1.442695
      %v479 = vpow.pop %v478
      %v480 = vsel %vm342, %v477, 0.0
      %481 = vadd.xlane.f32.xlu0 %v480
      %v482 = vpop.xlane.xlu0 %481
      %v483 = vsel %vm346, %v479, 0.0
      %484 = vadd.xlane.f32.xlu0 %v483
      %v485 = vpop.xlane.xlu0 %484
      %v486 = vrcp.pop %v482
      %v487 = vrcp.pop %v485
      %v488 = vpack.c.bf16 %v479, %v477
      %489 = vrot.lane.b32.xlu0 %v290, 56
      %v490 = vpop.permute.xlu0 %489
      %v492 = vsel %vm342, %v488, 0
      %v495 = vsel %vm370, %v490, 0
      %497 = vmatprep.subr.bf16.mxu0 0
      %498 = vmatpush1.bf16.msra.mxu0 %v495
      %499 = vmatprep.subr.bf16.mxu0 0
      %500 = vmatpush1.bf16.msra.mxu0 0
      %501 = vmatprep.subr.bf16.mxu0 0
      %502 = vmatpush1.bf16.msra.mxu0 0
      %503 = vmatprep.subr.bf16.mxu0 0
      %504 = vmatpush1.bf16.msra.mxu0 0
      %505 = vmatprep.subr.bf16.mxu0 0
      %506 = vmatpush1.bf16.msra.mxu0 0
      %507 = vmatprep.subr.bf16.mxu0 0
      %508 = vmatpush1.bf16.msra.mxu0 0
      %509 = vmatprep.subr.bf16.mxu0 0
      %510 = vmatpush1.bf16.msra.mxu0 0
      %511 = vmatprep.subr.bf16.mxu0 0
      %512 = vmatpush1.bf16.msra.mxu0 0
      %513 = vmatprep.subr.bf16.mxu0 0
      %514 = vmatpush1.bf16.msra.mxu0 0
      %515 = vmatprep.subr.bf16.mxu0 0
      %516 = vmatpush1.bf16.msra.mxu0 0
      %517 = vmatprep.subr.bf16.mxu0 0
      %518 = vmatpush1.bf16.msra.mxu0 0
      %519 = vmatprep.subr.bf16.mxu0 0
      %520 = vmatpush1.bf16.msra.mxu0 0
      %521 = vmatprep.subr.bf16.mxu0 0
      %522 = vmatpush1.bf16.msra.mxu0 0
      %523 = vmatprep.subr.bf16.mxu0 0
      %524 = vmatpush1.bf16.msra.mxu0 0
      %525 = vmatprep.subr.bf16.mxu0 0
      %526 = vmatpush1.bf16.msra.mxu0 0
      %527 = vmatprep.subr.bf16.mxu0 0
      %528 = vmatpush1.bf16.msra.mxu0 0
      %529 = vmatprep.mubr.bf16.mxu0 0
      %530 = vmatmul.mubr.bf16.gmra.mrb[0].mxu0 %v492
      %v531 = vpop.f32.mrb[0].mxu0
      %v532 = vadd.f32 0.0, %v531
      %v533 = vpop.f32.mrb[0].mxu0
      %v534 = vpop.f32.mrb[0].mxu0
      %v535 = vadd.f32 0.0, %v534
      %v536 = vpop.f32.mrb[0].mxu0
      %537 = vdwg.mxu0
      %v538 = vmul.f32 %v532, %v486
      %v539 = vmul.f32 %v535, %v487
      %540 = vrot.lane.b32.xlu0 %v290, 112
      %v541 = vpop.permute.xlu0 %540
      %542 = vrot.lane.b32.xlu0 %v290, 80
      %v543 = vpop.permute.xlu0 %542
      %v545 = vsel %vm294, %v541, 0
      %v548 = vsel %vm294, %v543, 0
      %550 = vmatprep.subr.bf16.mxu0 0
      %551 = vmatpush1.bf16.xpose.msra.mxu0 %v548
      %552 = vmatprep.subr.bf16.mxu0 0
      %553 = vmatpush1.bf16.xpose.msra.mxu0 0
      %554 = vmatprep.subr.bf16.mxu0 0
      %555 = vmatpush1.bf16.xpose.msra.mxu0 0
      %556 = vmatprep.subr.bf16.mxu0 0
      %557 = vmatpush1.bf16.xpose.msra.mxu0 0
      %558 = vmatprep.subr.bf16.mxu0 0
      %559 = vmatpush1.bf16.xpose.msra.mxu0 0
      %560 = vmatprep.subr.bf16.mxu0 0
      %561 = vmatpush1.bf16.xpose.msra.mxu0 0
      %562 = vmatprep.subr.bf16.mxu0 0
      %563 = vmatpush1.bf16.xpose.msra.mxu0 0
      %564 = vmatprep.subr.bf16.mxu0 0
      %565 = vmatpush1.bf16.xpose.msra.mxu0 0
      %566 = vmatprep.subr.bf16.mxu0 0
      %567 = vmatpush1.bf16.xpose.msra.mxu0 0
      %568 = vmatprep.subr.bf16.mxu0 0
      %569 = vmatpush1.bf16.xpose.msra.mxu0 0
      %570 = vmatprep.subr.bf16.mxu0 0
      %571 = vmatpush1.bf16.xpose.msra.mxu0 0
      %572 = vmatprep.subr.bf16.mxu0 0
      %573 = vmatpush1.bf16.xpose.msra.mxu0 0
      %574 = vmatprep.subr.bf16.mxu0 0
      %575 = vmatpush1.bf16.xpose.msra.mxu0 0
      %576 = vmatprep.subr.bf16.mxu0 0
      %577 = vmatpush1.bf16.xpose.msra.mxu0 0
      %578 = vmatprep.subr.bf16.mxu0 0
      %579 = vmatpush1.bf16.xpose.msra.mxu0 0
      %580 = vmatprep.subr.bf16.mxu0 0
      %581 = vmatpush1.bf16.xpose.msra.mxu0 0
      %582 = vmatprep.mubr.bf16.mxu0 0
      %583 = vmatmul.mubr.bf16.gmra.mrb[0].mxu0 %v545
      %v584 = vpop.f32.mrb[0].mxu0
      %v585 = vadd.f32 0.0, %v584
      %v586 = vpop.f32.mrb[0].mxu0
      %v587 = vpop.f32.mrb[0].mxu0
      %v588 = vadd.f32 0.0, %v587
      %v589 = vpop.f32.mrb[0].mxu0
      %590 = vdwg.mxu0
      %v591 = vsel %vm342, %v585, -inf
      %592 = vmax.xlane.f32.xlu0 %v591
      %v593 = vpop.xlane.xlu0 %592
      %v594 = vsel %vm346, %v588, -inf
      %595 = vmax.xlane.f32.xlu0 %v594
      %v596 = vpop.xlane.xlu0 %595
      %v597 = vsub.f32 %v585, %v593
      %v598 = vsub.f32 %v588, %v596
      %v599 = vmul.f32 %v597, 1.442695
      %v600 = vpow.pop %v599
      %v601 = vmul.f32 %v598, 1.442695
      %v602 = vpow.pop %v601
      %v603 = vsel %vm342, %v600, 0.0
      %604 = vadd.xlane.f32.xlu0 %v603
      %v605 = vpop.xlane.xlu0 %604
      %v606 = vsel %vm346, %v602, 0.0
      %607 = vadd.xlane.f32.xlu0 %v606
      %v608 = vpop.xlane.xlu0 %607
      %v609 = vrcp.pop %v605
      %v610 = vrcp.pop %v608
      %v611 = vpack.c.bf16 %v602, %v600
      %612 = vrot.lane.b32.xlu0 %v290, 48
      %v613 = vpop.permute.xlu0 %612
      %v615 = vsel %vm342, %v611, 0
      %v618 = vsel %vm370, %v613, 0
      %620 = vmatprep.subr.bf16.mxu0 0
      %621 = vmatpush1.bf16.msra.mxu0 %v618
      %622 = vmatprep.subr.bf16.mxu0 0
      %623 = vmatpush1.bf16.msra.mxu0 0
      %624 = vmatprep.subr.bf16.mxu0 0
      %625 = vmatpush1.bf16.msra.mxu0 0
      %626 = vmatprep.subr.bf16.mxu0 0
      %627 = vmatpush1.bf16.msra.mxu0 0
      %628 = vmatprep.subr.bf16.mxu0 0
      %629 = vmatpush1.bf16.msra.mxu0 0
      %630 = vmatprep.subr.bf16.mxu0 0
      %631 = vmatpush1.bf16.msra.mxu0 0
      %632 = vmatprep.subr.bf16.mxu0 0
      %633 = vmatpush1.bf16.msra.mxu0 0
      %634 = vmatprep.subr.bf16.mxu0 0
      %635 = vmatpush1.bf16.msra.mxu0 0
      %636 = vmatprep.subr.bf16.mxu0 0
      %637 = vmatpush1.bf16.msra.mxu0 0
      %638 = vmatprep.subr.bf16.mxu0 0
      %639 = vmatpush1.bf16.msra.mxu0 0
      %640 = vmatprep.subr.bf16.mxu0 0
      %641 = vmatpush1.bf16.msra.mxu0 0
      %642 = vmatprep.subr.bf16.mxu0 0
      %643 = vmatpush1.bf16.msra.mxu0 0
      %644 = vmatprep.subr.bf16.mxu0 0
      %645 = vmatpush1.bf16.msra.mxu0 0
      %646 = vmatprep.subr.bf16.mxu0 0
      %647 = vmatpush1.bf16.msra.mxu0 0
      %648 = vmatprep.subr.bf16.mxu0 0
      %649 = vmatpush1.bf16.msra.mxu0 0
      %650 = vmatprep.subr.bf16.mxu0 0
      %651 = vmatpush1.bf16.msra.mxu0 0
      %652 = vmatprep.mubr.bf16.mxu0 0
      %653 = vmatmul.mubr.bf16.gmra.mrb[0].mxu0 %v615
      %v654 = vpop.f32.mrb[0].mxu0
      %v655 = vadd.f32 0.0, %v654
      %v656 = vpop.f32.mrb[0].mxu0
      %v657 = vpop.f32.mrb[0].mxu0
      %v658 = vadd.f32 0.0, %v657
      %v659 = vpop.f32.mrb[0].mxu0
      %660 = vdwg.mxu0
      %v661 = vmul.f32 %v655, %v609
      %v662 = vmul.f32 %v658, %v610
      %663 = vrot.lane.b32.xlu0 %v290, 104
      %v664 = vpop.permute.xlu0 %663
      %665 = vrot.lane.b32.xlu0 %v290, 72
      %v666 = vpop.permute.xlu0 %665
      %v668 = vsel %vm294, %v664, 0
      %v671 = vsel %vm294, %v666, 0
      %673 = vmatprep.subr.bf16.mxu0 0
      %674 = vmatpush1.bf16.xpose.msra.mxu0 %v671
      %675 = vmatprep.subr.bf16.mxu0 0
      %676 = vmatpush1.bf16.xpose.msra.mxu0 0
      %677 = vmatprep.subr.bf16.mxu0 0
      %678 = vmatpush1.bf16.xpose.msra.mxu0 0
      %679 = vmatprep.subr.bf16.mxu0 0
      %680 = vmatpush1.bf16.xpose.msra.mxu0 0
      %681 = vmatprep.subr.bf16.mxu0 0
      %682 = vmatpush1.bf16.xpose.msra.mxu0 0
      %683 = vmatprep.subr.bf16.mxu0 0
      %684 = vmatpush1.bf16.xpose.msra.mxu0 0
      %685 = vmatprep.subr.bf16.mxu0 0
      %686 = vmatpush1.bf16.xpose.msra.mxu0 0
      %687 = vmatprep.subr.bf16.mxu0 0
      %688 = vmatpush1.bf16.xpose.msra.mxu0 0
      %689 = vmatprep.subr.bf16.mxu0 0
      %690 = vmatpush1.bf16.xpose.msra.mxu0 0
      %691 = vmatprep.subr.bf16.mxu0 0
      %692 = vmatpush1.bf16.xpose.msra.mxu0 0
      %693 = vmatprep.subr.bf16.mxu0 0
      %694 = vmatpush1.bf16.xpose.msra.mxu0 0
      %695 = vmatprep.subr.bf16.mxu0 0
      %696 = vmatpush1.bf16.xpose.msra.mxu0 0
      %697 = vmatprep.subr.bf16.mxu0 0
      %698 = vmatpush1.bf16.xpose.msra.mxu0 0
      %699 = vmatprep.subr.bf16.mxu0 0
      %700 = vmatpush1.bf16.xpose.msra.mxu0 0
      %701 = vmatprep.subr.bf16.mxu0 0
      %702 = vmatpush1.bf16.xpose.msra.mxu0 0
      %703 = vmatprep.subr.bf16.mxu0 0
      %704 = vmatpush1.bf16.xpose.msra.mxu0 0
      %705 = vmatprep.mubr.bf16.mxu0 0
      %706 = vmatmul.mubr.bf16.gmra.mrb[0].mxu0 %v668
      %v707 = vpop.f32.mrb[0].mxu0
      %v708 = vadd.f32 0.0, %v707
      %v709 = vpop.f32.mrb[0].mxu0
      %v710 = vpop.f32.mrb[0].mxu0
      %v711 = vadd.f32 0.0, %v710
      %v712 = vpop.f32.mrb[0].mxu0
      %713 = vdwg.mxu0
      %v714 = vsel %vm342, %v708, -inf
      %715 = vmax.xlane.f32.xlu0 %v714
      %v716 = vpop.xlane.xlu0 %715
      %v717 = vsel %vm346, %v711, -inf
      %718 = vmax.xlane.f32.xlu0 %v717
      %v719 = vpop.xlane.xlu0 %718
      %v720 = vsub.f32 %v708, %v716
      %v721 = vsub.f32 %v711, %v719
      %v722 = vmul.f32 %v720, 1.442695
      %v723 = vpow.pop %v722
      %v724 = vmul.f32 %v721, 1.442695
      %v725 = vpow.pop %v724
      %v726 = vsel %vm342, %v723, 0.0
      %727 = vadd.xlane.f32.xlu0 %v726
      %v728 = vpop.xlane.xlu0 %727
      %v729 = vsel %vm346, %v725, 0.0
      %730 = vadd.xlane.f32.xlu0 %v729
      %v731 = vpop.xlane.xlu0 %730
      %v732 = vrcp.pop %v728
      %v733 = vrcp.pop %v731
      %v734 = vpack.c.bf16 %v725, %v723
      %735 = vrot.lane.b32.xlu0 %v290, 40
      %v736 = vpop.permute.xlu0 %735
      %v738 = vsel %vm342, %v734, 0
      %v741 = vsel %vm370, %v736, 0
      %743 = vmatprep.subr.bf16.mxu0 0
      %744 = vmatpush1.bf16.msra.mxu0 %v741
      %745 = vmatprep.subr.bf16.mxu0 0
      %746 = vmatpush1.bf16.msra.mxu0 0
      %747 = vmatprep.subr.bf16.mxu0 0
      %748 = vmatpush1.bf16.msra.mxu0 0
      %749 = vmatprep.subr.bf16.mxu0 0
      %750 = vmatpush1.bf16.msra.mxu0 0
      %751 = vmatprep.subr.bf16.mxu0 0
      %752 = vmatpush1.bf16.msra.mxu0 0
      %753 = vmatprep.subr.bf16.mxu0 0
      %754 = vmatpush1.bf16.msra.mxu0 0
      %755 = vmatprep.subr.bf16.mxu0 0
      %756 = vmatpush1.bf16.msra.mxu0 0
      %757 = vmatprep.subr.bf16.mxu0 0
      %758 = vmatpush1.bf16.msra.mxu0 0
      %759 = vmatprep.subr.bf16.mxu0 0
      %760 = vmatpush1.bf16.msra.mxu0 0
      %761 = vmatprep.subr.bf16.mxu0 0
      %762 = vmatpush1.bf16.msra.mxu0 0
      %763 = vmatprep.subr.bf16.mxu0 0
      %764 = vmatpush1.bf16.msra.mxu0 0
      %765 = vmatprep.subr.bf16.mxu0 0
      %766 = vmatpush1.bf16.msra.mxu0 0
      %767 = vmatprep.subr.bf16.mxu0 0
      %768 = vmatpush1.bf16.msra.mxu0 0
      %769 = vmatprep.subr.bf16.mxu0 0
      %770 = vmatpush1.bf16.msra.mxu0 0
      %771 = vmatprep.subr.bf16.mxu0 0
      %772 = vmatpush1.bf16.msra.mxu0 0
      %773 = vmatprep.subr.bf16.mxu0 0
      %774 = vmatpush1.bf16.msra.mxu0 0
      %775 = vmatprep.mubr.bf16.mxu0 0
      %776 = vmatmul.mubr.bf16.gmra.mrb[0].mxu0 %v738
      %v777 = vpop.f32.mrb[0].mxu0
      %v778 = vadd.f32 0.0, %v777
      %v779 = vpop.f32.mrb[0].mxu0
      %v780 = vpop.f32.mrb[0].mxu0
      %v781 = vadd.f32 0.0, %v780
      %v782 = vpop.f32.mrb[0].mxu0
      %783 = vdwg.mxu0
      %v784 = vmul.f32 %v778, %v732
      %v785 = vmul.f32 %v781, %v733
      %788 = vrot.lane.b32.xlu0 %v538, 8
      %v789 = vpop.permute.xlu0 %788
      %790 = vrot.lane.b32.xlu0 %v539, 8
      %v791 = vpop.permute.xlu0 %790
      %796 = vrot.lane.b32.xlu0 %v661, 16
      %v797 = vpop.permute.xlu0 %796
      %798 = vrot.lane.b32.xlu0 %v662, 16
      %v799 = vpop.permute.xlu0 %798
      %804 = vrot.lane.b32.xlu0 %v784, 24
      %v805 = vpop.permute.xlu0 %804
      %806 = vrot.lane.b32.xlu0 %v785, 24
      %v807 = vpop.permute.xlu0 %806
      %v810 = vsel %vm294, %v415, %v789
      %v811 = vsel %vm294, %v416, %v791
      %vm812 = vcmask 130048
      %v813 = vsel %vm812, %v810, %v797
      %v814 = vsel %vm812, %v811, %v799
      %vm815 = vcmask 195584
      %v816 = vsel %vm815, %v813, %v805
      %v817 = vsel %vm815, %v814, %v807
      %v818 = vpack.c.bf16 %v817, %v816
      %v819 = vld [vmem:[%s3] sm:$0xf]
      %v820 = vld [vmem:[%s3 + $0x4] sm:$0xf]
      %v821 = vld [vmem:[%s3 + $0x8] sm:$0xf]
      %v822 = vld [vmem:[%s3 + $0xc] sm:$0xf]
      %v827 = vunpack.c.l.b16 %v819
      %v828 = vunpack.c.l.b16 %v820
      %v829 = vunpack.c.l.b16 %v821
      %v830 = vunpack.c.l.b16 %v822
      %v831 = vpack.c.b16 %v828, %v827
      %v832 = vpack.c.b16 %v830, %v829
      %v836 = vsel %vm204, %v818, 0
      %838 = vmatprep.subr.bf16.mxu0 0
      %839 = vmatpush1.bf16.msra.mxu0 %v831
      %840 = vmatprep.subr.bf16.mxu0 0
      %841 = vmatpush1.bf16.msra.mxu0 %v832
      %842 = vmatprep.subr.bf16.mxu0 0
      %843 = vmatpush1.bf16.msra.mxu0 0
      %844 = vmatprep.subr.bf16.mxu0 0
      %845 = vmatpush1.bf16.msra.mxu0 0
      %846 = vmatprep.subr.bf16.mxu0 0
      %847 = vmatpush1.bf16.msra.mxu0 0
      %848 = vmatprep.subr.bf16.mxu0 0
      %849 = vmatpush1.bf16.msra.mxu0 0
      %850 = vmatprep.subr.bf16.mxu0 0
      %851 = vmatpush1.bf16.msra.mxu0 0
      %852 = vmatprep.subr.bf16.mxu0 0
      %853 = vmatpush1.bf16.msra.mxu0 0
      %854 = vmatprep.subr.bf16.mxu0 0
      %855 = vmatpush1.bf16.msra.mxu0 0
      %856 = vmatprep.subr.bf16.mxu0 0
      %857 = vmatpush1.bf16.msra.mxu0 0
      %858 = vmatprep.subr.bf16.mxu0 0
      %859 = vmatpush1.bf16.msra.mxu0 0
      %860 = vmatprep.subr.bf16.mxu0 0
      %861 = vmatpush1.bf16.msra.mxu0 0
      %862 = vmatprep.subr.bf16.mxu0 0
      %863 = vmatpush1.bf16.msra.mxu0 0
      %864 = vmatprep.subr.bf16.mxu0 0
      %865 = vmatpush1.bf16.msra.mxu0 0
      %866 = vmatprep.subr.bf16.mxu0 0
      %867 = vmatpush1.bf16.msra.mxu0 0
      %868 = vmatprep.subr.bf16.mxu0 0
      %869 = vmatpush1.bf16.msra.mxu0 0
      %870 = vmatprep.mubr.bf16.mxu0 0
      %871 = vmatmul.mubr.bf16.gmra.mrb[0].mxu0 %v836
      %v872 = vpop.f32.mrb[0].mxu0
      %v873 = vadd.f32 0.0, %v872
      %v874 = vpop.f32.mrb[0].mxu0
      %v875 = vpop.f32.mrb[0].mxu0
      %v876 = vadd.f32 0.0, %v875
      %v877 = vpop.f32.mrb[0].mxu0
      %878 = vdwg.mxu0
      %v879 = vadd.f32 %v199, %v873
      %v880 = vadd.f32 %v200, %v876
      %881 = vst.msk [vmem:[%s197] sm:$0xff] %vm204, %v879
      %882 = vst.msk [vmem:[%s197 + $0x8] sm:$0xf] %vm208, %v880
      %p883 = scmp.lt.s32.totalorder %s15, 1
      %s884 = scalar_select %p883, %s15, 1
      %s885 = smul.addr %s884, 2
      %s886 = smul.addr %s885, 8
      %s887 = scalar_lea.vmem %s4, %s886
      // Predicated region
      $region37: #{cross_prompt_t5_forward.9} parent=35 // pred_check
        %p888 = pneg %p122
      $region38: #{cross_prompt_t5_forward.9} parent=35 // pred_check_branch
        %890 = sbr.rel (%p888) target = $region40
      $region39: #{cross_prompt_t5_forward.9} parent=35 // pred_region
        _
      $region40: #{cross_prompt_t5_forward.9} parent=35 // pred_fallthru
        _
    $region36: #{cross_prompt_t5_forward.9} parent=5 // pred_fallthru
      _
    %p891 = scmp.le.s32.totalorder 2, %s10
    // Predicated region
    $region41: #{cross_prompt_t5_forward.9} parent=5 // pred_check
      %p892 = pneg %p891
    $region42: #{cross_prompt_t5_forward.9} parent=5 // pred_check_branch
      %894 = sbr.rel (%p892) target = $region44
    $region43: #{cross_prompt_t5_forward.9} parent=5 // pred_region
      %s895 = ssub.s32 %s10, 2
      // Predicated region
      $region45: #{cross_prompt_t5_forward.9} parent=43 // pred_check
        %p896 = pneg %p128
      $region46: #{cross_prompt_t5_forward.9} parent=43 // pred_check_branch
        %898 = sbr.rel (%p896) target = $region48
      $region47: #{cross_prompt_t5_forward.9} parent=43 // pred_region
        %p899 = scmp.lt.s32.totalorder %s16, 1
        %s900 = scalar_select %p899, %s16, 1
        %s901 = smul.addr %s900, 2
        %s902 = smul.addr %s901, 8
        %s903 = scalar_lea.vmem %s4, %s902
      $region48: #{cross_prompt_t5_forward.9} parent=43 // pred_fallthru
        _
    $region44: #{cross_prompt_t5_forward.9} parent=5 // pred_fallthru
      _
  $region6: #{cross_prompt_t5_forward.9} parent=0 // loop_footer
    %s14 = sadd.s32 1, %s10
  $region7: #{cross_prompt_t5_forward.9} parent=0 // loop_footer_branch
    %9 = sbr.rel target = $region3
  $region8: #{cross_prompt_t5_forward.9} parent=0 // loop_exit
    _

// kernel: cross_prompt_t5_forward.11
$region0: #{cross_prompt_t5_forward.11}
  #allocation0 [shape = 'u32[]', space=smem, size = 0x4, offset = 0x4, fixed_abs, tag = 'smem constant byte address 0x4 - core index']
  #allocation1 [shape = 'u32[144,128]{1,0:T(1,128)}', space=vmem, size = 0x12000, scoped, tag = 'internal scratch']
  %s0 = inlined_call_operand.vmem [shape: f32[2,12,32], index: 0, kind: input, shape index: {}]
  %s1 = inlined_call_operand.vmem [shape: f32[1,32], index: 1, kind: input, shape index: {}]
  %s2 = inlined_call_operand.vmem [shape: bf16[32,96], index: 2, kind: input, shape index: {}]
  %s3 = inlined_call_operand.vmem [shape: bf16[32,32], index: 3, kind: input, shape index: {}]
  %s4 = inlined_call_operand.vmem [shape: f32[2,12,32], index: 4, kind: output, shape index: {}]
  %s5 = sld [smem:[#allocation0]]
  $region49: #{cross_prompt_t5_forward.11} parent=0
    _
  %s7 = ssub.s32 1, %s5
  %s8 = scalar_select 0, %s7, %s5
  loop: start=0, step=1, limit=4
  $region2: #{cross_prompt_t5_forward.11} parent=0 // loop_pre_header
    _
  $region3: #{cross_prompt_t5_forward.11} parent=0 // loop_header
    %s10 = sphi 0, %s14
    %p11 = scmp.ge.s32.totalorder %s10, 4
    %s20 = sphi 0, %s22
    %s23 = sphi 0, %s20
    %s24 = sphi 0, %s23
    %s40 = sphi 0, %s24
    %s44 = sphi 0, %s44
    %s46 = sphi 0, %s44
    %s47 = sphi 0, %s46
    %s61 = sphi 0, %s47
    %s65 = sphi 0, %s65
    %s67 = sphi 0, %s65
    %s68 = sphi 0, %s67
    %s82 = sphi 0, %s68
    %s86 = sphi 0, %s86
    %s88 = sphi 0, %s86
    %s89 = sphi 0, %s88
    %s103 = sphi 0, %s89
    %s109 = sphi 0, %s111
    %s112 = sphi 0, %s109
    %s113 = sphi 0, %s112
    %s129 = sphi 0, %s113
  $region4: #{cross_prompt_t5_forward.11} parent=0 // loop_header_branch
    %13 = sbr.rel (%p11) target = $region8
  $region5: #{cross_prompt_t5_forward.11} parent=0 // loop_body
    %s15 = ssub.s32 %s10, 1
    %s16 = ssub.s32 %s10, 2
    %s17 = sadd.s32 %s10, 1
    %s18 = ssub.s32 %s10, %s17
    %p19 = scmp.eq.s32.totalorder %s18, 0
    %s21 = sadd.s32 %s20, 1
    %s22 = scalar_select %p19, %s20, %s21
    %p25 = pneg %p19
    %p26 = scmp.eq.s32.totalorder %s10, 1
    %p27 = por %p25, %p26
    %p28 = scmp.ne.s32.totalorder %s20, %s23
    %p29 = scmp.eq.s32.totalorder %s10, 0
    %p30 = por %p28, %p29
    %p31 = scmp.ne.s32.totalorder %s20, %s23
    %p32 = scmp.eq.s32.totalorder %s15, 1
    %p33 = por %p31, %p32
    %p34 = scmp.ne.s32.totalorder %s23, %s24
    %p35 = scmp.eq.s32.totalorder %s15, 0
    %p36 = por %p34, %p35
    %p37 = scmp.ne.s32.totalorder %s23, %s24
    %p38 = scmp.eq.s32.totalorder %s16, 1
    %p39 = por %p37, %p38
    %p41 = scmp.ne.s32.totalorder %s24, %s40
    %p42 = scmp.eq.s32.totalorder %s16, 0
    %p43 = por %p41, %p42
    %s45 = sadd.s32 %s44, 1
    %p48 = scmp.eq.s32.totalorder %s10, 1
    %p49 = scmp.ne.s32.totalorder %s44, %s46
    %p50 = scmp.eq.s32.totalorder %s10, 0
    %p51 = por %p49, %p50
    %p52 = scmp.ne.s32.totalorder %s44, %s46
    %p53 = scmp.eq.s32.totalorder %s15, 1
    %p54 = por %p52, %p53
    %p55 = scmp.ne.s32.totalorder %s46, %s47
    %p56 = scmp.eq.s32.totalorder %s15, 0
    %p57 = por %p55, %p56
    %p58 = scmp.ne.s32.totalorder %s46, %s47
    %p59 = scmp.eq.s32.totalorder %s16, 1
    %p60 = por %p58, %p59
    %p62 = scmp.ne.s32.totalorder %s47, %s61
    %p63 = scmp.eq.s32.totalorder %s16, 0
    %p64 = por %p62, %p63
    %s66 = sadd.s32 %s65, 1
    %p69 = scmp.eq.s32.totalorder %s10, 1
    %p70 = scmp.ne.s32.totalorder %s65, %s67
    %p71 = scmp.eq.s32.totalorder %s10, 0
    %p72 = por %p70, %p71
    %p73 = scmp.ne.s32.totalorder %s65, %s67
    %p74 = scmp.eq.s32.totalorder %s15, 1
    %p75 = por %p73, %p74
    %p76 = scmp.ne.s32.totalorder %s67, %s68
    %p77 = scmp.eq.s32.totalorder %s15, 0
    %p78 = por %p76, %p77
    %p79 = scmp.ne.s32.totalorder %s67, %s68
    %p80 = scmp.eq.s32.totalorder %s16, 1
    %p81 = por %p79, %p80
    %p83 = scmp.ne.s32.totalorder %s68, %s82
    %p84 = scmp.eq.s32.totalorder %s16, 0
    %p85 = por %p83, %p84
    %s87 = sadd.s32 %s86, 1
    %p90 = scmp.eq.s32.totalorder %s10, 1
    %p91 = scmp.ne.s32.totalorder %s86, %s88
    %p92 = scmp.eq.s32.totalorder %s10, 0
    %p93 = por %p91, %p92
    %p94 = scmp.ne.s32.totalorder %s86, %s88
    %p95 = scmp.eq.s32.totalorder %s15, 1
    %p96 = por %p94, %p95
    %p97 = scmp.ne.s32.totalorder %s88, %s89
    %p98 = scmp.eq.s32.totalorder %s15, 0
    %p99 = por %p97, %p98
    %p100 = scmp.ne.s32.totalorder %s88, %s89
    %p101 = scmp.eq.s32.totalorder %s16, 1
    %p102 = por %p100, %p101
    %p104 = scmp.ne.s32.totalorder %s89, %s103
    %p105 = scmp.eq.s32.totalorder %s16, 0
    %p106 = por %p104, %p105
    %s107 = ssub.s32 %s10, %s17
    %p108 = scmp.eq.s32.totalorder %s107, 0
    %s110 = sadd.s32 %s109, 1
    %s111 = scalar_select %p108, %s109, %s110
    %p114 = pneg %p108
    %p115 = scmp.eq.s32.totalorder %s10, 1
    %p116 = por %p114, %p115
    %p117 = scmp.ne.s32.totalorder %s109, %s112
    %p118 = scmp.eq.s32.totalorder %s10, 0
    %p119 = por %p117, %p118
    %p120 = scmp.ne.s32.totalorder %s109, %s112
    %p121 = scmp.eq.s32.totalorder %s15, 1
    %p122 = por %p120, %p121
    %p123 = scmp.ne.s32.totalorder %s112, %s113
    %p124 = scmp.eq.s32.totalorder %s15, 0
    %p125 = por %p123, %p124
    %p126 = scmp.ne.s32.totalorder %s112, %s113
    %p127 = scmp.eq.s32.totalorder %s16, 1
    %p128 = por %p126, %p127
    %p130 = scmp.ne.s32.totalorder %s113, %s129
    %p131 = scmp.eq.s32.totalorder %s16, 0
    %p132 = por %p130, %p131
    %p133 = scmp.le.s32.totalorder 1, %s10
    %p134 = scmp.lt.s32.totalorder %s10, 3
    %p135 = pnand %p133, %p134
    %p136 = pneg %p135
    // Predicated region
    $region9: #{cross_prompt_t5_forward.11} parent=5 // pred_check
      _
    $region10: #{cross_prompt_t5_forward.11} parent=5 // pred_check_branch
      %138 = sbr.rel (%p135) target = $region12
    $region11: #{cross_prompt_t5_forward.11} parent=5 // pred_region
      %s139 = ssub.s32 %s10, 1
      // Predicated region
      $region13: #{cross_prompt_t5_forward.11} parent=11 // pred_check
        %p140 = pneg %p57
      $region14: #{cross_prompt_t5_forward.11} parent=11 // pred_check_branch
        %142 = sbr.rel (%p140) target = $region16
      $region15: #{cross_prompt_t5_forward.11} parent=11 // pred_region
        _
      $region16: #{cross_prompt_t5_forward.11} parent=11 // pred_fallthru
        _
      // Predicated region
      $region17: #{cross_prompt_t5_forward.11} parent=11 // pred_check
        %p143 = pneg %p78
      $region18: #{cross_prompt_t5_forward.11} parent=11 // pred_check_branch
        %145 = sbr.rel (%p143) target = $region20
      $region19: #{cross_prompt_t5_forward.11} parent=11 // pred_region
        _
      $region20: #{cross_prompt_t5_forward.11} parent=11 // pred_fallthru
        _
      // Predicated region
      $region21: #{cross_prompt_t5_forward.11} parent=11 // pred_check
        %p146 = pneg %p99
      $region22: #{cross_prompt_t5_forward.11} parent=11 // pred_check_branch
        %148 = sbr.rel (%p146) target = $region24
      $region23: #{cross_prompt_t5_forward.11} parent=11 // pred_region
        _
      $region24: #{cross_prompt_t5_forward.11} parent=11 // pred_fallthru
        _
    $region12: #{cross_prompt_t5_forward.11} parent=5 // pred_fallthru
      _
    %p149 = scmp.lt.s32.totalorder %s10, 2
    // Predicated region
    $region25: #{cross_prompt_t5_forward.11} parent=5 // pred_check
      %p150 = pneg %p149
    $region26: #{cross_prompt_t5_forward.11} parent=5 // pred_check_branch
      %152 = sbr.rel (%p150) target = $region28
    $region27: #{cross_prompt_t5_forward.11} parent=5 // pred_region
      // Predicated region
      $region29: #{cross_prompt_t5_forward.11} parent=27 // pred_check
        %p153 = pneg %p30
      $region30: #{cross_prompt_t5_forward.11} parent=27 // pred_check_branch
        %155 = sbr.rel (%p153) target = $region32
      $region31: #{cross_prompt_t5_forward.11} parent=27 // pred_region
        %p156 = scmp.lt.s32.totalorder %s10, 1
        %s157 = scalar_select %p156, %s10, 1
        %s158 = smul.addr %s157, 2
        %s159 = smul.addr %s158, 8
        %s160 = scalar_lea.vmem %s0, %s159
      $region32: #{cross_prompt_t5_forward.11} parent=27 // pred_fallthru
        _
    $region28: #{cross_prompt_t5_forward.11} parent=5 // pred_fallthru
      _
    %p161 = scmp.le.s32.totalorder 1, %s10
    %p162 = scmp.lt.s32.totalorder %s10, 3
    %p163 = pnand %p161, %p162
    %p164 = pneg %p163
    // Predicated region
    $region33: #{cross_prompt_t5_forward.11} parent=5 // pred_check
      _
    $region34: #{cross_prompt_t5_forward.11} parent=5 // pred_check_branch
      %166 = sbr.rel (%p163) target = $region36
    $region35: #{cross_prompt_t5_forward.11} parent=5 // pred_region
      %s167 = ssub.s32 %s10, 1
      %p168 = scmp.lt.s32.totalorder %s15, 1
      %s169 = scalar_select %p168, %s15, 1
      %s170 = smul.addr %s169, 2
      %s171 = smul.addr %s170, 8
      %s172 = scalar_lea.vmem %s0, %s171
      %p173 = pneg %p36
      %p174 = pneg %p33
      %p175 = pneg %p57
      %p176 = pneg %p54
      %p177 = pneg %p78
      %p178 = pneg %p75
      %p179 = pneg %p99
      %p180 = pneg %p96
      %p181 = pneg %p125
      %p182 = pneg %p122
      %p183 = scmp.lt.s32.totalorder %s15, 1
      %s184 = scalar_select %p183, %s15, 1
      %s185 = smul.addr %s184, 2
      %s186 = smul.addr %s185, 8
      %s187 = scalar_lea.vmem %s4, %s186
      %p188 = scmp.lt.s32.totalorder %s15, 1
      %s189 = scalar_select %p188, %s15, 1
      %s190 = smul.addr %s189, 2
      %s191 = smul.addr %s190, 8
      %s192 = scalar_lea.vmem %s0, %s191
      %p193 = scmp.lt.s32.totalorder %s15, 1
      %s194 = scalar_select %p193, %s15, 1
      %s195 = smul.addr %s194, 2
      %s196 = smul.addr %s195, 8
      %s197 = scalar_lea.vmem %s4, %s196
      %v199 = vld [vmem:[%s192] sm:$0xff]
      %v200 = vld [vmem:[%s192 + $0x8] sm:$0xf]
      %v201 = vld [vmem:[%s1] sm:$0x1]
      %v202 = vmul.f32 %v199, %v199
      %v203 = vmul.f32 %v200, %v200
      %vm204 = vcmask 261120
      %v205 = vsel %vm204, %v202, 0.0
      %206 = vadd.xlane.f32.xlu0 %v205
      %v207 = vpop.xlane.xlu0 %206
      %vm208 = vcmask 257024
      %v209 = vsel %vm208, %v203, 0.0
      %210 = vadd.xlane.f32.xlu0 %v209
      %v211 = vpop.xlane.xlu0 %210
      %v212 = vrcp.pop 32.0
      %v213 = vmul.f32 %v207, %v212
      %v214 = vmul.f32 %v211, %v212
      %v215 = vadd.f32 %v213, 1e-06
      %v216 = vadd.f32 %v214, 1e-06
      %v217 = vrsqrt.pop %v215
      %v218 = vrsqrt.pop %v216
      %v219 = vmul.f32 %v199, %v217
      %v220 = vmul.f32 %v200, %v218
      %v222 = vlaneseq
      %v223 = vshrl.u32 %v222, 7
      %v224 = vsub.s32 0, %v223
      %v225 = vrot.slane %v201, %v224
      %v227 = vmul.f32 %v219, %v225
      %v228 = vmul.f32 %v220, %v225
      %v229 = vpack.c.bf16 %v228, %v227
      %v230 = vld [vmem:[%s2] sm:$0xf]
      %v231 = vld [vmem:[%s2 + $0x4] sm:$0xf]
      %v232 = vld [vmem:[%s2 + $0x8] sm:$0xf]
      %v233 = vld [vmem:[%s2 + $0xc] sm:$0xf]
      %v238 = vunpack.c.l.b16 %v230
      %v239 = vunpack.c.l.b16 %v231
      %v240 = vunpack.c.l.b16 %v232
      %v241 = vunpack.c.l.b16 %v233
      %v242 = vpack.c.b16 %v239, %v238
      %v243 = vpack.c.b16 %v241, %v240
      %v247 = vsel %vm204, %v229, 0
      %249 = vmatprep.subr.bf16.mxu0 0
      %250 = vmatpush1.bf16.msra.mxu0 %v242
      %251 = vmatprep.subr.bf16.mxu0 0
      %252 = vmatpush1.bf16.msra.mxu0 %v243
      %253 = vmatprep.subr.bf16.mxu0 0
      %254 = vmatpush1.bf16.msra.mxu0 0
      %255 = vmatprep.subr.bf16.mxu0 0
      %256 = vmatpush1.bf16.msra.mxu0 0
      %257 = vmatprep.subr.bf16.mxu0 0
      %258 = vmatpush1.bf16.msra.mxu0 0
      %259 = vmatprep.subr.bf16.mxu0 0
      %260 = vmatpush1.bf16.msra.mxu0 0
      %261 = vmatprep.subr.bf16.mxu0 0
      %262 = vmatpush1.bf16.msra.mxu0 0
      %263 = vmatprep.subr.bf16.mxu0 0
      %264 = vmatpush1.bf16.msra.mxu0 0
      %265 = vmatprep.subr.bf16.mxu0 0
      %266 = vmatpush1.bf16.msra.mxu0 0
      %267 = vmatprep.subr.bf16.mxu0 0
      %268 = vmatpush1.bf16.msra.mxu0 0
      %269 = vmatprep.subr.bf16.mxu0 0
      %270 = vmatpush1.bf16.msra.mxu0 0
      %271 = vmatprep.subr.bf16.mxu0 0
      %272 = vmatpush1.bf16.msra.mxu0 0
      %273 = vmatprep.subr.bf16.mxu0 0
      %274 = vmatpush1.bf16.msra.mxu0 0
      %275 = vmatprep.subr.bf16.mxu0 0
      %276 = vmatpush1.bf16.msra.mxu0 0
      %277 = vmatprep.subr.bf16.mxu0 0
      %278 = vmatpush1.bf16.msra.mxu0 0
      %279 = vmatprep.subr.bf16.mxu0 0
      %280 = vmatpush1.bf16.msra.mxu0 0
      %281 = vmatprep.mubr.bf16.mxu0 0
      %282 = vmatmul.mubr.bf16.gmra.mrb[0].mxu0 %v247
      %v283 = vpop.f32.mrb[0].mxu0
      %v284 = vadd.f32 0.0, %v283
      %v285 = vpop.f32.mrb[0].mxu0
      %v286 = vpop.f32.mrb[0].mxu0
      %v287 = vadd.f32 0.0, %v286
      %v288 = vpop.f32.mrb[0].mxu0
      %289 = vdwg.mxu0
      %v290 = vpack.c.bf16 %v287, %v284
      %v291 = vlaneseq
      %v292 = vshrl.u32 %v291, 7
      %v293 = vadd.s32 %v292, 8
      %v294 = vlaneseq
      %v295 = vand.u32 %v294, 127
      %vm296 = vcmp.gt.s32.totalorder %v295, %v292
      %vm297 = vcmp.gt.s32.totalorder %v295, %v293
      %v298 = vsel %vm296, -1e+09, 0.0
      %v299 = vsel %vm297, -1e+09, 0.0
      %301 = vrot.lane.b32.xlu0 %v290, 96
      %v302 = vpop.permute.xlu0 %301
      %vm303 = vcmask 64512
      %v305 = vsel %vm303, %v290, 0
      %v308 = vsel %vm303, %v302, 0
      %310 = vmatprep.subr.bf16.mxu0 0
      %311 = vmatpush1.bf16.xpose.msra.mxu0 %v308
      %312 = vmatprep.subr.bf16.mxu0 0
      %313 = vmatpush1.bf16.xpose.msra.mxu0 0
      %314 = vmatprep.subr.bf16.mxu0 0
      %315 = vmatpush1.bf16.xpose.msra.mxu0 0
      %316 = vmatprep.subr.bf16.mxu0 0
      %317 = vmatpush1.bf16.xpose.msra.mxu0 0
      %318 = vmatprep.subr.bf16.mxu0 0
      %319 = vmatpush1.bf16.xpose.msra.mxu0 0
      %320 = vmatprep.subr.bf16.mxu0 0
      %321 = vmatpush1.bf16.xpose.msra.mxu0 0
      %322 = vmatprep.subr.bf16.mxu0 0
      %323 = vmatpush1.bf16.xpose.msra.mxu0 0
      %324 = vmatprep.subr.bf16.mxu0 0
      %325 = vmatpush1.bf16.xpose.msra.mxu0 0
      %326 = vmatprep.subr.bf16.mxu0 0
      %327 = vmatpush1.bf16.xpose.msra.mxu0 0
      %328 = vmatprep.subr.bf16.mxu0 0
      %329 = vmatpush1.bf16.xpose.msra.mxu0 0
      %330 = vmatprep.subr.bf16.mxu0 0
      %331 = vmatpush1.bf16.xpose.msra.mxu0 0
      %332 = vmatprep.subr.bf16.mxu0 0
      %333 = vmatpush1.bf16.xpose.msra.mxu0 0
      %334 = vmatprep.subr.bf16.mxu0 0
      %335 = vmatpush1.bf16.xpose.msra.mxu0 0
      %336 = vmatprep.subr.bf16.mxu0 0
      %337 = vmatpush1.bf16.xpose.msra.mxu0 0
      %338 = vmatprep.subr.bf16.mxu0 0
      %339 = vmatpush1.bf16.xpose.msra.mxu0 0
      %340 = vmatprep.subr.bf16.mxu0 0
      %341 = vmatpush1.bf16.xpose.msra.mxu0 0
      %342 = vmatprep.mubr.bf16.mxu0 0
      %343 = vmatmul.mubr.bf16.gmra.mrb[0].mxu0 %v305
      %v344 = vpop.f32.mrb[0].mxu0
      %v345 = vadd.f32 %v298, %v344
      %v346 = vpop.f32.mrb[0].mxu0
      %v347 = vpop.f32.mrb[0].mxu0
      %v348 = vadd.f32 %v299, %v347
      %v349 = vpop.f32.mrb[0].mxu0
      %350 = vdwg.mxu0
      %vm351 = vcmask 97280
      %v352 = vsel %vm351, %v345, -inf
      %353 = vmax.xlane.f32.xlu0 %v352
      %v354 = vpop.xlane.xlu0 %353
      %vm355 = vcmask 93184
      %v356 = vsel %vm355, %v348, -inf
      %357 = vmax.xlane.f32.xlu0 %v356
      %v358 = vpop.xlane.xlu0 %357
      %v359 = vsub.f32 %v345, %v354
      %v360 = vsub.f32 %v348, %v358
      %v361 = vmul.f32 %v359, 1.442695
      %v362 = vpow.pop %v361
      %v363 = vmul.f32 %v360, 1.442695
      %v364 = vpow.pop %v363
      %v365 = vsel %vm351, %v362, 0.0
      %366 = vadd.xlane.f32.xlu0 %v365
      %v367 = vpop.xlane.xlu0 %366
      %v368 = vsel %vm355, %v364, 0.0
      %369 = vadd.xlane.f32.xlu0 %v368
      %v370 = vpop.xlane.xlu0 %369
      %v371 = vrcp.pop %v367
      %v372 = vrcp.pop %v370
      %v373 = vpack.c.bf16 %v364, %v362
      %374 = vrot.lane.b32.xlu0 %v290, 64
      %v375 = vpop.permute.xlu0 %374
      %v377 = vsel %vm351, %v373, 0
      %vm379 = vcmask 1045504
      %v381 = vsel %vm379, %v375, 0
      %383 = vmatprep.subr.bf16.mxu0 0
      %384 = vmatpush1.bf16.msra.mxu0 %v381
      %385 = vmatprep.subr.bf16.mxu0 0
      %386 = vmatpush1.bf16.msra.mxu0 0
      %387 = vmatprep.subr.bf16.mxu0 0
      %388 = vmatpush1.bf16.msra.mxu0 0
      %389 = vmatprep.subr.bf16.mxu0 0
      %390 = vmatpush1.bf16.msra.mxu0 0
      %391 = vmatprep.subr.bf16.mxu0 0
      %392 = vmatpush1.bf16.msra.mxu0 0
      %393 = vmatprep.subr.bf16.mxu0 0
      %394 = vmatpush1.bf16.msra.mxu0 0
      %395 = vmatprep.subr.bf16.mxu0 0
      %396 = vmatpush1.bf16.msra.mxu0 0
      %397 = vmatprep.subr.bf16.mxu0 0
      %398 = vmatpush1.bf16.msra.mxu0 0
      %399 = vmatprep.subr.bf16.mxu0 0
      %400 = vmatpush1.bf16.msra.mxu0 0
      %401 = vmatprep.subr.bf16.mxu0 0
      %402 = vmatpush1.bf16.msra.mxu0 0
      %403 = vmatprep.subr.bf16.mxu0 0
      %404 = vmatpush1.bf16.msra.mxu0 0
      %405 = vmatprep.subr.bf16.mxu0 0
      %406 = vmatpush1.bf16.msra.mxu0 0
      %407 = vmatprep.subr.bf16.mxu0 0
      %408 = vmatpush1.bf16.msra.mxu0 0
      %409 = vmatprep.subr.bf16.mxu0 0
      %410 = vmatpush1.bf16.msra.mxu0 0
      %411 = vmatprep.subr.bf16.mxu0 0
      %412 = vmatpush1.bf16.msra.mxu0 0
      %413 = vmatprep.subr.bf16.mxu0 0
      %414 = vmatpush1.bf16.msra.mxu0 0
      %415 = vmatprep.mubr.bf16.mxu0 0
      %416 = vmatmul.mubr.bf16.gmra.mrb[0].mxu0 %v377
      %v417 = vpop.f32.mrb[0].mxu0
      %v418 = vadd.f32 0.0, %v417
      %v419 = vpop.f32.mrb[0].mxu0
      %v420 = vpop.f32.mrb[0].mxu0
      %v421 = vadd.f32 0.0, %v420
      %v422 = vpop.f32.mrb[0].mxu0
      %423 = vdwg.mxu0
      %v424 = vmul.f32 %v418, %v371
      %v425 = vmul.f32 %v421, %v372
      %426 = vrot.lane.b32.xlu0 %v290, 120
      %v427 = vpop.permute.xlu0 %426
      %428 = vrot.lane.b32.xlu0 %v290, 88
      %v429 = vpop.permute.xlu0 %428
      %v431 = vsel %vm303, %v427, 0
      %v434 = vsel %vm303, %v429, 0
      %436 = vmatprep.subr.bf16.mxu0 0
      %437 = vmatpush1.bf16.xpose.msra.mxu0 %v434
      %438 = vmatprep.subr.bf16.mxu0 0
      %439 = vmatpush1.bf16.xpose.msra.mxu0 0
      %440 = vmatprep.subr.bf16.mxu0 0
      %441 = vmatpush1.bf16.xpose.msra.mxu0 0
      %442 = vmatprep.subr.bf16.mxu0 0
      %443 = vmatpush1.bf16.xpose.msra.mxu0 0
      %444 = vmatprep.subr.bf16.mxu0 0
      %445 = vmatpush1.bf16.xpose.msra.mxu0 0
      %446 = vmatprep.subr.bf16.mxu0 0
      %447 = vmatpush1.bf16.xpose.msra.mxu0 0
      %448 = vmatprep.subr.bf16.mxu0 0
      %449 = vmatpush1.bf16.xpose.msra.mxu0 0
      %450 = vmatprep.subr.bf16.mxu0 0
      %451 = vmatpush1.bf16.xpose.msra.mxu0 0
      %452 = vmatprep.subr.bf16.mxu0 0
      %453 = vmatpush1.bf16.xpose.msra.mxu0 0
      %454 = vmatprep.subr.bf16.mxu0 0
      %455 = vmatpush1.bf16.xpose.msra.mxu0 0
      %456 = vmatprep.subr.bf16.mxu0 0
      %457 = vmatpush1.bf16.xpose.msra.mxu0 0
      %458 = vmatprep.subr.bf16.mxu0 0
      %459 = vmatpush1.bf16.xpose.msra.mxu0 0
      %460 = vmatprep.subr.bf16.mxu0 0
      %461 = vmatpush1.bf16.xpose.msra.mxu0 0
      %462 = vmatprep.subr.bf16.mxu0 0
      %463 = vmatpush1.bf16.xpose.msra.mxu0 0
      %464 = vmatprep.subr.bf16.mxu0 0
      %465 = vmatpush1.bf16.xpose.msra.mxu0 0
      %466 = vmatprep.subr.bf16.mxu0 0
      %467 = vmatpush1.bf16.xpose.msra.mxu0 0
      %468 = vmatprep.mubr.bf16.mxu0 0
      %469 = vmatmul.mubr.bf16.gmra.mrb[0].mxu0 %v431
      %v470 = vpop.f32.mrb[0].mxu0
      %v471 = vadd.f32 %v298, %v470
      %v472 = vpop.f32.mrb[0].mxu0
      %v473 = vpop.f32.mrb[0].mxu0
      %v474 = vadd.f32 %v299, %v473
      %v475 = vpop.f32.mrb[0].mxu0
      %476 = vdwg.mxu0
      %v477 = vsel %vm351, %v471, -inf
      %478 = vmax.xlane.f32.xlu0 %v477
      %v479 = vpop.xlane.xlu0 %478
      %v480 = vsel %vm355, %v474, -inf
      %481 = vmax.xlane.f32.xlu0 %v480
      %v482 = vpop.xlane.xlu0 %481
      %v483 = vsub.f32 %v471, %v479
      %v484 = vsub.f32 %v474, %v482
      %v485 = vmul.f32 %v483, 1.442695
      %v486 = vpow.pop %v485
      %v487 = vmul.f32 %v484, 1.442695
      %v488 = vpow.pop %v487
      %v489 = vsel %vm351, %v486, 0.0
      %490 = vadd.xlane.f32.xlu0 %v489
      %v491 = vpop.xlane.xlu0 %490
      %v492 = vsel %vm355, %v488, 0.0
      %493 = vadd.xlane.f32.xlu0 %v492
      %v494 = vpop.xlane.xlu0 %493
      %v495 = vrcp.pop %v491
      %v496 = vrcp.pop %v494
      %v497 = vpack.c.bf16 %v488, %v486
      %498 = vrot.lane.b32.xlu0 %v290, 56
      %v499 = vpop.permute.xlu0 %498
      %v501 = vsel %vm351, %v497, 0
      %v504 = vsel %vm379, %v499, 0
      %506 = vmatprep.subr.bf16.mxu0 0
      %507 = vmatpush1.bf16.msra.mxu0 %v504
      %508 = vmatprep.subr.bf16.mxu0 0
      %509 = vmatpush1.bf16.msra.mxu0 0
      %510 = vmatprep.subr.bf16.mxu0 0
      %511 = vmatpush1.bf16.msra.mxu0 0
      %512 = vmatprep.subr.bf16.mxu0 0
      %513 = vmatpush1.bf16.msra.mxu0 0
      %514 = vmatprep.subr.bf16.mxu0 0
      %515 = vmatpush1.bf16.msra.mxu0 0
      %516 = vmatprep.subr.bf16.mxu0 0
      %517 = vmatpush1.bf16.msra.mxu0 0
      %518 = vmatprep.subr.bf16.mxu0 0
      %519 = vmatpush1.bf16.msra.mxu0 0
      %520 = vmatprep.subr.bf16.mxu0 0
      %521 = vmatpush1.bf16.msra.mxu0 0
      %522 = vmatprep.subr.bf16.mxu0 0
      %523 = vmatpush1.bf16.msra.mxu0 0
      %524 = vmatprep.subr.bf16.mxu0 0
      %525 = vmatpush1.bf16.msra.mxu0 0
      %526 = vmatprep.subr.bf16.mxu0 0
      %527 = vmatpush1.bf16.msra.mxu0 0
      %528 = vmatprep.subr.bf16.mxu0 0
      %529 = vmatpush1.bf16.msra.mxu0 0
      %530 = vmatprep.subr.bf16.mxu0 0
      %531 = vmatpush1.bf16.msra.mxu0 0
      %532 = vmatprep.subr.bf16.mxu0 0
      %533 = vmatpush1.bf16.msra.mxu0 0
      %534 = vmatprep.subr.bf16.mxu0 0
      %535 = vmatpush1.bf16.msra.mxu0 0
      %536 = vmatprep.subr.bf16.mxu0 0
      %537 = vmatpush1.bf16.msra.mxu0 0
      %538 = vmatprep.mubr.bf16.mxu0 0
      %539 = vmatmul.mubr.bf16.gmra.mrb[0].mxu0 %v501
      %v540 = vpop.f32.mrb[0].mxu0
      %v541 = vadd.f32 0.0, %v540
      %v542 = vpop.f32.mrb[0].mxu0
      %v543 = vpop.f32.mrb[0].mxu0
      %v544 = vadd.f32 0.0, %v543
      %v545 = vpop.f32.mrb[0].mxu0
      %546 = vdwg.mxu0
      %v547 = vmul.f32 %v541, %v495
      %v548 = vmul.f32 %v544, %v496
      %549 = vrot.lane.b32.xlu0 %v290, 112
      %v550 = vpop.permute.xlu0 %549
      %551 = vrot.lane.b32.xlu0 %v290, 80
      %v552 = vpop.permute.xlu0 %551
      %v554 = vsel %vm303, %v550, 0
      %v557 = vsel %vm303, %v552, 0
      %559 = vmatprep.subr.bf16.mxu0 0
      %560 = vmatpush1.bf16.xpose.msra.mxu0 %v557
      %561 = vmatprep.subr.bf16.mxu0 0
      %562 = vmatpush1.bf16.xpose.msra.mxu0 0
      %563 = vmatprep.subr.bf16.mxu0 0
      %564 = vmatpush1.bf16.xpose.msra.mxu0 0
      %565 = vmatprep.subr.bf16.mxu0 0
      %566 = vmatpush1.bf16.xpose.msra.mxu0 0
      %567 = vmatprep.subr.bf16.mxu0 0
      %568 = vmatpush1.bf16.xpose.msra.mxu0 0
      %569 = vmatprep.subr.bf16.mxu0 0
      %570 = vmatpush1.bf16.xpose.msra.mxu0 0
      %571 = vmatprep.subr.bf16.mxu0 0
      %572 = vmatpush1.bf16.xpose.msra.mxu0 0
      %573 = vmatprep.subr.bf16.mxu0 0
      %574 = vmatpush1.bf16.xpose.msra.mxu0 0
      %575 = vmatprep.subr.bf16.mxu0 0
      %576 = vmatpush1.bf16.xpose.msra.mxu0 0
      %577 = vmatprep.subr.bf16.mxu0 0
      %578 = vmatpush1.bf16.xpose.msra.mxu0 0
      %579 = vmatprep.subr.bf16.mxu0 0
      %580 = vmatpush1.bf16.xpose.msra.mxu0 0
      %581 = vmatprep.subr.bf16.mxu0 0
      %582 = vmatpush1.bf16.xpose.msra.mxu0 0
      %583 = vmatprep.subr.bf16.mxu0 0
      %584 = vmatpush1.bf16.xpose.msra.mxu0 0
      %585 = vmatprep.subr.bf16.mxu0 0
      %586 = vmatpush1.bf16.xpose.msra.mxu0 0
      %587 = vmatprep.subr.bf16.mxu0 0
      %588 = vmatpush1.bf16.xpose.msra.mxu0 0
      %589 = vmatprep.subr.bf16.mxu0 0
      %590 = vmatpush1.bf16.xpose.msra.mxu0 0
      %591 = vmatprep.mubr.bf16.mxu0 0
      %592 = vmatmul.mubr.bf16.gmra.mrb[0].mxu0 %v554
      %v593 = vpop.f32.mrb[0].mxu0
      %v594 = vadd.f32 %v298, %v593
      %v595 = vpop.f32.mrb[0].mxu0
      %v596 = vpop.f32.mrb[0].mxu0
      %v597 = vadd.f32 %v299, %v596
      %v598 = vpop.f32.mrb[0].mxu0
      %599 = vdwg.mxu0
      %v600 = vsel %vm351, %v594, -inf
      %601 = vmax.xlane.f32.xlu0 %v600
      %v602 = vpop.xlane.xlu0 %601
      %v603 = vsel %vm355, %v597, -inf
      %604 = vmax.xlane.f32.xlu0 %v603
      %v605 = vpop.xlane.xlu0 %604
      %v606 = vsub.f32 %v594, %v602
      %v607 = vsub.f32 %v597, %v605
      %v608 = vmul.f32 %v606, 1.442695
      %v609 = vpow.pop %v608
      %v610 = vmul.f32 %v607, 1.442695
      %v611 = vpow.pop %v610
      %v612 = vsel %vm351, %v609, 0.0
      %613 = vadd.xlane.f32.xlu0 %v612
      %v614 = vpop.xlane.xlu0 %613
      %v615 = vsel %vm355, %v611, 0.0
      %616 = vadd.xlane.f32.xlu0 %v615
      %v617 = vpop.xlane.xlu0 %616
      %v618 = vrcp.pop %v614
      %v619 = vrcp.pop %v617
      %v620 = vpack.c.bf16 %v611, %v609
      %621 = vrot.lane.b32.xlu0 %v290, 48
      %v622 = vpop.permute.xlu0 %621
      %v624 = vsel %vm351, %v620, 0
      %v627 = vsel %vm379, %v622, 0
      %629 = vmatprep.subr.bf16.mxu0 0
      %630 = vmatpush1.bf16.msra.mxu0 %v627
      %631 = vmatprep.subr.bf16.mxu0 0
      %632 = vmatpush1.bf16.msra.mxu0 0
      %633 = vmatprep.subr.bf16.mxu0 0
      %634 = vmatpush1.bf16.msra.mxu0 0
      %635 = vmatprep.subr.bf16.mxu0 0
      %636 = vmatpush1.bf16.msra.mxu0 0
      %637 = vmatprep.subr.bf16.mxu0 0
      %638 = vmatpush1.bf16.msra.mxu0 0
      %639 = vmatprep.subr.bf16.mxu0 0
      %640 = vmatpush1.bf16.msra.mxu0 0
      %641 = vmatprep.subr.bf16.mxu0 0
      %642 = vmatpush1.bf16.msra.mxu0 0
      %643 = vmatprep.subr.bf16.mxu0 0
      %644 = vmatpush1.bf16.msra.mxu0 0
      %645 = vmatprep.subr.bf16.mxu0 0
      %646 = vmatpush1.bf16.msra.mxu0 0
      %647 = vmatprep.subr.bf16.mxu0 0
      %648 = vmatpush1.bf16.msra.mxu0 0
      %649 = vmatprep.subr.bf16.mxu0 0
      %650 = vmatpush1.bf16.msra.mxu0 0
      %651 = vmatprep.subr.bf16.mxu0 0
      %652 = vmatpush1.bf16.msra.mxu0 0
      %653 = vmatprep.subr.bf16.mxu0 0
      %654 = vmatpush1.bf16.msra.mxu0 0
      %655 = vmatprep.subr.bf16.mxu0 0
      %656 = vmatpush1.bf16.msra.mxu0 0
      %657 = vmatprep.subr.bf16.mxu0 0
      %658 = vmatpush1.bf16.msra.mxu0 0
      %659 = vmatprep.subr.bf16.mxu0 0
      %660 = vmatpush1.bf16.msra.mxu0 0
      %661 = vmatprep.mubr.bf16.mxu0 0
      %662 = vmatmul.mubr.bf16.gmra.mrb[0].mxu0 %v624
      %v663 = vpop.f32.mrb[0].mxu0
      %v664 = vadd.f32 0.0, %v663
      %v665 = vpop.f32.mrb[0].mxu0
      %v666 = vpop.f32.mrb[0].mxu0
      %v667 = vadd.f32 0.0, %v666
      %v668 = vpop.f32.mrb[0].mxu0
      %669 = vdwg.mxu0
      %v670 = vmul.f32 %v664, %v618
      %v671 = vmul.f32 %v667, %v619
      %672 = vrot.lane.b32.xlu0 %v290, 104
      %v673 = vpop.permute.xlu0 %672
      %674 = vrot.lane.b32.xlu0 %v290, 72
      %v675 = vpop.permute.xlu0 %674
      %v677 = vsel %vm303, %v673, 0
      %v680 = vsel %vm303, %v675, 0
      %682 = vmatprep.subr.bf16.mxu0 0
      %683 = vmatpush1.bf16.xpose.msra.mxu0 %v680
      %684 = vmatprep.subr.bf16.mxu0 0
      %685 = vmatpush1.bf16.xpose.msra.mxu0 0
      %686 = vmatprep.subr.bf16.mxu0 0
      %687 = vmatpush1.bf16.xpose.msra.mxu0 0
      %688 = vmatprep.subr.bf16.mxu0 0
      %689 = vmatpush1.bf16.xpose.msra.mxu0 0
      %690 = vmatprep.subr.bf16.mxu0 0
      %691 = vmatpush1.bf16.xpose.msra.mxu0 0
      %692 = vmatprep.subr.bf16.mxu0 0
      %693 = vmatpush1.bf16.xpose.msra.mxu0 0
      %694 = vmatprep.subr.bf16.mxu0 0
      %695 = vmatpush1.bf16.xpose.msra.mxu0 0
      %696 = vmatprep.subr.bf16.mxu0 0
      %697 = vmatpush1.bf16.xpose.msra.mxu0 0
      %698 = vmatprep.subr.bf16.mxu0 0
      %699 = vmatpush1.bf16.xpose.msra.mxu0 0
      %700 = vmatprep.subr.bf16.mxu0 0
      %701 = vmatpush1.bf16.xpose.msra.mxu0 0
      %702 = vmatprep.subr.bf16.mxu0 0
      %703 = vmatpush1.bf16.xpose.msra.mxu0 0
      %704 = vmatprep.subr.bf16.mxu0 0
      %705 = vmatpush1.bf16.xpose.msra.mxu0 0
      %706 = vmatprep.subr.bf16.mxu0 0
      %707 = vmatpush1.bf16.xpose.msra.mxu0 0
      %708 = vmatprep.subr.bf16.mxu0 0
      %709 = vmatpush1.bf16.xpose.msra.mxu0 0
      %710 = vmatprep.subr.bf16.mxu0 0
      %711 = vmatpush1.bf16.xpose.msra.mxu0 0
      %712 = vmatprep.subr.bf16.mxu0 0
      %713 = vmatpush1.bf16.xpose.msra.mxu0 0
      %714 = vmatprep.mubr.bf16.mxu0 0
      %715 = vmatmul.mubr.bf16.gmra.mrb[0].mxu0 %v677
      %v716 = vpop.f32.mrb[0].mxu0
      %v717 = vadd.f32 %v298, %v716
      %v718 = vpop.f32.mrb[0].mxu0
      %v719 = vpop.f32.mrb[0].mxu0
      %v720 = vadd.f32 %v299, %v719
      %v721 = vpop.f32.mrb[0].mxu0
      %722 = vdwg.mxu0
      %v723 = vsel %vm351, %v717, -inf
      %724 = vmax.xlane.f32.xlu0 %v723
      %v725 = vpop.xlane.xlu0 %724
      %v726 = vsel %vm355, %v720, -inf
      %727 = vmax.xlane.f32.xlu0 %v726
      %v728 = vpop.xlane.xlu0 %727
      %v729 = vsub.f32 %v717, %v725
      %v730 = vsub.f32 %v720, %v728
      %v731 = vmul.f32 %v729, 1.442695
      %v732 = vpow.pop %v731
      %v733 = vmul.f32 %v730, 1.442695
      %v734 = vpow.pop %v733
      %v735 = vsel %vm351, %v732, 0.0
      %736 = vadd.xlane.f32.xlu0 %v735
      %v737 = vpop.xlane.xlu0 %736
      %v738 = vsel %vm355, %v734, 0.0
      %739 = vadd.xlane.f32.xlu0 %v738
      %v740 = vpop.xlane.xlu0 %739
      %v741 = vrcp.pop %v737
      %v742 = vrcp.pop %v740
      %v743 = vpack.c.bf16 %v734, %v732
      %744 = vrot.lane.b32.xlu0 %v290, 40
      %v745 = vpop.permute.xlu0 %744
      %v747 = vsel %vm351, %v743, 0
      %v750 = vsel %vm379, %v745, 0
      %752 = vmatprep.subr.bf16.mxu0 0
      %753 = vmatpush1.bf16.msra.mxu0 %v750
      %754 = vmatprep.subr.bf16.mxu0 0
      %755 = vmatpush1.bf16.msra.mxu0 0
      %756 = vmatprep.subr.bf16.mxu0 0
      %757 = vmatpush1.bf16.msra.mxu0 0
      %758 = vmatprep.subr.bf16.mxu0 0
      %759 = vmatpush1.bf16.msra.mxu0 0
      %760 = vmatprep.subr.bf16.mxu0 0
      %761 = vmatpush1.bf16.msra.mxu0 0
      %762 = vmatprep.subr.bf16.mxu0 0
      %763 = vmatpush1.bf16.msra.mxu0 0
      %764 = vmatprep.subr.bf16.mxu0 0
      %765 = vmatpush1.bf16.msra.mxu0 0
      %766 = vmatprep.subr.bf16.mxu0 0
      %767 = vmatpush1.bf16.msra.mxu0 0
      %768 = vmatprep.subr.bf16.mxu0 0
      %769 = vmatpush1.bf16.msra.mxu0 0
      %770 = vmatprep.subr.bf16.mxu0 0
      %771 = vmatpush1.bf16.msra.mxu0 0
      %772 = vmatprep.subr.bf16.mxu0 0
      %773 = vmatpush1.bf16.msra.mxu0 0
      %774 = vmatprep.subr.bf16.mxu0 0
      %775 = vmatpush1.bf16.msra.mxu0 0
      %776 = vmatprep.subr.bf16.mxu0 0
      %777 = vmatpush1.bf16.msra.mxu0 0
      %778 = vmatprep.subr.bf16.mxu0 0
      %779 = vmatpush1.bf16.msra.mxu0 0
      %780 = vmatprep.subr.bf16.mxu0 0
      %781 = vmatpush1.bf16.msra.mxu0 0
      %782 = vmatprep.subr.bf16.mxu0 0
      %783 = vmatpush1.bf16.msra.mxu0 0
      %784 = vmatprep.mubr.bf16.mxu0 0
      %785 = vmatmul.mubr.bf16.gmra.mrb[0].mxu0 %v747
      %v786 = vpop.f32.mrb[0].mxu0
      %v787 = vadd.f32 0.0, %v786
      %v788 = vpop.f32.mrb[0].mxu0
      %v789 = vpop.f32.mrb[0].mxu0
      %v790 = vadd.f32 0.0, %v789
      %v791 = vpop.f32.mrb[0].mxu0
      %792 = vdwg.mxu0
      %v793 = vmul.f32 %v787, %v741
      %v794 = vmul.f32 %v790, %v742
      %797 = vrot.lane.b32.xlu0 %v547, 8
      %v798 = vpop.permute.xlu0 %797
      %799 = vrot.lane.b32.xlu0 %v548, 8
      %v800 = vpop.permute.xlu0 %799
      %805 = vrot.lane.b32.xlu0 %v670, 16
      %v806 = vpop.permute.xlu0 %805
      %807 = vrot.lane.b32.xlu0 %v671, 16
      %v808 = vpop.permute.xlu0 %807
      %813 = vrot.lane.b32.xlu0 %v793, 24
      %v814 = vpop.permute.xlu0 %813
      %815 = vrot.lane.b32.xlu0 %v794, 24
      %v816 = vpop.permute.xlu0 %815
      %v819 = vsel %vm303, %v424, %v798
      %v820 = vsel %vm303, %v425, %v800
      %vm821 = vcmask 130048
      %v822 = vsel %vm821, %v819, %v806
      %v823 = vsel %vm821, %v820, %v808
      %vm824 = vcmask 195584
      %v825 = vsel %vm824, %v822, %v814
      %v826 = vsel %vm824, %v823, %v816
      %v827 = vpack.c.bf16 %v826, %v825
      %v828 = vld [vmem:[%s3] sm:$0xf]
      %v829 = vld [vmem:[%s3 + $0x4] sm:$0xf]
      %v830 = vld [vmem:[%s3 + $0x8] sm:$0xf]
      %v831 = vld [vmem:[%s3 + $0xc] sm:$0xf]
      %v836 = vunpack.c.l.b16 %v828
      %v837 = vunpack.c.l.b16 %v829
      %v838 = vunpack.c.l.b16 %v830
      %v839 = vunpack.c.l.b16 %v831
      %v840 = vpack.c.b16 %v837, %v836
      %v841 = vpack.c.b16 %v839, %v838
      %v845 = vsel %vm204, %v827, 0
      %847 = vmatprep.subr.bf16.mxu0 0
      %848 = vmatpush1.bf16.msra.mxu0 %v840
      %849 = vmatprep.subr.bf16.mxu0 0
      %850 = vmatpush1.bf16.msra.mxu0 %v841
      %851 = vmatprep.subr.bf16.mxu0 0
      %852 = vmatpush1.bf16.msra.mxu0 0
      %853 = vmatprep.subr.bf16.mxu0 0
      %854 = vmatpush1.bf16.msra.mxu0 0
      %855 = vmatprep.subr.bf16.mxu0 0
      %856 = vmatpush1.bf16.msra.mxu0 0
      %857 = vmatprep.subr.bf16.mxu0 0
      %858 = vmatpush1.bf16.msra.mxu0 0
      %859 = vmatprep.subr.bf16.mxu0 0
      %860 = vmatpush1.bf16.msra.mxu0 0
      %861 = vmatprep.subr.bf16.mxu0 0
      %862 = vmatpush1.bf16.msra.mxu0 0
      %863 = vmatprep.subr.bf16.mxu0 0
      %864 = vmatpush1.bf16.msra.mxu0 0
      %865 = vmatprep.subr.bf16.mxu0 0
      %866 = vmatpush1.bf16.msra.mxu0 0
      %867 = vmatprep.subr.bf16.mxu0 0
      %868 = vmatpush1.bf16.msra.mxu0 0
      %869 = vmatprep.subr.bf16.mxu0 0
      %870 = vmatpush1.bf16.msra.mxu0 0
      %871 = vmatprep.subr.bf16.mxu0 0
      %872 = vmatpush1.bf16.msra.mxu0 0
      %873 = vmatprep.subr.bf16.mxu0 0
      %874 = vmatpush1.bf16.msra.mxu0 0
      %875 = vmatprep.subr.bf16.mxu0 0
      %876 = vmatpush1.bf16.msra.mxu0 0
      %877 = vmatprep.subr.bf16.mxu0 0
      %878 = vmatpush1.bf16.msra.mxu0 0
      %879 = vmatprep.mubr.bf16.mxu0 0
      %880 = vmatmul.mubr.bf16.gmra.mrb[0].mxu0 %v845
      %v881 = vpop.f32.mrb[0].mxu0
      %v882 = vadd.f32 0.0, %v881
      %v883 = vpop.f32.mrb[0].mxu0
      %v884 = vpop.f32.mrb[0].mxu0
      %v885 = vadd.f32 0.0, %v884
      %v886 = vpop.f32.mrb[0].mxu0
      %887 = vdwg.mxu0
      %v888 = vadd.f32 %v199, %v882
      %v889 = vadd.f32 %v200, %v885
      %890 = vst.msk [vmem:[%s197] sm:$0xff] %vm204, %v888
      %891 = vst.msk [vmem:[%s197 + $0x8] sm:$0xf] %vm208, %v889
      %p892 = scmp.lt.s32.totalorder %s15, 1
      %s893 = scalar_select %p892, %s15, 1
      %s894 = smul.addr %s893, 2
      %s895 = smul.addr %s894, 8
      %s896 = scalar_lea.vmem %s4, %s895
      // Predicated region
      $region37: #{cross_prompt_t5_forward.11} parent=35 // pred_check
        %p897 = pneg %p122
      $region38: #{cross_prompt_t5_forward.11} parent=35 // pred_check_branch
        %899 = sbr.rel (%p897) target = $region40
      $region39: #{cross_prompt_t5_forward.11} parent=35 // pred_region
        _
      $region40: #{cross_prompt_t5_forward.11} parent=35 // pred_fallthru
        _
    $region36: #{cross_prompt_t5_forward.11} parent=5 // pred_fallthru
      _
    %p900 = scmp.le.s32.totalorder 2, %s10
    // Predicated region
    $region41: #{cross_prompt_t5_forward.11} parent=5 // pred_check
      %p901 = pneg %p900
    $region42: #{cross_prompt_t5_forward.11} parent=5 // pred_check_branch
      %903 = sbr.rel (%p901) target = $region44
    $region43: #{cross_prompt_t5_forward.11} parent=5 // pred_region
      %s904 = ssub.s32 %s10, 2
      // Predicated region
      $region45: #{cross_prompt_t5_forward.11} parent=43 // pred_check
        %p905 = pneg %p128
      $region46: #{cross_prompt_t5_forward.11} parent=43 // pred_check_branch
        %907 = sbr.rel (%p905) target = $region48
      $region47: #{cross_prompt_t5_forward.11} parent=43 // pred_region
        %p908 = scmp.lt.s32.totalorder %s16, 1
        %s909 = scalar_select %p908, %s16, 1
        %s910 = smul.addr %s909, 2
        %s911 = smul.addr %s910, 8
        %s912 = scalar_lea.vmem %s4, %s911
      $region48: #{cross_prompt_t5_forward.11} parent=43 // pred_fallthru
        _
    $region44: #{cross_prompt_t5_forward.11} parent=5 // pred_fallthru
      _
  $region6: #{cross_prompt_t5_forward.11} parent=0 // loop_footer
    %s14 = sadd.s32 1, %s10
  $region7: #{cross_prompt_t5_forward.11} parent=0 // loop_footer_branch
    %9 = sbr.rel target = $region3
  $region8: #{cross_prompt_t5_forward.11} parent=0 // loop_exit
    _

// kernel: cross_prompt_t5_forward.14
$region0: #{cross_prompt_t5_forward.14}
  #allocation0 [shape = 'u32[]', space=smem, size = 0x4, offset = 0x4, fixed_abs, tag = 'smem constant byte address 0x4 - core index']
  #allocation1 [shape = 'u32[144,128]{1,0:T(1,128)}', space=vmem, size = 0x12000, scoped, tag = 'internal scratch']
  %s0 = inlined_call_operand.vmem [shape: f32[16,32], index: 0, kind: input, shape index: {}]
  %s1 = inlined_call_operand.vmem [shape: f32[1,32], index: 1, kind: input, shape index: {}]
  %s2 = inlined_call_operand.vmem [shape: bf16[16,32], index: 2, kind: output, shape index: {}]
  %s3 = sld [smem:[#allocation0]]
  $region18: #{cross_prompt_t5_forward.14} parent=0
    _
  %s5 = ssub.s32 1, %s3
  %s6 = scalar_select 0, %s5, %s3
  // Predicated region
  $region2: #{cross_prompt_t5_forward.14} parent=0 // pred_check
    _
  $region3: #{cross_prompt_t5_forward.14} parent=0 // pred_check_branch
    %8 = sbr.rel (0) target = $region5
  $region4: #{cross_prompt_t5_forward.14} parent=0 // pred_region
    _
  $region5: #{cross_prompt_t5_forward.14} parent=0 // pred_fallthru
    _
  // Predicated region
  $region6: #{cross_prompt_t5_forward.14} parent=0 // pred_check
    _
  $region7: #{cross_prompt_t5_forward.14} parent=0 // pred_check_branch
    %10 = sbr.rel (0) target = $region9
  $region8: #{cross_prompt_t5_forward.14} parent=0 // pred_region
    _
  $region9: #{cross_prompt_t5_forward.14} parent=0 // pred_fallthru
    _
  %v11 = vld [vmem:[%s0] sm:$0xff]
  %v12 = vld [vmem:[%s0 + $0x8] sm:$0xff]
  %v13 = vld [vmem:[%s1] sm:$0x1]
  %v14 = vmul.f32 %v11, %v11
  %v15 = vmul.f32 %v12, %v12
  %vm16 = vcmask 261120
  %v17 = vsel %vm16, %v14, 0.0
  %18 = vadd.xlane.f32.xlu0 %v17
  %v19 = vpop.xlane.xlu0 %18
  %v20 = vsel %vm16, %v15, 0.0
  %21 = vadd.xlane.f32.xlu0 %v20
  %v22 = vpop.xlane.xlu0 %21
  %v23 = vrcp.pop 32.0
  %v24 = vmul.f32 %v19, %v23
  %v25 = vmul.f32 %v22, %v23
  %v26 = vadd.f32 %v24, 1e-06
  %v27 = vadd.f32 %v25, 1e-06
  %v28 = vrsqrt.pop %v26
  %v29 = vrsqrt.pop %v27
  %v30 = vmul.f32 %v11, %v28
  %v31 = vmul.f32 %v12, %v29
  %v33 = vlaneseq
  %v34 = vshrl.u32 %v33, 7
  %v35 = vsub.s32 0, %v34
  %v36 = vrot.slane %v13, %v35
  %v38 = vmul.f32 %v30, %v36
  %v39 = vmul.f32 %v31, %v36
  %v40 = vpack.c.bf16 %v39, %v38
  %v42 = vunpack.c.l.b16 %v40
  %v43 = vunpack.c.h.b16 %v40
  %v44 = vpack.c.b16 %v42, %v42
  %v45 = vpack.c.b16 %v43, %v43
  %vm48 = vcmask 257024
  %49 = vst.msk [vmem:[%s2] sm:$0xf] %vm48, %v44
  %50 = vst.msk [vmem:[%s2 + $0x4] sm:$0xf] %vm48, %v45
  // Predicated region
  $region10: #{cross_prompt_t5_forward.14} parent=0 // pred_check
    _
  $region11: #{cross_prompt_t5_forward.14} parent=0 // pred_check_branch
    %52 = sbr.rel (0) target = $region13
  $region12: #{cross_prompt_t5_forward.14} parent=0 // pred_region
    _
  $region13: #{cross_prompt_t5_forward.14} parent=0 // pred_fallthru
    _
  // Predicated region
  $region14: #{cross_prompt_t5_forward.14} parent=0 // pred_check
    _
  $region15: #{cross_prompt_t5_forward.14} parent=0 // pred_check_branch
    %54 = sbr.rel (0) target = $region17
  $region16: #{cross_prompt_t5_forward.14} parent=0 // pred_region
    _
  $region17: #{cross_prompt_t5_forward.14} parent=0 // pred_fallthru
    _

// kernel: cross_prompt_t5_forward.12
$region0: #{cross_prompt_t5_forward.12}
  #allocation0 [shape = 'u32[]', space=smem, size = 0x4, offset = 0x4, fixed_abs, tag = 'smem constant byte address 0x4 - core index']
  #allocation1 [shape = 'u32[144,128]{1,0:T(1,128)}', space=vmem, size = 0x12000, scoped, tag = 'internal scratch']
  %s0 = inlined_call_operand.vmem [shape: f32[2,12,32], index: 0, kind: input, shape index: {}]
  %s1 = inlined_call_operand.vmem [shape: f32[2,12,32], index: 1, kind: input, shape index: {}]
  %s2 = inlined_call_operand.vmem [shape: f32[1,32], index: 2, kind: input, shape index: {}]
  %s3 = inlined_call_operand.vmem [shape: f32[1,32], index: 3, kind: input, shape index: {}]
  %s4 = inlined_call_operand.vmem [shape: bf16[32,32], index: 4, kind: input, shape index: {}]
  %s5 = inlined_call_operand.vmem [shape: bf16[32,64], index: 5, kind: input, shape index: {}]
  %s6 = inlined_call_operand.vmem [shape: bf16[32,32], index: 6, kind: input, shape index: {}]
  %s7 = inlined_call_operand.vmem [shape: f32[2,12,32], index: 7, kind: output, shape index: {}]
  %s8 = sld [smem:[#allocation0]]
  $region61: #{cross_prompt_t5_forward.12} parent=0
    _
  %s10 = ssub.s32 1, %s8
  %s11 = scalar_select 0, %s10, %s8
  loop: start=0, step=1, limit=4
  $region2: #{cross_prompt_t5_forward.12} parent=0 // loop_pre_header
    _
  $region3: #{cross_prompt_t5_forward.12} parent=0 // loop_header
    %s13 = sphi 0, %s17
    %p14 = scmp.ge.s32.totalorder %s13, 4
    %s23 = sphi 0, %s25
    %s26 = sphi 0, %s23
    %s27 = sphi 0, %s26
    %s43 = sphi 0, %s27
    %s49 = sphi 0, %s51
    %s52 = sphi 0, %s49
    %s53 = sphi 0, %s52
    %s69 = sphi 0, %s53
    %s73 = sphi 0, %s73
    %s75 = sphi 0, %s73
    %s76 = sphi 0, %s75
    %s90 = sphi 0, %s76
    %s94 = sphi 0, %s94
    %s96 = sphi 0, %s94
    %s97 = sphi 0, %s96
    %s111 = sphi 0, %s97
    %s115 = sphi 0, %s115
    %s117 = sphi 0, %s115
    %s118 = sphi 0, %s117
    %s132 = sphi 0, %s118
    %s136 = sphi 0, %s136
    %s138 = sphi 0, %s136
    %s139 = sphi 0, %s138
    %s153 = sphi 0, %s139
    %s157 = sphi 0, %s157
    %s159 = sphi 0, %s157
    %s160 = sphi 0, %s159
    %s174 = sphi 0, %s160
    %s180 = sphi 0, %s182
    %s183 = sphi 0, %s180
    %s184 = sphi 0, %s183
    %s200 = sphi 0, %s184
  $region4: #{cross_prompt_t5_forward.12} parent=0 // loop_header_branch
    %16 = sbr.rel (%p14) target = $region8
  $region5: #{cross_prompt_t5_forward.12} parent=0 // loop_body
    %s18 = ssub.s32 %s13, 1
    %s19 = ssub.s32 %s13, 2
    %s20 = sadd.s32 %s13, 1
    %s21 = ssub.s32 %s13, %s20
    %p22 = scmp.eq.s32.totalorder %s21, 0
    %s24 = sadd.s32 %s23, 1
    %s25 = scalar_select %p22, %s23, %s24
    %p28 = pneg %p22
    %p29 = scmp.eq.s32.totalorder %s13, 1
    %p30 = por %p28, %p29
    %p31 = scmp.ne.s32.totalorder %s23, %s26
    %p32 = scmp.eq.s32.totalorder %s13, 0
    %p33 = por %p31, %p32
    %p34 = scmp.ne.s32.totalorder %s23, %s26
    %p35 = scmp.eq.s32.totalorder %s18, 1
    %p36 = por %p34, %p35
    %p37 = scmp.ne.s32.totalorder %s26, %s27
    %p38 = scmp.eq.s32.totalorder %s18, 0
    %p39 = por %p37, %p38
    %p40 = scmp.ne.s32.totalorder %s26, %s27
    %p41 = scmp.eq.s32.totalorder %s19, 1
    %p42 = por %p40, %p41
    %p44 = scmp.ne.s32.totalorder %s27, %s43
    %p45 = scmp.eq.s32.totalorder %s19, 0
    %p46 = por %p44, %p45
    %s47 = ssub.s32 %s13, %s20
    %p48 = scmp.eq.s32.totalorder %s47, 0
    %s50 = sadd.s32 %s49, 1
    %s51 = scalar_select %p48, %s49, %s50
    %p54 = pneg %p48
    %p55 = scmp.eq.s32.totalorder %s13, 1
    %p56 = por %p54, %p55
    %p57 = scmp.ne.s32.totalorder %s49, %s52
    %p58 = scmp.eq.s32.totalorder %s13, 0
    %p59 = por %p57, %p58
    %p60 = scmp.ne.s32.totalorder %s49, %s52
    %p61 = scmp.eq.s32.totalorder %s18, 1
    %p62 = por %p60, %p61
    %p63 = scmp.ne.s32.totalorder %s52, %s53
    %p64 = scmp.eq.s32.totalorder %s18, 0
    %p65 = por %p63, %p64
    %p66 = scmp.ne.s32.totalorder %s52, %s53
    %p67 = scmp.eq.s32.totalorder %s19, 1
    %p68 = por %p66, %p67
    %p70 = scmp.ne.s32.totalorder %s53, %s69
    %p71 = scmp.eq.s32.totalorder %s19, 0
    %p72 = por %p70, %p71
    %s74 = sadd.s32 %s73, 1
    %p77 = scmp.eq.s32.totalorder %s13, 1
    %p78 = scmp.ne.s32.totalorder %s73, %s75
    %p79 = scmp.eq.s32.totalorder %s13, 0
    %p80 = por %p78, %p79
    %p81 = scmp.ne.s32.totalorder %s73, %s75
    %p82 = scmp.eq.s32.totalorder %s18, 1
    %p83 = por %p81, %p82
    %p84 = scmp.ne.s32.totalorder %s75, %s76
    %p85 = scmp.eq.s32.totalorder %s18, 0
    %p86 = por %p84, %p85
    %p87 = scmp.ne.s32.totalorder %s75, %s76
    %p88 = scmp.eq.s32.totalorder %s19, 1
    %p89 = por %p87, %p88
    %p91 = scmp.ne.s32.totalorder %s76, %s90
    %p92 = scmp.eq.s32.totalorder %s19, 0
    %p93 = por %p91, %p92
    %s95 = sadd.s32 %s94, 1
    %p98 = scmp.eq.s32.totalorder %s13, 1
    %p99 = scmp.ne.s32.totalorder %s94, %s96
    %p100 = scmp.eq.s32.totalorder %s13, 0
    %p101 = por %p99, %p100
    %p102 = scmp.ne.s32.totalorder %s94, %s96
    %p103 = scmp.eq.s32.totalorder %s18, 1
    %p104 = por %p102, %p103
    %p105 = scmp.ne.s32.totalorder %s96, %s97
    %p106 = scmp.eq.s32.totalorder %s18, 0
    %p107 = por %p105, %p106
    %p108 = scmp.ne.s32.totalorder %s96, %s97
    %p109 = scmp.eq.s32.totalorder %s19, 1
    %p110 = por %p108, %p109
    %p112 = scmp.ne.s32.totalorder %s97, %s111
    %p113 = scmp.eq.s32.totalorder %s19, 0
    %p114 = por %p112, %p113
    %s116 = sadd.s32 %s115, 1
    %p119 = scmp.eq.s32.totalorder %s13, 1
    %p120 = scmp.ne.s32.totalorder %s115, %s117
    %p121 = scmp.eq.s32.totalorder %s13, 0
    %p122 = por %p120, %p121
    %p123 = scmp.ne.s32.totalorder %s115, %s117
    %p124 = scmp.eq.s32.totalorder %s18, 1
    %p125 = por %p123, %p124
    %p126 = scmp.ne.s32.totalorder %s117, %s118
    %p127 = scmp.eq.s32.totalorder %s18, 0
    %p128 = por %p126, %p127
    %p129 = scmp.ne.s32.totalorder %s117, %s118
    %p130 = scmp.eq.s32.totalorder %s19, 1
    %p131 = por %p129, %p130
    %p133 = scmp.ne.s32.totalorder %s118, %s132
    %p134 = scmp.eq.s32.totalorder %s19, 0
    %p135 = por %p133, %p134
    %s137 = sadd.s32 %s136, 1
    %p140 = scmp.eq.s32.totalorder %s13, 1
    %p141 = scmp.ne.s32.totalorder %s136, %s138
    %p142 = scmp.eq.s32.totalorder %s13, 0
    %p143 = por %p141, %p142
    %p144 = scmp.ne.s32.totalorder %s136, %s138
    %p145 = scmp.eq.s32.totalorder %s18, 1
    %p146 = por %p144, %p145
    %p147 = scmp.ne.s32.totalorder %s138, %s139
    %p148 = scmp.eq.s32.totalorder %s18, 0
    %p149 = por %p147, %p148
    %p150 = scmp.ne.s32.totalorder %s138, %s139
    %p151 = scmp.eq.s32.totalorder %s19, 1
    %p152 = por %p150, %p151
    %p154 = scmp.ne.s32.totalorder %s139, %s153
    %p155 = scmp.eq.s32.totalorder %s19, 0
    %p156 = por %p154, %p155
    %s158 = sadd.s32 %s157, 1
    %p161 = scmp.eq.s32.totalorder %s13, 1
    %p162 = scmp.ne.s32.totalorder %s157, %s159
    %p163 = scmp.eq.s32.totalorder %s13, 0
    %p164 = por %p162, %p163
    %p165 = scmp.ne.s32.totalorder %s157, %s159
    %p166 = scmp.eq.s32.totalorder %s18, 1
    %p167 = por %p165, %p166
    %p168 = scmp.ne.s32.totalorder %s159, %s160
    %p169 = scmp.eq.s32.totalorder %s18, 0
    %p170 = por %p168, %p169
    %p171 = scmp.ne.s32.totalorder %s159, %s160
    %p172 = scmp.eq.s32.totalorder %s19, 1
    %p173 = por %p171, %p172
    %p175 = scmp.ne.s32.totalorder %s160, %s174
    %p176 = scmp.eq.s32.totalorder %s19, 0
    %p177 = por %p175, %p176
    %s178 = ssub.s32 %s13, %s20
    %p179 = scmp.eq.s32.totalorder %s178, 0
    %s181 = sadd.s32 %s180, 1
    %s182 = scalar_select %p179, %s180, %s181
    %p185 = pneg %p179
    %p186 = scmp.eq.s32.totalorder %s13, 1
    %p187 = por %p185, %p186
    %p188 = scmp.ne.s32.totalorder %s180, %s183
    %p189 = scmp.eq.s32.totalorder %s13, 0
    %p190 = por %p188, %p189
    %p191 = scmp.ne.s32.totalorder %s180, %s183
    %p192 = scmp.eq.s32.totalorder %s18, 1
    %p193 = por %p191, %p192
    %p194 = scmp.ne.s32.totalorder %s183, %s184
    %p195 = scmp.eq.s32.totalorder %s18, 0
    %p196 = por %p194, %p195
    %p197 = scmp.ne.s32.totalorder %s183, %s184
    %p198 = scmp.eq.s32.totalorder %s19, 1
    %p199 = por %p197, %p198
    %p201 = scmp.ne.s32.totalorder %s184, %s200
    %p202 = scmp.eq.s32.totalorder %s19, 0
    %p203 = por %p201, %p202
    %p204 = scmp.le.s32.totalorder 1, %s13
    %p205 = scmp.lt.s32.totalorder %s13, 3
    %p206 = pnand %p204, %p205
    %p207 = pneg %p206
    // Predicated region
    $region9: #{cross_prompt_t5_forward.12} parent=5 // pred_check
      _
    $region10: #{cross_prompt_t5_forward.12} parent=5 // pred_check_branch
      %209 = sbr.rel (%p206) target = $region12
    $region11: #{cross_prompt_t5_forward.12} parent=5 // pred_region
      %s210 = ssub.s32 %s13, 1
      // Predicated region
      $region13: #{cross_prompt_t5_forward.12} parent=11 // pred_check
        %p211 = pneg %p86
      $region14: #{cross_prompt_t5_forward.12} parent=11 // pred_check_branch
        %213 = sbr.rel (%p211) target = $region16
      $region15: #{cross_prompt_t5_forward.12} parent=11 // pred_region
        _
      $region16: #{cross_prompt_t5_forward.12} parent=11 // pred_fallthru
        _
      // Predicated region
      $region17: #{cross_prompt_t5_forward.12} parent=11 // pred_check
        %p214 = pneg %p107
      $region18: #{cross_prompt_t5_forward.12} parent=11 // pred_check_branch
        %216 = sbr.rel (%p214) target = $region20
      $region19: #{cross_prompt_t5_forward.12} parent=11 // pred_region
        _
      $region20: #{cross_prompt_t5_forward.12} parent=11 // pred_fallthru
        _
      // Predicated region
      $region21: #{cross_prompt_t5_forward.12} parent=11 // pred_check
        %p217 = pneg %p128
      $region22: #{cross_prompt_t5_forward.12} parent=11 // pred_check_branch
        %219 = sbr.rel (%p217) target = $region24
      $region23: #{cross_prompt_t5_forward.12} parent=11 // pred_region
        _
      $region24: #{cross_prompt_t5_forward.12} parent=11 // pred_fallthru
        _
      // Predicated region
      $region25: #{cross_prompt_t5_forward.12} parent=11 // pred_check
        %p220 = pneg %p149
      $region26: #{cross_prompt_t5_forward.12} parent=11 // pred_check_branch
        %222 = sbr.rel (%p220) target = $region28
      $region27: #{cross_prompt_t5_forward.12} parent=11 // pred_region
        _
      $region28: #{cross_prompt_t5_forward.12} parent=11 // pred_fallthru
        _
      // Predicated region
      $region29: #{cross_prompt_t5_forward.12} parent=11 // pred_check
        %p223 = pneg %p170
      $region30: #{cross_prompt_t5_forward.12} parent=11 // pred_check_branch
        %225 = sbr.rel (%p223) target = $region32
      $region31: #{cross_prompt_t5_forward.12} parent=11 // pred_region
        _
      $region32: #{cross_prompt_t5_forward.12} parent=11 // pred_fallthru
        _
    $region12: #{cross_prompt_t5_forward.12} parent=5 // pred_fallthru
      _
    %p226 = scmp.lt.s32.totalorder %s13, 2
    // Predicated region
    $region33: #{cross_prompt_t5_forward.12} parent=5 // pred_check
      %p227 = pneg %p226
    $region34: #{cross_prompt_t5_forward.12} parent=5 // pred_check_branch
      %229 = sbr.rel (%p227) target = $region36
    $region35: #{cross_prompt_t5_forward.12} parent=5 // pred_region
      // Predicated region
      $region37: #{cross_prompt_t5_forward.12} parent=35 // pred_check
        %p230 = pneg %p33
      $region38: #{cross_prompt_t5_forward.12} parent=35 // pred_check_branch
        %232 = sbr.rel (%p230) target = $region40
      $region39: #{cross_prompt_t5_forward.12} parent=35 // pred_region
        %p233 = scmp.lt.s32.totalorder %s13, 1
        %s234 = scalar_select %p233, %s13, 1
        %s235 = smul.addr %s234, 2
        %s236 = smul.addr %s235, 8
        %s237 = scalar_lea.vmem %s0, %s236
      $region40: #{cross_prompt_t5_forward.12} parent=35 // pred_fallthru
        _
      // Predicated region
      $region41: #{cross_prompt_t5_forward.12} parent=35 // pred_check
        %p238 = pneg %p59
      $region42: #{cross_prompt_t5_forward.12} parent=35 // pred_check_branch
        %240 = sbr.rel (%p238) target = $region44
      $region43: #{cross_prompt_t5_forward.12} parent=35 // pred_region
        %p241 = scmp.lt.s32.totalorder %s13, 1
        %s242 = scalar_select %p241, %s13, 1
        %s243 = smul.addr %s242, 2
        %s244 = smul.addr %s243, 8
        %s245 = scalar_lea.vmem %s1, %s244
      $region44: #{cross_prompt_t5_forward.12} parent=35 // pred_fallthru
        _
    $region36: #{cross_prompt_t5_forward.12} parent=5 // pred_fallthru
      _
    %p246 = scmp.le.s32.totalorder 1, %s13
    %p247 = scmp.lt.s32.totalorder %s13, 3
    %p248 = pnand %p246, %p247
    %p249 = pneg %p248
    // Predicated region
    $region45: #{cross_prompt_t5_forward.12} parent=5 // pred_check
      _
    $region46: #{cross_prompt_t5_forward.12} parent=5 // pred_check_branch
      %251 = sbr.rel (%p248) target = $region48
    $region47: #{cross_prompt_t5_forward.12} parent=5 // pred_region
      %s252 = ssub.s32 %s13, 1
      %p253 = scmp.lt.s32.totalorder %s18, 1
      %s254 = scalar_select %p253, %s18, 1
      %s255 = smul.addr %s254, 2
      %s256 = smul.addr %s255, 8
      %s257 = scalar_lea.vmem %s0, %s256
      %p258 = pneg %p39
      %p259 = pneg %p36
      %p260 = scmp.lt.s32.totalorder %s18, 1
      %s261 = scalar_select %p260, %s18, 1
      %s262 = smul.addr %s261, 2
      %s263 = smul.addr %s262, 8
      %s264 = scalar_lea.vmem %s1, %s263
      %p265 = pneg %p65
      %p266 = pneg %p62
      %p267 = pneg %p86
      %p268 = pneg %p83
      %p269 = pneg %p107
      %p270 = pneg %p104
      %p271 = pneg %p128
      %p272 = pneg %p125
      %p273 = pneg %p149
      %p274 = pneg %p146
      %p275 = pneg %p170
      %p276 = pneg %p167
      %p277 = pneg %p196
      %p278 = pneg %p193
      %p279 = scmp.lt.s32.totalorder %s18, 1
      %s280 = scalar_select %p279, %s18, 1
      %s281 = smul.addr %s280, 2
      %s282 = smul.addr %s281, 8
      %s283 = scalar_lea.vmem %s7, %s282
      %p284 = scmp.lt.s32.totalorder %s18, 1
      %s285 = scalar_select %p284, %s18, 1
      %s286 = smul.addr %s285, 2
      %s287 = smul.addr %s286, 8
      %s288 = scalar_lea.vmem %s0, %s287
      %p289 = scmp.lt.s32.totalorder %s18, 1
      %s290 = scalar_select %p289, %s18, 1
      %s291 = smul.addr %s290, 2
      %s292 = smul.addr %s291, 8
      %s293 = scalar_lea.vmem %s1, %s292
      %p294 = scmp.lt.s32.totalorder %s18, 1
      %s295 = scalar_select %p294, %s18, 1
      %s296 = smul.addr %s295, 2
      %s297 = smul.addr %s296, 8
      %s298 = scalar_lea.vmem %s7, %s297
      %v300 = vld [vmem:[%s288] sm:$0xff]
      %v301 = vld [vmem:[%s288 + $0x8] sm:$0xf]
      %v302 = vld [vmem:[%s293] sm:$0xff]
      %v303 = vld [vmem:[%s293 + $0x8] sm:$0xf]
      %v304 = vld [vmem:[%s2] sm:$0x1]
      %v305 = vmul.f32 %v300, %v300
      %v306 = vmul.f32 %v301, %v301
      %vm307 = vcmask 261120
      %v308 = vsel %vm307, %v305, 0.0
      %309 = vadd.xlane.f32.xlu0 %v308
      %v310 = vpop.xlane.xlu0 %309
      %vm311 = vcmask 257024
      %v312 = vsel %vm311, %v306, 0.0
      %313 = vadd.xlane.f32.xlu0 %v312
      %v314 = vpop.xlane.xlu0 %313
      %v315 = vrcp.pop 32.0
      %v316 = vmul.f32 %v310, %v315
      %v317 = vmul.f32 %v314, %v315
      %v318 = vadd.f32 %v316, 1e-06
      %v319 = vadd.f32 %v317, 1e-06
      %v320 = vrsqrt.pop %v318
      %v321 = vrsqrt.pop %v319
      %v322 = vmul.f32 %v300, %v320
      %v323 = vmul.f32 %v301, %v321
      %v325 = vlaneseq
      %v326 = vshrl.u32 %v325, 7
      %v327 = vsub.s32 0, %v326
      %v328 = vrot.slane %v304, %v327
      %v330 = vmul.f32 %v322, %v328
      %v331 = vmul.f32 %v323, %v328
      %v332 = vpack.c.bf16 %v331, %v330
      %v333 = vld [vmem:[%s3] sm:$0x1]
      %v334 = vmul.f32 %v302, %v302
      %v335 = vmul.f32 %v303, %v303
      %v336 = vsel %vm307, %v334, 0.0
      %337 = vadd.xlane.f32.xlu0 %v336
      %v338 = vpop.xlane.xlu0 %337
      %v339 = vsel %vm311, %v335, 0.0
      %340 = vadd.xlane.f32.xlu0 %v339
      %v341 = vpop.xlane.xlu0 %340
      %v342 = vmul.f32 %v338, %v315
      %v343 = vmul.f32 %v341, %v315
      %v344 = vadd.f32 %v342, 1e-06
      %v345 = vadd.f32 %v343, 1e-06
      %v346 = vrsqrt.pop %v344
      %v347 = vrsqrt.pop %v345
      %v348 = vmul.f32 %v302, %v346
      %v349 = vmul.f32 %v303, %v347
      %v351 = vlaneseq
      %v352 = vshrl.u32 %v351, 7
      %v353 = vsub.s32 0, %v352
      %v354 = vrot.slane %v333, %v353
      %v356 = vmul.f32 %v348, %v354
      %v357 = vmul.f32 %v349, %v354
      %v358 = vpack.c.bf16 %v357, %v356
      %v359 = vld [vmem:[%s4] sm:$0xf]
      %v360 = vld [vmem:[%s4 + $0x4] sm:$0xf]
      %v361 = vld [vmem:[%s4 + $0x8] sm:$0xf]
      %v362 = vld [vmem:[%s4 + $0xc] sm:$0xf]
      %v367 = vunpack.c.l.b16 %v359
      %v368 = vunpack.c.l.b16 %v360
      %v369 = vunpack.c.l.b16 %v361
      %v370 = vunpack.c.l.b16 %v362
      %v371 = vpack.c.b16 %v368, %v367
      %v372 = vpack.c.b16 %v370, %v369
      %v376 = vsel %vm307, %v332, 0
      %378 = vmatprep.subr.bf16.mxu0 0
      %379 = vmatpush1.bf16.msra.mxu0 %v371
      %380 = vmatprep.subr.bf16.mxu0 0
      %381 = vmatpush1.bf16.msra.mxu0 %v372
      %382 = vmatprep.subr.bf16.mxu0 0
      %383 = vmatpush1.bf16.msra.mxu0 0
      %384 = vmatprep.subr.bf16.mxu0 0
      %385 = vmatpush1.bf16.msra.mxu0 0
      %386 = vmatprep.subr.bf16.mxu0 0
      %387 = vmatpush1.bf16.msra.mxu0 0
      %388 = vmatprep.subr.bf16.mxu0 0
      %389 = vmatpush1.bf16.msra.mxu0 0
      %390 = vmatprep.subr.bf16.mxu0 0
      %391 = vmatpush1.bf16.msra.mxu0 0
      %392 = vmatprep.subr.bf16.mxu0 0
      %393 = vmatpush1.bf16.msra.mxu0 0
      %394 = vmatprep.subr.bf16.mxu0 0
      %395 = vmatpush1.bf16.msra.mxu0 0
      %396 = vmatprep.subr.bf16.mxu0 0
      %397 = vmatpush1.bf16.msra.mxu0 0
      %398 = vmatprep.subr.bf16.mxu0 0
      %399 = vmatpush1.bf16.msra.mxu0 0
      %400 = vmatprep.subr.bf16.mxu0 0
      %401 = vmatpush1.bf16.msra.mxu0 0
      %402 = vmatprep.subr.bf16.mxu0 0
      %403 = vmatpush1.bf16.msra.mxu0 0
      %404 = vmatprep.subr.bf16.mxu0 0
      %405 = vmatpush1.bf16.msra.mxu0 0
      %406 = vmatprep.subr.bf16.mxu0 0
      %407 = vmatpush1.bf16.msra.mxu0 0
      %408 = vmatprep.subr.bf16.mxu0 0
      %409 = vmatpush1.bf16.msra.mxu0 0
      %410 = vmatprep.mubr.bf16.mxu0 0
      %411 = vmatmul.mubr.bf16.gmra.mrb[0].mxu0 %v376
      %v412 = vpop.f32.mrb[0].mxu0
      %v413 = vadd.f32 0.0, %v412
      %v414 = vpop.f32.mrb[0].mxu0
      %v415 = vpop.f32.mrb[0].mxu0
      %v416 = vadd.f32 0.0, %v415
      %v417 = vpop.f32.mrb[0].mxu0
      %418 = vdwg.mxu0
      %v419 = vpack.c.bf16 %v416, %v413
      %v420 = vld [vmem:[%s5] sm:$0xf]
      %v421 = vld [vmem:[%s5 + $0x4] sm:$0xf]
      %v422 = vld [vmem:[%s5 + $0x8] sm:$0xf]
      %v423 = vld [vmem:[%s5 + $0xc] sm:$0xf]
      %v428 = vunpack.c.l.b16 %v420
      %v429 = vunpack.c.l.b16 %v421
      %v430 = vunpack.c.l.b16 %v422
      %v431 = vunpack.c.l.b16 %v423
      %v432 = vpack.c.b16 %v429, %v428
      %v433 = vpack.c.b16 %v431, %v430
      %v437 = vsel %vm307, %v358, 0
      %439 = vmatprep.subr.bf16.mxu0 0
      %440 = vmatpush1.bf16.msra.mxu0 %v432
      %441 = vmatprep.subr.bf16.mxu0 0
      %442 = vmatpush1.bf16.msra.mxu0 %v433
      %443 = vmatprep.subr.bf16.mxu0 0
      %444 = vmatpush1.bf16.msra.mxu0 0
      %445 = vmatprep.subr.bf16.mxu0 0
      %446 = vmatpush1.bf16.msra.mxu0 0
      %447 = vmatprep.subr.bf16.mxu0 0
      %448 = vmatpush1.bf16.msra.mxu0 0
      %449 = vmatprep.subr.bf16.mxu0 0
      %450 = vmatpush1.bf16.msra.mxu0 0
      %451 = vmatprep.subr.bf16.mxu0 0
      %452 = vmatpush1.bf16.msra.mxu0 0
      %453 = vmatprep.subr.bf16.mxu0 0
      %454 = vmatpush1.bf16.msra.mxu0 0
      %455 = vmatprep.subr.bf16.mxu0 0
      %456 = vmatpush1.bf16.msra.mxu0 0
      %457 = vmatprep.subr.bf16.mxu0 0
      %458 = vmatpush1.bf16.msra.mxu0 0
      %459 = vmatprep.subr.bf16.mxu0 0
      %460 = vmatpush1.bf16.msra.mxu0 0
      %461 = vmatprep.subr.bf16.mxu0 0
      %462 = vmatpush1.bf16.msra.mxu0 0
      %463 = vmatprep.subr.bf16.mxu0 0
      %464 = vmatpush1.bf16.msra.mxu0 0
      %465 = vmatprep.subr.bf16.mxu0 0
      %466 = vmatpush1.bf16.msra.mxu0 0
      %467 = vmatprep.subr.bf16.mxu0 0
      %468 = vmatpush1.bf16.msra.mxu0 0
      %469 = vmatprep.subr.bf16.mxu0 0
      %470 = vmatpush1.bf16.msra.mxu0 0
      %471 = vmatprep.mubr.bf16.mxu0 0
      %472 = vmatmul.mubr.bf16.gmra.mrb[0].mxu0 %v437
      %v473 = vpop.f32.mrb[0].mxu0
      %v474 = vadd.f32 0.0, %v473
      %v475 = vpop.f32.mrb[0].mxu0
      %v476 = vpop.f32.mrb[0].mxu0
      %v477 = vadd.f32 0.0, %v476
      %v478 = vpop.f32.mrb[0].mxu0
      %479 = vdwg.mxu0
      %v480 = vpack.c.bf16 %v477, %v474
      %vm481 = vcmask 64512
      %v483 = vsel %vm481, %v419, 0
      %v486 = vsel %vm481, %v480, 0
      %488 = vmatprep.subr.bf16.mxu0 0
      %489 = vmatpush1.bf16.xpose.msra.mxu0 %v486
      %490 = vmatprep.subr.bf16.mxu0 0
      %491 = vmatpush1.bf16.xpose.msra.mxu0 0
      %492 = vmatprep.subr.bf16.mxu0 0
      %493 = vmatpush1.bf16.xpose.msra.mxu0 0
      %494 = vmatprep.subr.bf16.mxu0 0
      %495 = vmatpush1.bf16.xpose.msra.mxu0 0
      %496 = vmatprep.subr.bf16.mxu0 0
      %497 = vmatpush1.bf16.xpose.msra.mxu0 0
      %498 = vmatprep.subr.bf16.mxu0 0
      %499 = vmatpush1.bf16.xpose.msra.mxu0 0
      %500 = vmatprep.subr.bf16.mxu0 0
      %501 = vmatpush1.bf16.xpose.msra.mxu0 0
      %502 = vmatprep.subr.bf16.mxu0 0
      %503 = vmatpush1.bf16.xpose.msra.mxu0 0
      %504 = vmatprep.subr.bf16.mxu0 0
      %505 = vmatpush1.bf16.xpose.msra.mxu0 0
      %506 = vmatprep.subr.bf16.mxu0 0
      %507 = vmatpush1.bf16.xpose.msra.mxu0 0
      %508 = vmatprep.subr.bf16.mxu0 0
      %509 = vmatpush1.bf16.xpose.msra.mxu0 0
      %510 = vmatprep.subr.bf16.mxu0 0
      %511 = vmatpush1.bf16.xpose.msra.mxu0 0
      %512 = vmatprep.subr.bf16.mxu0 0
      %513 = vmatpush1.bf16.xpose.msra.mxu0 0
      %514 = vmatprep.subr.bf16.mxu0 0
      %515 = vmatpush1.bf16.xpose.msra.mxu0 0
      %516 = vmatprep.subr.bf16.mxu0 0
      %517 = vmatpush1.bf16.xpose.msra.mxu0 0
      %518 = vmatprep.subr.bf16.mxu0 0
      %519 = vmatpush1.bf16.xpose.msra.mxu0 0
      %520 = vmatprep.mubr.bf16.mxu0 0
      %521 = vmatmul.mubr.bf16.gmra.mrb[0].mxu0 %v483
      %v522 = vpop.f32.mrb[0].mxu0
      %v523 = vadd.f32 0.0, %v522
      %v524 = vpop.f32.mrb[0].mxu0
      %v525 = vpop.f32.mrb[0].mxu0
      %v526 = vadd.f32 0.0, %v525
      %v527 = vpop.f32.mrb[0].mxu0
      %528 = vdwg.mxu0
      %vm529 = vcmask 97280
      %v530 = vsel %vm529, %v523, -inf
      %531 = vmax.xlane.f32.xlu0 %v530
      %v532 = vpop.xlane.xlu0 %531
      %vm533 = vcmask 93184
      %v534 = vsel %vm533, %v526, -inf
      %535 = vmax.xlane.f32.xlu0 %v534
      %v536 = vpop.xlane.xlu0 %535
      %v537 = vsub.f32 %v523, %v532
      %v538 = vsub.f32 %v526, %v536
      %v539 = vmul.f32 %v537, 1.442695
      %v540 = vpow.pop %v539
      %v541 = vmul.f32 %v538, 1.442695
      %v542 = vpow.pop %v541
      %v543 = vsel %vm529, %v540, 0.0
      %544 = vadd.xlane.f32.xlu0 %v543
      %v545 = vpop.xlane.xlu0 %544
      %v546 = vsel %vm533, %v542, 0.0
      %547 = vadd.xlane.f32.xlu0 %v546
      %v548 = vpop.xlane.xlu0 %547
      %v549 = vrcp.pop %v545
      %v550 = vrcp.pop %v548
      %v551 = vpack.c.bf16 %v542, %v540
      %553 = vrot.lane.b32.xlu0 %v480, 96
      %v554 = vpop.permute.xlu0 %553
      %v556 = vsel %vm529, %v551, 0
      %vm558 = vcmask 1045504
      %v560 = vsel %vm558, %v554, 0
      %562 = vmatprep.subr.bf16.mxu0 0
      %563 = vmatpush1.bf16.msra.mxu0 %v560
      %564 = vmatprep.subr.bf16.mxu0 0
      %565 = vmatpush1.bf16.msra.mxu0 0
      %566 = vmatprep.subr.bf16.mxu0 0
      %567 = vmatpush1.bf16.msra.mxu0 0
      %568 = vmatprep.subr.bf16.mxu0 0
      %569 = vmatpush1.bf16.msra.mxu0 0
      %570 = vmatprep.subr.bf16.mxu0 0
      %571 = vmatpush1.bf16.msra.mxu0 0
      %572 = vmatprep.subr.bf16.mxu0 0
      %573 = vmatpush1.bf16.msra.mxu0 0
      %574 = vmatprep.subr.bf16.mxu0 0
      %575 = vmatpush1.bf16.msra.mxu0 0
      %576 = vmatprep.subr.bf16.mxu0 0
      %577 = vmatpush1.bf16.msra.mxu0 0
      %578 = vmatprep.subr.bf16.mxu0 0
      %579 = vmatpush1.bf16.msra.mxu0 0
      %580 = vmatprep.subr.bf16.mxu0 0
      %581 = vmatpush1.bf16.msra.mxu0 0
      %582 = vmatprep.subr.bf16.mxu0 0
      %583 = vmatpush1.bf16.msra.mxu0 0
      %584 = vmatprep.subr.bf16.mxu0 0
      %585 = vmatpush1.bf16.msra.mxu0 0
      %586 = vmatprep.subr.bf16.mxu0 0
      %587 = vmatpush1.bf16.msra.mxu0 0
      %588 = vmatprep.subr.bf16.mxu0 0
      %589 = vmatpush1.bf16.msra.mxu0 0
      %590 = vmatprep.subr.bf16.mxu0 0
      %591 = vmatpush1.bf16.msra.mxu0 0
      %592 = vmatprep.subr.bf16.mxu0 0
      %593 = vmatpush1.bf16.msra.mxu0 0
      %594 = vmatprep.mubr.bf16.mxu0 0
      %595 = vmatmul.mubr.bf16.gmra.mrb[0].mxu0 %v556
      %v596 = vpop.f32.mrb[0].mxu0
      %v597 = vadd.f32 0.0, %v596
      %v598 = vpop.f32.mrb[0].mxu0
      %v599 = vpop.f32.mrb[0].mxu0
      %v600 = vadd.f32 0.0, %v599
      %v601 = vpop.f32.mrb[0].mxu0
      %602 = vdwg.mxu0
      %v603 = vmul.f32 %v597, %v549
      %v604 = vmul.f32 %v600, %v550
      %606 = vrot.lane.b32.xlu0 %v419, 120
      %v607 = vpop.permute.xlu0 %606
      %608 = vrot.lane.b32.xlu0 %v480, 120
      %v609 = vpop.permute.xlu0 %608
      %v611 = vsel %vm481, %v607, 0
      %v614 = vsel %vm481, %v609, 0
      %616 = vmatprep.subr.bf16.mxu0 0
      %617 = vmatpush1.bf16.xpose.msra.mxu0 %v614
      %618 = vmatprep.subr.bf16.mxu0 0
      %619 = vmatpush1.bf16.xpose.msra.mxu0 0
      %620 = vmatprep.subr.bf16.mxu0 0
      %621 = vmatpush1.bf16.xpose.msra.mxu0 0
      %622 = vmatprep.subr.bf16.mxu0 0
      %623 = vmatpush1.bf16.xpose.msra.mxu0 0
      %624 = vmatprep.subr.bf16.mxu0 0
      %625 = vmatpush1.bf16.xpose.msra.mxu0 0
      %626 = vmatprep.subr.bf16.mxu0 0
      %627 = vmatpush1.bf16.xpose.msra.mxu0 0
      %628 = vmatprep.subr.bf16.mxu0 0
      %629 = vmatpush1.bf16.xpose.msra.mxu0 0
      %630 = vmatprep.subr.bf16.mxu0 0
      %631 = vmatpush1.bf16.xpose.msra.mxu0 0
      %632 = vmatprep.subr.bf16.mxu0 0
      %633 = vmatpush1.bf16.xpose.msra.mxu0 0
      %634 = vmatprep.subr.bf16.mxu0 0
      %635 = vmatpush1.bf16.xpose.msra.mxu0 0
      %636 = vmatprep.subr.bf16.mxu0 0
      %637 = vmatpush1.bf16.xpose.msra.mxu0 0
      %638 = vmatprep.subr.bf16.mxu0 0
      %639 = vmatpush1.bf16.xpose.msra.mxu0 0
      %640 = vmatprep.subr.bf16.mxu0 0
      %641 = vmatpush1.bf16.xpose.msra.mxu0 0
      %642 = vmatprep.subr.bf16.mxu0 0
      %643 = vmatpush1.bf16.xpose.msra.mxu0 0
      %644 = vmatprep.subr.bf16.mxu0 0
      %645 = vmatpush1.bf16.xpose.msra.mxu0 0
      %646 = vmatprep.subr.bf16.mxu0 0
      %647 = vmatpush1.bf16.xpose.msra.mxu0 0
      %648 = vmatprep.mubr.bf16.mxu0 0
      %649 = vmatmul.mubr.bf16.gmra.mrb[0].mxu0 %v611
      %v650 = vpop.f32.mrb[0].mxu0
      %v651 = vadd.f32 0.0, %v650
      %v652 = vpop.f32.mrb[0].mxu0
      %v653 = vpop.f32.mrb[0].mxu0
      %v654 = vadd.f32 0.0, %v653
      %v655 = vpop.f32.mrb[0].mxu0
      %656 = vdwg.mxu0
      %v657 = vsel %vm529, %v651, -inf
      %658 = vmax.xlane.f32.xlu0 %v657
      %v659 = vpop.xlane.xlu0 %658
      %v660 = vsel %vm533, %v654, -inf
      %661 = vmax.xlane.f32.xlu0 %v660
      %v662 = vpop.xlane.xlu0 %661
      %v663 = vsub.f32 %v651, %v659
      %v664 = vsub.f32 %v654, %v662
      %v665 = vmul.f32 %v663, 1.442695
      %v666 = vpow.pop %v665
      %v667 = vmul.f32 %v664, 1.442695
      %v668 = vpow.pop %v667
      %v669 = vsel %vm529, %v666, 0.0
      %670 = vadd.xlane.f32.xlu0 %v669
      %v671 = vpop.xlane.xlu0 %670
      %v672 = vsel %vm533, %v668, 0.0
      %673 = vadd.xlane.f32.xlu0 %v672
      %v674 = vpop.xlane.xlu0 %673
      %v675 = vrcp.pop %v671
      %v676 = vrcp.pop %v674
      %v677 = vpack.c.bf16 %v668, %v666
      %678 = vrot.lane.b32.xlu0 %v480, 88
      %v679 = vpop.permute.xlu0 %678
      %v681 = vsel %vm529, %v677, 0
      %v684 = vsel %vm558, %v679, 0
      %686 = vmatprep.subr.bf16.mxu0 0
      %687 = vmatpush1.bf16.msra.mxu0 %v684
      %688 = vmatprep.subr.bf16.mxu0 0
      %689 = vmatpush1.bf16.msra.mxu0 0
      %690 = vmatprep.subr.bf16.mxu0 0
      %691 = vmatpush1.bf16.msra.mxu0 0
      %692 = vmatprep.subr.bf16.mxu0 0
      %693 = vmatpush1.bf16.msra.mxu0 0
      %694 = vmatprep.subr.bf16.mxu0 0
      %695 = vmatpush1.bf16.msra.mxu0 0
      %696 = vmatprep.subr.bf16.mxu0 0
      %697 = vmatpush1.bf16.msra.mxu0 0
      %698 = vmatprep.subr.bf16.mxu0 0
      %699 = vmatpush1.bf16.msra.mxu0 0
      %700 = vmatprep.subr.bf16.mxu0 0
      %701 = vmatpush1.bf16.msra.mxu0 0
      %702 = vmatprep.subr.bf16.mxu0 0
      %703 = vmatpush1.bf16.msra.mxu0 0
      %704 = vmatprep.subr.bf16.mxu0 0
      %705 = vmatpush1.bf16.msra.mxu0 0
      %706 = vmatprep.subr.bf16.mxu0 0
      %707 = vmatpush1.bf16.msra.mxu0 0
      %708 = vmatprep.subr.bf16.mxu0 0
      %709 = vmatpush1.bf16.msra.mxu0 0
      %710 = vmatprep.subr.bf16.mxu0 0
      %711 = vmatpush1.bf16.msra.mxu0 0
      %712 = vmatprep.subr.bf16.mxu0 0
      %713 = vmatpush1.bf16.msra.mxu0 0
      %714 = vmatprep.subr.bf16.mxu0 0
      %715 = vmatpush1.bf16.msra.mxu0 0
      %716 = vmatprep.subr.bf16.mxu0 0
      %717 = vmatpush1.bf16.msra.mxu0 0
      %718 = vmatprep.mubr.bf16.mxu0 0
      %719 = vmatmul.mubr.bf16.gmra.mrb[0].mxu0 %v681
      %v720 = vpop.f32.mrb[0].mxu0
      %v721 = vadd.f32 0.0, %v720
      %v722 = vpop.f32.mrb[0].mxu0
      %v723 = vpop.f32.mrb[0].mxu0
      %v724 = vadd.f32 0.0, %v723
      %v725 = vpop.f32.mrb[0].mxu0
      %726 = vdwg.mxu0
      %v727 = vmul.f32 %v721, %v675
      %v728 = vmul.f32 %v724, %v676
      %729 = vrot.lane.b32.xlu0 %v419, 112
      %v730 = vpop.permute.xlu0 %729
      %731 = vrot.lane.b32.xlu0 %v480, 112
      %v732 = vpop.permute.xlu0 %731
      %v734 = vsel %vm481, %v730, 0
      %v737 = vsel %vm481, %v732, 0
      %739 = vmatprep.subr.bf16.mxu0 0
      %740 = vmatpush1.bf16.xpose.msra.mxu0 %v737
      %741 = vmatprep.subr.bf16.mxu0 0
      %742 = vmatpush1.bf16.xpose.msra.mxu0 0
      %743 = vmatprep.subr.bf16.mxu0 0
      %744 = vmatpush1.bf16.xpose.msra.mxu0 0
      %745 = vmatprep.subr.bf16.mxu0 0
      %746 = vmatpush1.bf16.xpose.msra.mxu0 0
      %747 = vmatprep.subr.bf16.mxu0 0
      %748 = vmatpush1.bf16.xpose.msra.mxu0 0
      %749 = vmatprep.subr.bf16.mxu0 0
      %750 = vmatpush1.bf16.xpose.msra.mxu0 0
      %751 = vmatprep.subr.bf16.mxu0 0
      %752 = vmatpush1.bf16.xpose.msra.mxu0 0
      %753 = vmatprep.subr.bf16.mxu0 0
      %754 = vmatpush1.bf16.xpose.msra.mxu0 0
      %755 = vmatprep.subr.bf16.mxu0 0
      %756 = vmatpush1.bf16.xpose.msra.mxu0 0
      %757 = vmatprep.subr.bf16.mxu0 0
      %758 = vmatpush1.bf16.xpose.msra.mxu0 0
      %759 = vmatprep.subr.bf16.mxu0 0
      %760 = vmatpush1.bf16.xpose.msra.mxu0 0
      %761 = vmatprep.subr.bf16.mxu0 0
      %762 = vmatpush1.bf16.xpose.msra.mxu0 0
      %763 = vmatprep.subr.bf16.mxu0 0
      %764 = vmatpush1.bf16.xpose.msra.mxu0 0
      %765 = vmatprep.subr.bf16.mxu0 0
      %766 = vmatpush1.bf16.xpose.msra.mxu0 0
      %767 = vmatprep.subr.bf16.mxu0 0
      %768 = vmatpush1.bf16.xpose.msra.mxu0 0
      %769 = vmatprep.subr.bf16.mxu0 0
      %770 = vmatpush1.bf16.xpose.msra.mxu0 0
      %771 = vmatprep.mubr.bf16.mxu0 0
      %772 = vmatmul.mubr.bf16.gmra.mrb[0].mxu0 %v734
      %v773 = vpop.f32.mrb[0].mxu0
      %v774 = vadd.f32 0.0, %v773
      %v775 = vpop.f32.mrb[0].mxu0
      %v776 = vpop.f32.mrb[0].mxu0
      %v777 = vadd.f32 0.0, %v776
      %v778 = vpop.f32.mrb[0].mxu0
      %779 = vdwg.mxu0
      %v780 = vsel %vm529, %v774, -inf
      %781 = vmax.xlane.f32.xlu0 %v780
      %v782 = vpop.xlane.xlu0 %781
      %v783 = vsel %vm533, %v777, -inf
      %784 = vmax.xlane.f32.xlu0 %v783
      %v785 = vpop.xlane.xlu0 %784
      %v786 = vsub.f32 %v774, %v782
      %v787 = vsub.f32 %v777, %v785
      %v788 = vmul.f32 %v786, 1.442695
      %v789 = vpow.pop %v788
      %v790 = vmul.f32 %v787, 1.442695
      %v791 = vpow.pop %v790
      %v792 = vsel %vm529, %v789, 0.0
      %793 = vadd.xlane.f32.xlu0 %v792
      %v794 = vpop.xlane.xlu0 %793
      %v795 = vsel %vm533, %v791, 0.0
      %796 = vadd.xlane.f32.xlu0 %v795
      %v797 = vpop.xlane.xlu0 %796
      %v798 = vrcp.pop %v794
      %v799 = vrcp.pop %v797
      %v800 = vpack.c.bf16 %v791, %v789
      %801 = vrot.lane.b32.xlu0 %v480, 80
      %v802 = vpop.permute.xlu0 %801
      %v804 = vsel %vm529, %v800, 0
      %v807 = vsel %vm558, %v802, 0
      %809 = vmatprep.subr.bf16.mxu0 0
      %810 = vmatpush1.bf16.msra.mxu0 %v807
      %811 = vmatprep.subr.bf16.mxu0 0
      %812 = vmatpush1.bf16.msra.mxu0 0
      %813 = vmatprep.subr.bf16.mxu0 0
      %814 = vmatpush1.bf16.msra.mxu0 0
      %815 = vmatprep.subr.bf16.mxu0 0
      %816 = vmatpush1.bf16.msra.mxu0 0
      %817 = vmatprep.subr.bf16.mxu0 0
      %818 = vmatpush1.bf16.msra.mxu0 0
      %819 = vmatprep.subr.bf16.mxu0 0
      %820 = vmatpush1.bf16.msra.mxu0 0
      %821 = vmatprep.subr.bf16.mxu0 0
      %822 = vmatpush1.bf16.msra.mxu0 0
      %823 = vmatprep.subr.bf16.mxu0 0
      %824 = vmatpush1.bf16.msra.mxu0 0
      %825 = vmatprep.subr.bf16.mxu0 0
      %826 = vmatpush1.bf16.msra.mxu0 0
      %827 = vmatprep.subr.bf16.mxu0 0
      %828 = vmatpush1.bf16.msra.mxu0 0
      %829 = vmatprep.subr.bf16.mxu0 0
      %830 = vmatpush1.bf16.msra.mxu0 0
      %831 = vmatprep.subr.bf16.mxu0 0
      %832 = vmatpush1.bf16.msra.mxu0 0
      %833 = vmatprep.subr.bf16.mxu0 0
      %834 = vmatpush1.bf16.msra.mxu0 0
      %835 = vmatprep.subr.bf16.mxu0 0
      %836 = vmatpush1.bf16.msra.mxu0 0
      %837 = vmatprep.subr.bf16.mxu0 0
      %838 = vmatpush1.bf16.msra.mxu0 0
      %839 = vmatprep.subr.bf16.mxu0 0
      %840 = vmatpush1.bf16.msra.mxu0 0
      %841 = vmatprep.mubr.bf16.mxu0 0
      %842 = vmatmul.mubr.bf16.gmra.mrb[0].mxu0 %v804
      %v843 = vpop.f32.mrb[0].mxu0
      %v844 = vadd.f32 0.0, %v843
      %v845 = vpop.f32.mrb[0].mxu0
      %v846 = vpop.f32.mrb[0].mxu0
      %v847 = vadd.f32 0.0, %v846
      %v848 = vpop.f32.mrb[0].mxu0
      %849 = vdwg.mxu0
      %v850 = vmul.f32 %v844, %v798
      %v851 = vmul.f32 %v847, %v799
      %852 = vrot.lane.b32.xlu0 %v419, 104
      %v853 = vpop.permute.xlu0 %852
      %854 = vrot.lane.b32.xlu0 %v480, 104
      %v855 = vpop.permute.xlu0 %854
      %v857 = vsel %vm481, %v853, 0
      %v860 = vsel %vm481, %v855, 0
      %862 = vmatprep.subr.bf16.mxu0 0
      %863 = vmatpush1.bf16.xpose.msra.mxu0 %v860
      %864 = vmatprep.subr.bf16.mxu0 0
      %865 = vmatpush1.bf16.xpose.msra.mxu0 0
      %866 = vmatprep.subr.bf16.mxu0 0
      %867 = vmatpush1.bf16.xpose.msra.mxu0 0
      %868 = vmatprep.subr.bf16.mxu0 0
      %869 = vmatpush1.bf16.xpose.msra.mxu0 0
      %870 = vmatprep.subr.bf16.mxu0 0
      %871 = vmatpush1.bf16.xpose.msra.mxu0 0
      %872 = vmatprep.subr.bf16.mxu0 0
      %873 = vmatpush1.bf16.xpose.msra.mxu0 0
      %874 = vmatprep.subr.bf16.mxu0 0
      %875 = vmatpush1.bf16.xpose.msra.mxu0 0
      %876 = vmatprep.subr.bf16.mxu0 0
      %877 = vmatpush1.bf16.xpose.msra.mxu0 0
      %878 = vmatprep.subr.bf16.mxu0 0
      %879 = vmatpush1.bf16.xpose.msra.mxu0 0
      %880 = vmatprep.subr.bf16.mxu0 0
      %881 = vmatpush1.bf16.xpose.msra.mxu0 0
      %882 = vmatprep.subr.bf16.mxu0 0
      %883 = vmatpush1.bf16.xpose.msra.mxu0 0
      %884 = vmatprep.subr.bf16.mxu0 0
      %885 = vmatpush1.bf16.xpose.msra.mxu0 0
      %886 = vmatprep.subr.bf16.mxu0 0
      %887 = vmatpush1.bf16.xpose.msra.mxu0 0
      %888 = vmatprep.subr.bf16.mxu0 0
      %889 = vmatpush1.bf16.xpose.msra.mxu0 0
      %890 = vmatprep.subr.bf16.mxu0 0
      %891 = vmatpush1.bf16.xpose.msra.mxu0 0
      %892 = vmatprep.subr.bf16.mxu0 0
      %893 = vmatpush1.bf16.xpose.msra.mxu0 0
      %894 = vmatprep.mubr.bf16.mxu0 0
      %895 = vmatmul.mubr.bf16.gmra.mrb[0].mxu0 %v857
      %v896 = vpop.f32.mrb[0].mxu0
      %v897 = vadd.f32 0.0, %v896
      %v898 = vpop.f32.mrb[0].mxu0
      %v899 = vpop.f32.mrb[0].mxu0
      %v900 = vadd.f32 0.0, %v899
      %v901 = vpop.f32.mrb[0].mxu0
      %902 = vdwg.mxu0
      %v903 = vsel %vm529, %v897, -inf
      %904 = vmax.xlane.f32.xlu0 %v903
      %v905 = vpop.xlane.xlu0 %904
      %v906 = vsel %vm533, %v900, -inf
      %907 = vmax.xlane.f32.xlu0 %v906
      %v908 = vpop.xlane.xlu0 %907
      %v909 = vsub.f32 %v897, %v905
      %v910 = vsub.f32 %v900, %v908
      %v911 = vmul.f32 %v909, 1.442695
      %v912 = vpow.pop %v911
      %v913 = vmul.f32 %v910, 1.442695
      %v914 = vpow.pop %v913
      %v915 = vsel %vm529, %v912, 0.0
      %916 = vadd.xlane.f32.xlu0 %v915
      %v917 = vpop.xlane.xlu0 %916
      %v918 = vsel %vm533, %v914, 0.0
      %919 = vadd.xlane.f32.xlu0 %v918
      %v920 = vpop.xlane.xlu0 %919
      %v921 = vrcp.pop %v917
      %v922 = vrcp.pop %v920
      %v923 = vpack.c.bf16 %v914, %v912
      %924 = vrot.lane.b32.xlu0 %v480, 72
      %v925 = vpop.permute.xlu0 %924
      %v927 = vsel %vm529, %v923, 0
      %v930 = vsel %vm558, %v925, 0
      %932 = vmatprep.subr.bf16.mxu0 0
      %933 = vmatpush1.bf16.msra.mxu0 %v930
      %934 = vmatprep.subr.bf16.mxu0 0
      %935 = vmatpush1.bf16.msra.mxu0 0
      %936 = vmatprep.subr.bf16.mxu0 0
      %937 = vmatpush1.bf16.msra.mxu0 0
      %938 = vmatprep.subr.bf16.mxu0 0
      %939 = vmatpush1.bf16.msra.mxu0 0
      %940 = vmatprep.subr.bf16.mxu0 0
      %941 = vmatpush1.bf16.msra.mxu0 0
      %942 = vmatprep.subr.bf16.mxu0 0
      %943 = vmatpush1.bf16.msra.mxu0 0
      %944 = vmatprep.subr.bf16.mxu0 0
      %945 = vmatpush1.bf16.msra.mxu0 0
      %946 = vmatprep.subr.bf16.mxu0 0
      %947 = vmatpush1.bf16.msra.mxu0 0
      %948 = vmatprep.subr.bf16.mxu0 0
      %949 = vmatpush1.bf16.msra.mxu0 0
      %950 = vmatprep.subr.bf16.mxu0 0
      %951 = vmatpush1.bf16.msra.mxu0 0
      %952 = vmatprep.subr.bf16.mxu0 0
      %953 = vmatpush1.bf16.msra.mxu0 0
      %954 = vmatprep.subr.bf16.mxu0 0
      %955 = vmatpush1.bf16.msra.mxu0 0
      %956 = vmatprep.subr.bf16.mxu0 0
      %957 = vmatpush1.bf16.msra.mxu0 0
      %958 = vmatprep.subr.bf16.mxu0 0
      %959 = vmatpush1.bf16.msra.mxu0 0
      %960 = vmatprep.subr.bf16.mxu0 0
      %961 = vmatpush1.bf16.msra.mxu0 0
      %962 = vmatprep.subr.bf16.mxu0 0
      %963 = vmatpush1.bf16.msra.mxu0 0
      %964 = vmatprep.mubr.bf16.mxu0 0
      %965 = vmatmul.mubr.bf16.gmra.mrb[0].mxu0 %v927
      %v966 = vpop.f32.mrb[0].mxu0
      %v967 = vadd.f32 0.0, %v966
      %v968 = vpop.f32.mrb[0].mxu0
      %v969 = vpop.f32.mrb[0].mxu0
      %v970 = vadd.f32 0.0, %v969
      %v971 = vpop.f32.mrb[0].mxu0
      %972 = vdwg.mxu0
      %v973 = vmul.f32 %v967, %v921
      %v974 = vmul.f32 %v970, %v922
      %977 = vrot.lane.b32.xlu0 %v727, 8
      %v978 = vpop.permute.xlu0 %977
      %979 = vrot.lane.b32.xlu0 %v728, 8
      %v980 = vpop.permute.xlu0 %979
      %985 = vrot.lane.b32.xlu0 %v850, 16
      %v986 = vpop.permute.xlu0 %985
      %987 = vrot.lane.b32.xlu0 %v851, 16
      %v988 = vpop.permute.xlu0 %987
      %993 = vrot.lane.b32.xlu0 %v973, 24
      %v994 = vpop.permute.xlu0 %993
      %995 = vrot.lane.b32.xlu0 %v974, 24
      %v996 = vpop.permute.xlu0 %995
      %v999 = vsel %vm481, %v603, %v978
      %v1000 = vsel %vm481, %v604, %v980
      %vm1001 = vcmask 130048
      %v1002 = vsel %vm1001, %v999, %v986
      %v1003 = vsel %vm1001, %v1000, %v988
      %vm1004 = vcmask 195584
      %v1005 = vsel %vm1004, %v1002, %v994
      %v1006 = vsel %vm1004, %v1003, %v996
      %v1007 = vpack.c.bf16 %v1006, %v1005
      %v1008 = vld [vmem:[%s6] sm:$0xf]
      %v1009 = vld [vmem:[%s6 + $0x4] sm:$0xf]
      %v1010 = vld [vmem:[%s6 + $0x8] sm:$0xf]
      %v1011 = vld [vmem:[%s6 + $0xc] sm:$0xf]
      %v1016 = vunpack.c.l.b16 %v1008
      %v1017 = vunpack.c.l.b16 %v1009
      %v1018 = vunpack.c.l.b16 %v1010
      %v1019 = vunpack.c.l.b16 %v1011
      %v1020 = vpack.c.b16 %v1017, %v1016
      %v1021 = vpack.c.b16 %v1019, %v1018
      %v1025 = vsel %vm307, %v1007, 0
      %1027 = vmatprep.subr.bf16.mxu0 0
      %1028 = vmatpush1.bf16.msra.mxu0 %v1020
      %1029 = vmatprep.subr.bf16.mxu0 0
      %1030 = vmatpush1.bf16.msra.mxu0 %v1021
      %1031 = vmatprep.subr.bf16.mxu0 0
      %1032 = vmatpush1.bf16.msra.mxu0 0
      %1033 = vmatprep.subr.bf16.mxu0 0
      %1034 = vmatpush1.bf16.msra.mxu0 0
      %1035 = vmatprep.subr.bf16.mxu0 0
      %1036 = vmatpush1.bf16.msra.mxu0 0
      %1037 = vmatprep.subr.bf16.mxu0 0
      %1038 = vmatpush1.bf16.msra.mxu0 0
      %1039 = vmatprep.subr.bf16.mxu0 0
      %1040 = vmatpush1.bf16.msra.mxu0 0
      %1041 = vmatprep.subr.bf16.mxu0 0
      %1042 = vmatpush1.bf16.msra.mxu0 0
      %1043 = vmatprep.subr.bf16.mxu0 0
      %1044 = vmatpush1.bf16.msra.mxu0 0
      %1045 = vmatprep.subr.bf16.mxu0 0
      %1046 = vmatpush1.bf16.msra.mxu0 0
      %1047 = vmatprep.subr.bf16.mxu0 0
      %1048 = vmatpush1.bf16.msra.mxu0 0
      %1049 = vmatprep.subr.bf16.mxu0 0
      %1050 = vmatpush1.bf16.msra.mxu0 0
      %1051 = vmatprep.subr.bf16.mxu0 0
      %1052 = vmatpush1.bf16.msra.mxu0 0
      %1053 = vmatprep.subr.bf16.mxu0 0
      %1054 = vmatpush1.bf16.msra.mxu0 0
      %1055 = vmatprep.subr.bf16.mxu0 0
      %1056 = vmatpush1.bf16.msra.mxu0 0
      %1057 = vmatprep.subr.bf16.mxu0 0
      %1058 = vmatpush1.bf16.msra.mxu0 0
      %1059 = vmatprep.mubr.bf16.mxu0 0
      %1060 = vmatmul.mubr.bf16.gmra.mrb[0].mxu0 %v1025
      %v1061 = vpop.f32.mrb[0].mxu0
      %v1062 = vadd.f32 0.0, %v1061
      %v1063 = vpop.f32.mrb[0].mxu0
      %v1064 = vpop.f32.mrb[0].mxu0
      %v1065 = vadd.f32 0.0, %v1064
      %v1066 = vpop.f32.mrb[0].mxu0
      %1067 = vdwg.mxu0
      %v1068 = vadd.f32 %v300, %v1062
      %v1069 = vadd.f32 %v301, %v1065
      %1070 = vst.msk [vmem:[%s298] sm:$0xff] %vm307, %v1068
      %1071 = vst.msk [vmem:[%s298 + $0x8] sm:$0xf] %vm311, %v1069
      %p1072 = scmp.lt.s32.totalorder %s18, 1
      %s1073 = scalar_select %p1072, %s18, 1
      %s1074 = smul.addr %s1073, 2
      %s1075 = smul.addr %s1074, 8
      %s1076 = scalar_lea.vmem %s7, %s1075
      // Predicated region
      $region49: #{cross_prompt_t5_forward.12} parent=47 // pred_check
        %p1077 = pneg %p193
      $region50: #{cross_prompt_t5_forward.12} parent=47 // pred_check_branch
        %1079 = sbr.rel (%p1077) target = $region52
      $region51: #{cross_prompt_t5_forward.12} parent=47 // pred_region
        _
      $region52: #{cross_prompt_t5_forward.12} parent=47 // pred_fallthru
        _
    $region48: #{cross_prompt_t5_forward.12} parent=5 // pred_fallthru
      _
    %p1080 = scmp.le.s32.totalorder 2, %s13
    // Predicated region
    $region53: #{cross_prompt_t5_forward.12} parent=5 // pred_check
      %p1081 = pneg %p1080
    $region54: #{cross_prompt_t5_forward.12} parent=5 // pred_check_branch
      %1083 = sbr.rel (%p1081) target = $region56
    $region55: #{cross_prompt_t5_forward.12} parent=5 // pred_region
      %s1084 = ssub.s32 %s13, 2
      // Predicated region
      $region57: #{cross_prompt_t5_forward.12} parent=55 // pred_check
        %p1085 = pneg %p199
      $region58: #{cross_prompt_t5_forward.12} parent=55 // pred_check_branch
        %1087 = sbr.rel (%p1085) target = $region60
      $region59: #{cross_prompt_t5_forward.12} parent=55 // pred_region
        %p1088 = scmp.lt.s32.totalorder %s19, 1
        %s1089 = scalar_select %p1088, %s19, 1
        %s1090 = smul.addr %s1089, 2
        %s1091 = smul.addr %s1090, 8
        %s1092 = scalar_lea.vmem %s7, %s1091
      $region60: #{cross_prompt_t5_forward.12} parent=55 // pred_fallthru
        _
    $region56: #{cross_prompt_t5_forward.12} parent=5 // pred_fallthru
      _
  $region6: #{cross_prompt_t5_forward.12} parent=0 // loop_footer
    %s17 = sadd.s32 1, %s13
  $region7: #{cross_prompt_t5_forward.12} parent=0 // loop_footer_branch
    %12 = sbr.rel target = $region3
  $region8: #{cross_prompt_t5_forward.12} parent=0 // loop_exit
    _

// kernel: cross_prompt_t5_forward.15
$region0: #{cross_prompt_t5_forward.15}
  #allocation0 [shape = 'u32[]', space=smem, size = 0x4, offset = 0x4, fixed_abs, tag = 'smem constant byte address 0x4 - core index']
  #allocation1 [shape = 'u32[144,128]{1,0:T(1,128)}', space=vmem, size = 0x12000, scoped, tag = 'internal scratch']
  #allocation2 [shape = 'f32[1,16,1]{2,1,0:T(8,128)}', space=vmem, size = 0x2000, scoped, tag = 'scratch operand']
  #allocation3 [shape = 'f32[1,16,1]{2,1,0:T(8,128)}', space=vmem, size = 0x2000, scoped, tag = 'scratch operand']
  #allocation4 [shape = 'f32[1,16,1]{2,1,0:T(8,128)}', space=vmem, size = 0x2000, scoped, tag = 'scratch operand']
  #allocation5 [shape = 'f32[1,1]{1,0:T(1,128)}', space=vmem, size = 0x200, scoped, tag = 'scratch operand']
  #allocation6 [shape = 'f32[1,1]{1,0:T(1,128)}', space=vmem, size = 0x200, scoped, tag = 'scratch operand']
  %s0 = inlined_call_operand.vmem [shape: bf16[16,32], index: 0, kind: input, shape index: {}]
  %s1 = inlined_call_operand.vmem [shape: bf16[32,128], index: 1, kind: input, shape index: {}]
  %s2 = inlined_call_operand.vmem [shape: s32[16,1], index: 2, kind: input, shape index: {}]
  %s3 = inlined_call_operand.hbm [shape: f32[1,1], index: 3, kind: output, shape index: {}]
  %s4 = sld [smem:[#allocation0]]
  $region38: #{cross_prompt_t5_forward.15} parent=0
    _
  %s6 = ssub.s32 1, %s4
  %s7 = scalar_select 0, %s6, %s4
  $region1: #{cross_prompt_t5_forward.15} parent=0
    #allocation7 [shape = 'u8[512]{0}', space=vmem, size = 0x400, scoped, tag = 'output window, operand 0, single buffered']
    #allocation8 [shape = 's32[1]{0}', space=sflag, size = 0x4, scoped, tag = 'scoped memory for cross_prompt_t5_forward.15']
    %8 = vsyncpa [#allocation8], 0
    // Predicated region
    $region2: #{cross_prompt_t5_forward.15} parent=1 // pred_check
      _
    $region3: #{cross_prompt_t5_forward.15} parent=1 // pred_check_branch
      %10 = sbr.rel (0) target = $region5
    $region4: #{cross_prompt_t5_forward.15} parent=1 // pred_region
      _
    $region5: #{cross_prompt_t5_forward.15} parent=1 // pred_fallthru
      _
    // Predicated region
    $region6: #{cross_prompt_t5_forward.15} parent=1 // pred_check
      _
    $region7: #{cross_prompt_t5_forward.15} parent=1 // pred_check_branch
      %12 = sbr.rel (0) target = $region9
    $region8: #{cross_prompt_t5_forward.15} parent=1 // pred_region
      _
    $region9: #{cross_prompt_t5_forward.15} parent=1 // pred_fallthru
      _
    // Predicated region
    $region10: #{cross_prompt_t5_forward.15} parent=1 // pred_check
      _
    $region11: #{cross_prompt_t5_forward.15} parent=1 // pred_check_branch
      %14 = sbr.rel (0) target = $region13
    $region12: #{cross_prompt_t5_forward.15} parent=1 // pred_region
      _
    $region13: #{cross_prompt_t5_forward.15} parent=1 // pred_fallthru
      _
    %p16 = scmp.eq.s32.totalorder 0, 0
    %p17 = scmp.eq.s32.totalorder 0, 0
    %p18 = pnand %p16, %p17
    %p19 = pneg %p18
    // Predicated region
    $region14: #{cross_prompt_t5_forward.15} parent=1 // pred_check
      _
    $region15: #{cross_prompt_t5_forward.15} parent=1 // pred_check_branch
      %21 = sbr.rel (%p18) target = $region17
    $region16: #{cross_prompt_t5_forward.15} parent=1 // pred_region
      %vm22 = vcmask 0
      %23 = vst.msk [vmem:[#allocation5] sm:$0x1] %vm22, 0.0
      %24 = vst.msk [vmem:[#allocation6] sm:$0x1] %vm22, 0.0
    $region17: #{cross_prompt_t5_forward.15} parent=1 // pred_fallthru
      _
    // Predicated region
    $region18: #{cross_prompt_t5_forward.15} parent=1 // pred_check
      %p25 = pneg %p17
    $region19: #{cross_prompt_t5_forward.15} parent=1 // pred_check_branch
      %27 = sbr.rel (%p25) target = $region21
    $region20: #{cross_prompt_t5_forward.15} parent=1 // pred_region
      %s28 = smul.u32 0, 16
      %s29 = scalar_lea.vmem [#allocation2], %s28
      %vm30 = vcmask 7168
      %31 = vst.msk [vmem:[%s29] sm:$0xff] %vm30, -inf
      %32 = vst.msk [vmem:[%s29 + $0x8] sm:$0xff] %vm30, -inf
      %s33 = scalar_lea.vmem [#allocation3], %s28
      %34 = vst.msk [vmem:[%s33] sm:$0xff] %vm30, 0.0
      %35 = vst.msk [vmem:[%s33 + $0x8] sm:$0xff] %vm30, 0.0
      %s36 = scalar_lea.vmem [#allocation4], %s28
      %37 = vst.msk [vmem:[%s36] sm:$0xff] %vm30, 0.0
      %38 = vst.msk [vmem:[%s36 + $0x8] sm:$0xff] %vm30, 0.0
    $region21: #{cross_prompt_t5_forward.15} parent=1 // pred_fallthru
      _
    %v39 = vld [vmem:[%s0] sm:$0xf]
    %v40 = vld [vmem:[%s0 + $0x4] sm:$0xf]
    %v41 = vld [vmem:[%s1] sm:$0xf]
    %v42 = vld [vmem:[%s1 + $0x4] sm:$0xf]
    %v43 = vld [vmem:[%s1 + $0x8] sm:$0xf]
    %v44 = vld [vmem:[%s1 + $0xc] sm:$0xf]
    %v47 = vunpack.c.l.b16 %v39
    %v48 = vunpack.c.l.b16 %v40
    %v49 = vpack.c.b16 %v48, %v47
    %v54 = vunpack.c.l.b16 %v41
    %v55 = vunpack.c.l.b16 %v42
    %v56 = vunpack.c.l.b16 %v43
    %v57 = vunpack.c.l.b16 %v44
    %v58 = vpack.c.b16 %v55, %v54
    %v59 = vpack.c.b16 %v57, %v56
    %vm62 = vcmask 261120
    %v64 = vsel %vm62, %v49, 0
    %66 = vmatprep.subr.bf16.mxu0 0
    %67 = vmatpush1.bf16.msra.mxu0 %v58
    %68 = vmatprep.subr.bf16.mxu0 0
    %69 = vmatpush1.bf16.msra.mxu0 %v59
    %70 = vmatprep.subr.bf16.mxu0 0
    %71 = vmatpush1.bf16.msra.mxu0 0
    %72 = vmatprep.subr.bf16.mxu0 0
    %73 = vmatpush1.bf16.msra.mxu0 0
    %74 = vmatprep.subr.bf16.mxu0 0
    %75 = vmatpush1.bf16.msra.mxu0 0
    %76 = vmatprep.subr.bf16.mxu0 0
    %77 = vmatpush1.bf16.msra.mxu0 0
    %78 = vmatprep.subr.bf16.mxu0 0
    %79 = vmatpush1.bf16.msra.mxu0 0
    %80 = vmatprep.subr.bf16.mxu0 0
    %81 = vmatpush1.bf16.msra.mxu0 0
    %82 = vmatprep.subr.bf16.mxu0 0
    %83 = vmatpush1.bf16.msra.mxu0 0
    %84 = vmatprep.subr.bf16.mxu0 0
    %85 = vmatpush1.bf16.msra.mxu0 0
    %86 = vmatprep.subr.bf16.mxu0 0
    %87 = vmatpush1.bf16.msra.mxu0 0
    %88 = vmatprep.subr.bf16.mxu0 0
    %89 = vmatpush1.bf16.msra.mxu0 0
    %90 = vmatprep.subr.bf16.mxu0 0
    %91 = vmatpush1.bf16.msra.mxu0 0
    %92 = vmatprep.subr.bf16.mxu0 0
    %93 = vmatpush1.bf16.msra.mxu0 0
    %94 = vmatprep.subr.bf16.mxu0 0
    %95 = vmatpush1.bf16.msra.mxu0 0
    %96 = vmatprep.subr.bf16.mxu0 0
    %97 = vmatpush1.bf16.msra.mxu0 0
    %98 = vmatprep.mubr.bf16.mxu0 0
    %99 = vmatmul.mubr.bf16.gmra.mrb[0].mxu0 %v64
    %v100 = vpop.f32.mrb[0].mxu0
    %v101 = vadd.f32 0.0, %v100
    %v102 = vpop.f32.mrb[0].mxu0
    %v103 = vpop.f32.mrb[0].mxu0
    %v104 = vadd.f32 0.0, %v103
    %v105 = vpop.f32.mrb[0].mxu0
    %106 = vdwg.mxu0
    %v107 = vlaneseq
    %v108 = vand.u32 %v107, 127
    %s109 = smul.u32 0, 128
    %v110 = vstv %s109
    %v111 = vadd.s32 %v108, %v110
    %v112 = vld [vmem:[%s2] sm:$0xff]
    %v113 = vld [vmem:[%s2 + $0x8] sm:$0xff]
    %s114 = smul.u32 0, 16
    %s115 = scalar_lea.vmem [#allocation4], %s114
    %v116 = vld [vmem:[%s115] sm:$0xff]
    %v117 = vld [vmem:[%s115 + $0x8] sm:$0xff]
    %118 = vset.pattern.permute.xlu0 0
    %119 = vperm.xlu0 %118, %v112
    %v120 = vpop.permute.xlu0 %119
    %121 = vset.pattern.permute.xlu0 0
    %122 = vperm.xlu0 %121, %v113
    %v123 = vpop.permute.xlu0 %122
    %vm124 = vcmp.eq.s32.totalorder %v111, %v120
    %vm125 = vcmp.eq.s32.totalorder %v111, %v123
    %v126 = vsel %vm124, %v101, 0.0
    %v127 = vsel %vm125, %v104, 0.0
    %128 = vadd.xlane.f32.xlu0 %v126
    %v129 = vpop.xlane.xlu0 %128
    %130 = vadd.xlane.f32.xlu0 %v127
    %v131 = vpop.xlane.xlu0 %130
    %v132 = vadd.f32 %v116, %v129
    %v133 = vadd.f32 %v117, %v131
    %vm134 = vcmask 7168
    %135 = vst.msk [vmem:[%s115] sm:$0xff] %vm134, %v132
    %136 = vst.msk [vmem:[%s115 + $0x8] sm:$0xff] %vm134, %v133
    %s137 = scalar_lea.vmem [#allocation2], %s114
    %v138 = vld [vmem:[%s137] sm:$0xff]
    %v139 = vld [vmem:[%s137 + $0x8] sm:$0xff]
    %140 = vmax.xlane.f32.xlu0 %v101
    %v141 = vpop.xlane.xlu0 %140
    %142 = vmax.xlane.f32.xlu0 %v104
    %v143 = vpop.xlane.xlu0 %142
    %v144 = vmax.f32 %v138, %v141
    %v145 = vmax.f32 %v139, %v143
    %s146 = scalar_lea.vmem [#allocation3], %s114
    %v147 = vld [vmem:[%s146] sm:$0xff]
    %v148 = vld [vmem:[%s146 + $0x8] sm:$0xff]
    %v149 = vsub.f32 %v138, %v144
    %v150 = vsub.f32 %v139, %v145
    %v151 = vmul.f32 %v149, 1.442695
    %v152 = vpow.pop %v151
    %v153 = vmul.f32 %v150, 1.442695
    %v154 = vpow.pop %v153
    %v155 = vmul.f32 %v147, %v152
    %v156 = vmul.f32 %v148, %v154
    %158 = vset.pattern.permute.xlu0 0
    %159 = vperm.xlu0 %158, %v144
    %v160 = vpop.permute.xlu0 %159
    %163 = vset.pattern.permute.xlu0 0
    %164 = vperm.xlu0 %163, %v145
    %v165 = vpop.permute.xlu0 %164
    %v167 = vsub.f32 %v101, %v160
    %v168 = vsub.f32 %v104, %v165
    %v169 = vmul.f32 %v167, 1.442695
    %v170 = vpow.pop %v169
    %v171 = vmul.f32 %v168, 1.442695
    %v172 = vpow.pop %v171
    %173 = vadd.xlane.f32.xlu0 %v170
    %v174 = vpop.xlane.xlu0 %173
    %175 = vadd.xlane.f32.xlu0 %v172
    %v176 = vpop.xlane.xlu0 %175
    %v177 = vadd.f32 %v155, %v174
    %v178 = vadd.f32 %v156, %v176
    %179 = vst.msk [vmem:[%s146] sm:$0xff] %vm134, %v177
    %180 = vst.msk [vmem:[%s146 + $0x8] sm:$0xff] %vm134, %v178
    %181 = vst.msk [vmem:[%s137] sm:$0xff] %vm134, %v144
    %182 = vst.msk [vmem:[%s137 + $0x8] sm:$0xff] %vm134, %v145
    // Predicated region
    $region22: #{cross_prompt_t5_forward.15} parent=1 // pred_check
      %p183 = pneg %p17
    $region23: #{cross_prompt_t5_forward.15} parent=1 // pred_check_branch
      %185 = sbr.rel (%p183) target = $region25
    $region24: #{cross_prompt_t5_forward.15} parent=1 // pred_region
      %v186 = vld [vmem:[%s137] sm:$0xff]
      %v187 = vld [vmem:[%s137 + $0x8] sm:$0xff]
      %v188 = vld [vmem:[%s146] sm:$0xff]
      %v189 = vld [vmem:[%s146 + $0x8] sm:$0xff]
      %v190 = vlog2.pop %v188
      %v191 = vmul.f32 %v190, 0.6931472
      %v192 = vlog2.pop %v189
      %v193 = vmul.f32 %v192, 0.6931472
      %v194 = vadd.f32 %v186, %v191
      %v195 = vadd.f32 %v187, %v193
      %v196 = vld [vmem:[%s115] sm:$0xff]
      %v197 = vld [vmem:[%s115 + $0x8] sm:$0xff]
      %v198 = vsub.f32 %v194, %v196
      %v199 = vsub.f32 %v195, %v197
      %vm200 = vcmp.ne.s32.totalorder %v112, 4294967196
      %vm201 = vcmp.ne.s32.totalorder %v113, 4294967196
      %v202 = vsel %vm200, 1, 0
      %v203 = vsel %vm201, 1, 0
      %v204 = vcvt.s32.f32 %v202
      %v205 = vcvt.s32.f32 %v203
      %v206 = vld [vmem:[#allocation5] sm:$0x1]
      %v207 = vmul.f32 %v198, %v204
      %v208 = vmul.f32 %v199, %v205
      %v209 = vsel %vm134, %v207, 0.0
      %v210 = vsel %vm134, %v208, 0.0
      %v211 = vadd.f32 %v209, %v210
      %212 = vadd.xlane.f32.xlu0 %v211
      %v213 = vpop.xlane.xlu0 %212
      %v214 = vrot.slane %v213, 4
      %v215 = vadd.f32 %v213, %v214
      %v216 = vrot.slane %v215, 2
      %v217 = vadd.f32 %v215, %v216
      %v218 = vrot.slane %v217, 1
      %v219 = vadd.f32 %v217, %v218
      %s220 = vtos %v219
      %v221 = vstv %s220
      %v222 = vadd.f32 %v206, %v221
      %vm223 = vcmask 0
      %224 = vst.msk [vmem:[#allocation5] sm:$0x1] %vm223, %v222
      %v225 = vld [vmem:[#allocation6] sm:$0x1]
      %v226 = vsel %vm134, %v204, 0.0
      %v227 = vsel %vm134, %v205, 0.0
      %v228 = vadd.f32 %v226, %v227
      %229 = vadd.xlane.f32.xlu0 %v228
      %v230 = vpop.xlane.xlu0 %229
      %v231 = vrot.slane %v230, 4
      %v232 = vadd.f32 %v230, %v231
      %v233 = vrot.slane %v232, 2
      %v234 = vadd.f32 %v232, %v233
      %v235 = vrot.slane %v234, 1
      %v236 = vadd.f32 %v234, %v235
      %s237 = vtos %v236
      %v238 = vstv %s237
      %v239 = vadd.f32 %v225, %v238
      %240 = vst.msk [vmem:[#allocation6] sm:$0x1] %vm223, %v239
    $region25: #{cross_prompt_t5_forward.15} parent=1 // pred_fallthru
      _
    // Predicated region
    $region26: #{cross_prompt_t5_forward.15} parent=1 // pred_check
      _
    $region27: #{cross_prompt_t5_forward.15} parent=1 // pred_check_branch
      %242 = sbr.rel (%p18) target = $region29
    $region28: #{cross_prompt_t5_forward.15} parent=1 // pred_region
      %v243 = vld [vmem:[#allocation5] sm:$0x1]
      %v244 = vld [vmem:[#allocation6] sm:$0x1]
      %v245 = vmax.f32 %v244, 1.0
      %v246 = vrcp.pop %v245
      %v247 = vmul.f32 %v243, %v246
      %vm248 = vcmask 0
      %249 = vst.msk [vmem:[#allocation7] sm:$0x1] %vm248, %v247
    $region29: #{cross_prompt_t5_forward.15} parent=1 // pred_fallthru
      _
    // Predicated region
    $region30: #{cross_prompt_t5_forward.15} parent=1 // pred_check
      _
    $region31: #{cross_prompt_t5_forward.15} parent=1 // pred_check_branch
      %251 = sbr.rel (0) target = $region33
    $region32: #{cross_prompt_t5_forward.15} parent=1 // pred_region
      %s253 = ssub.s32 16, 16
      %254 = vsyncadd [#allocation8], %s253
      %s256 = sshll.u32 [#allocation7], 4
      %s257 = int_to_ptr.vmem [resolvable:$true] %s256
      %259 = dma.vmem_to_hbm [thread:$0]  %s257, 16, %s3, [#allocation8]
    $region33: #{cross_prompt_t5_forward.15} parent=1 // pred_fallthru
      _
    // Predicated region
    $region34: #{cross_prompt_t5_forward.15} parent=1 // pred_check
      _
    $region35: #{cross_prompt_t5_forward.15} parent=1 // pred_check_branch
      %261 = sbr.rel (0) target = $region37
    $region36: #{cross_prompt_t5_forward.15} parent=1 // pred_region
      %262 = dma.done [#allocation8], 16
    $region37: #{cross_prompt_t5_forward.15} parent=1 // pred_fallthru
      _
    %263 = vsyncpa [#allocation8], 1

</llo_original>
